<compile_context>
chip_gen: v7x
topology: tpu7x:2x2x1
jax: 0.10.0
libtpu: 0.0.40
codegen_flags: <defaults>
</compile_context>

<pallas_src>
import functools

import jax
import jax.numpy as jnp
from jax.experimental import pallas as pl
from jax.experimental.pallas import tpu as pltpu


def _round_up(x, m):
    return (x + m - 1) // m * m


def _pick_row_tile(H, W, B):
    """Output-image rows per grid step: big M-tile (TH*W <= 512 token rows)
    while keeping >= ~4 grid steps for the software pipeline / 2 TCs."""
    divisors = [d for d in range(1, H + 1) if H % d == 0]
    fitting = [d for d in divisors if d * W <= 512] or [1]
    th = max(fitting)
    while B * (H // th) < 4:
        smaller = [d for d in divisors if d < th]
        if not smaller:
            break
        th = max(smaller)
    return th


# ---------------------------------------------------------------------------
# Kernel: stride-1 conv patch embedding (+ bias + positional embedding) for
# one (batch, row-block) tile.
# ---------------------------------------------------------------------------
def vit_embed_kernel(k, TH, W, x_ref, w_ref, posb_ref, o_ref):
    # x_ref    : (Hp, Wp, C)       padded NHWC image of one batch element (f32)
    # w_ref    : (k*k, TH, C, Ep)  conv weight per tap, replicated over TH (bf16)
    # posb_ref : (TH, W, Ep)       conv bias + pos embedding for this row block (f32)
    # o_ref    : (TH, W, Ep)       patch tokens for this row block (f32)
    rs = pl.multiple_of(pl.program_id(1) * TH, TH)

    # Initialize the f32 accumulator with the pre-fused (bias + pos) tile, then
    # accumulate the k*k conv taps. Each tap is a batched MXU matmul:
    #   (TH, W, C) x (TH, C, Ep) -> (TH, W, Ep), f32 accumulation.
    acc = posb_ref[...]
    for di in range(k):
        for dj in range(k):
            patch = x_ref[pl.ds(rs + di, TH), pl.ds(dj, W), :]     # (TH, W, C)
            acc += jax.lax.dot_general(
                patch.astype(jnp.bfloat16), w_ref[di * k + dj],
                dimension_numbers=(((2,), (1,)), ((0,), (0,))),
                preferred_element_type=jnp.float32)
    o_ref[...] = acc


# ---------------------------------------------------------------------------
# Wrapper
# ---------------------------------------------------------------------------
def vit_embedding_forward(x, params, *, patch_size):
    B, C, H, W = x.shape
    E = params["conv_w"].shape[0]
    k = patch_size
    assert k % 2 == 1, "module assumes odd patch_size (stride=1, pad=k//2)"
    pad = k // 2
    Hp, Wp = H + 2 * pad, W + 2 * pad
    Ep = _round_up(E, 128)            # lane-dense kernel-facing embedding dim
    TH = _pick_row_tile(H, W, B)
    HB = H // TH

    # ---- one-time layout prep (tiny, done by XLA outside the kernel) -------
    # NCHW -> padded NHWC (f32 in VMEM; bf16 cast happens per-tap in-kernel).
    xp = jnp.pad(x, ((0, 0), (0, 0), (pad, pad), (pad, pad)))
    x_nhwc = xp.transpose(0, 2, 3, 1).astype(jnp.float32)          # (B, Hp, Wp, C)

    # conv weight (E, C, k, k) -> (tap, C, Ep), zero-padded to Ep lanes and
    # replicated over TH so each tap is a plain batched matmul in-kernel.
    wk = params["conv_w"].transpose(2, 3, 1, 0).reshape(k * k, C, E)
    wk = jnp.pad(wk, ((0, 0), (0, 0), (0, Ep - E))).astype(jnp.bfloat16)
    wk_b = jnp.broadcast_to(wk[:, None], (k * k, TH, C, Ep))

    # conv bias + positional embedding of the patch tokens, pre-fused (f32).
    posb = params["pos"][0, 1:, :] + params["conv_b"][None, :]     # (H*W, E)
    posb = jnp.pad(posb, ((0, 0), (0, Ep - E)))
    posb = posb.reshape(H, W, Ep).astype(jnp.float32)

    # ---- fused patch-embed kernel -------------------------------------------
    kern = functools.partial(vit_embed_kernel, k, TH, W)
    emb = pl.pallas_call(
        kern,
        out_shape=jax.ShapeDtypeStruct((B, H, W, Ep), jnp.float32),
        grid=(B, HB),
        in_specs=[
            # padded image: block index depends only on b -> fetched once per b
            pl.BlockSpec((None, Hp, Wp, C), lambda b, hb: (b, 0, 0, 0)),
            # weight: constant block -> fetched once
            pl.BlockSpec((k * k, TH, C, Ep), lambda b, hb: (0, 0, 0, 0)),
            # fused bias + pos-embedding tile for this row block
            pl.BlockSpec((TH, W, Ep), lambda b, hb: (hb, 0, 0)),
        ],
        out_specs=pl.BlockSpec((None, TH, W, Ep), lambda b, hb: (b, hb, 0, 0)),
        compiler_params=pltpu.CompilerParams(
            dimension_semantics=("parallel", "parallel"),
            vmem_limit_bytes=32 * 1024 * 1024),
    )(x_nhwc, wk_b, posb)

    # ---- glue: free reshape + lane slice, cls-token row (tiny) --------------
    emb = emb.reshape(B, H * W, Ep)[:, :, :E]                      # (B, HW, E)
    cls_row = params["cls"] + params["pos"][:, :1, :]              # (1, 1, E)
    cls_rows = jnp.broadcast_to(cls_row, (B, 1, E)).astype(emb.dtype)
    return jnp.concatenate([cls_rows, emb], axis=1)                # (B, HW+1, E)


# ---------------------------------------------------------------------------
# Pure-JAX reference (kernel uses bf16 MXU inputs -> loose tolerance)
# ---------------------------------------------------------------------------
def vit_embedding_ref(x, params, *, patch_size):
    pad = patch_size // 2
    y = jax.lax.conv_general_dilated(
        x, params["conv_w"], window_strides=(1, 1),
        padding=[(pad, pad), (pad, pad)],
        dimension_numbers=("NCHW", "OIHW", "NCHW"),
        precision=jax.lax.Precision.HIGHEST)
    y = y + params["conv_b"][None, :, None, None]
    B, E, H, W = y.shape
    tok = y.reshape(B, E, H * W).transpose(0, 2, 1)
    cls = jnp.broadcast_to(params["cls"], (B, 1, E))
    return jnp.concatenate([cls, tok], axis=1) + params["pos"]


def init_params(key, *, img_size, patch_size, embed_dim, channels):
    kw, kc, kp = jax.random.split(key, 3)
    E = embed_dim
    S = img_size * img_size + 1
    return {
        "conv_w": (0.1 * jax.random.normal(
            kw, (E, channels, patch_size, patch_size))).astype(jnp.float32),
        "conv_b": jnp.zeros((E,), jnp.float32),
        "cls": jax.random.normal(kc, (1, 1, E), jnp.float32),
        "pos": jax.random.normal(kp, (1, S, E), jnp.float32),
    }


# ---------------------------------------------------------------------------
if __name__ == "__main__":
    # Small shapes consistent with the module (odd patch_size so the conv
    # output spatial size equals img_size, as the module assumes).
    img_size, patch_size, embed_dim, channels, batch = 16, 3, 32, 4, 2

    key = jax.random.PRNGKey(0)
    kparam, kx = jax.random.split(key)
    params = init_params(kparam, img_size=img_size, patch_size=patch_size,
                         embed_dim=embed_dim, channels=channels)
    x = jax.random.normal(kx, (batch, channels, img_size, img_size), jnp.float32)

    fwd = jax.jit(functools.partial(vit_embedding_forward,
                                    patch_size=patch_size))
    tokens = fwd(x, params)
    jax.block_until_ready(tokens)

    assert tokens.shape == (batch, img_size * img_size + 1, embed_dim)

    # Loose check vs the f32 XLA reference (kernel feeds bf16 into the MXU).
    ref = vit_embedding_ref(x, params, patch_size=patch_size)
    err = float(jnp.max(jnp.abs(tokens - ref)))
    assert err < 5e-2, f"max abs error {err}"
    print("KERNEL_OK")
</pallas_src>

<mosaic_0001>
module attributes {stable_mosaic.version = 11 : i64} {
  func.func @vit_embed_kernel(%arg0: i32, %arg1: i32, %arg2: memref<1x18x18x4xf32, #tpu.memory_space<vmem>>, %arg3: memref<9x8x4x128xbf16, #tpu.memory_space<vmem>>, %arg4: memref<8x16x128xf32, #tpu.memory_space<vmem>>, %arg5: memref<1x8x16x128xf32, #tpu.memory_space<vmem>>) attributes {dimension_semantics = [#tpu.dimension_semantics<parallel>, #tpu.dimension_semantics<parallel>], iteration_bounds = array<i64: 2, 2>, scalar_prefetch = 0 : i64, scratch_operands = 0 : i64, tpu.core_type = #tpu.core_type<tc>, window_params = [{transform_indices = @transform_0, window_bounds = array<i64: 1, 18, 18, 4>}, {pipeline_mode = #tpu.pipeline_mode<synchronous>, transform_indices = @transform_1, window_bounds = array<i64: 9, 8, 4, 128>}, {transform_indices = @transform_2, window_bounds = array<i64: 8, 16, 128>}, {transform_indices = @transform_3, window_bounds = array<i64: 1, 8, 16, 128>}]} {
    %c8_i32 = arith.constant 8 : i32
    %0 = arith.muli %arg1, %c8_i32 : i32
    %1 = tpu.assume_multiple %0, 8 : i32
    %c0 = arith.constant 0 : index
    %c0_0 = arith.constant 0 : index
    %c0_1 = arith.constant 0 : index
    %2 = vector.load %arg4[%c0, %c0_0, %c0_1] : memref<8x16x128xf32, #tpu.memory_space<vmem>>, vector<8x16x128xf32>
    %c0_i32 = arith.constant 0 : i32
    %3 = arith.addi %1, %c0_i32 : i32
    %c0_2 = arith.constant 0 : index
    %4 = arith.index_cast %3 : i32 to index
    %c0_3 = arith.constant 0 : index
    %c0_4 = arith.constant 0 : index
    %5 = vector.load %arg2[%c0_2, %4, %c0_3, %c0_4] : memref<1x18x18x4xf32, #tpu.memory_space<vmem>>, vector<1x8x16x4xf32>
    %6 = vector.shape_cast %5 : vector<1x8x16x4xf32> to vector<8x16x4xf32>
    %7 = arith.truncf %6 : vector<8x16x4xf32> to vector<8x16x4xbf16>
    %c0_5 = arith.constant 0 : index
    %c0_6 = arith.constant 0 : index
    %c0_7 = arith.constant 0 : index
    %c0_8 = arith.constant 0 : index
    %8 = vector.load %arg3[%c0_5, %c0_6, %c0_7, %c0_8] : memref<9x8x4x128xbf16, #tpu.memory_space<vmem>>, vector<1x8x4x128xbf16>
    %9 = vector.shape_cast %8 : vector<1x8x4x128xbf16> to vector<8x4x128xbf16>
    %cst = arith.constant dense<0.000000e+00> : vector<8x16x128xf32>
    %10 = tpu.matmul %7, %9, %cst {dimension_numbers = #tpu.dot_dimension_numbers<[2], [1], [1], [2], [0, 0, 0, 1, 1, 2], [0], [0]>} : vector<8x16x4xbf16>, vector<8x4x128xbf16>, vector<8x16x128xf32> -> vector<8x16x128xf32>
    %11 = arith.addf %2, %10 : vector<8x16x128xf32>
    %c0_i32_9 = arith.constant 0 : i32
    %12 = arith.addi %1, %c0_i32_9 : i32
    %c0_10 = arith.constant 0 : index
    %13 = arith.index_cast %12 : i32 to index
    %c1 = arith.constant 1 : index
    %c0_11 = arith.constant 0 : index
    %14 = vector.load %arg2[%c0_10, %13, %c1, %c0_11] : memref<1x18x18x4xf32, #tpu.memory_space<vmem>>, vector<1x8x16x4xf32>
    %15 = vector.shape_cast %14 : vector<1x8x16x4xf32> to vector<8x16x4xf32>
    %16 = arith.truncf %15 : vector<8x16x4xf32> to vector<8x16x4xbf16>
    %c1_12 = arith.constant 1 : index
    %c0_13 = arith.constant 0 : index
    %c0_14 = arith.constant 0 : index
    %c0_15 = arith.constant 0 : index
    %17 = vector.load %arg3[%c1_12, %c0_13, %c0_14, %c0_15] : memref<9x8x4x128xbf16, #tpu.memory_space<vmem>>, vector<1x8x4x128xbf16>
    %18 = vector.shape_cast %17 : vector<1x8x4x128xbf16> to vector<8x4x128xbf16>
    %cst_16 = arith.constant dense<0.000000e+00> : vector<8x16x128xf32>
    %19 = tpu.matmul %16, %18, %cst_16 {dimension_numbers = #tpu.dot_dimension_numbers<[2], [1], [1], [2], [0, 0, 0, 1, 1, 2], [0], [0]>} : vector<8x16x4xbf16>, vector<8x4x128xbf16>, vector<8x16x128xf32> -> vector<8x16x128xf32>
    %20 = arith.addf %11, %19 : vector<8x16x128xf32>
    %c0_i32_17 = arith.constant 0 : i32
    %21 = arith.addi %1, %c0_i32_17 : i32
    %c0_18 = arith.constant 0 : index
    %22 = arith.index_cast %21 : i32 to index
    %c2 = arith.constant 2 : index
    %c0_19 = arith.constant 0 : index
    %23 = vector.load %arg2[%c0_18, %22, %c2, %c0_19] : memref<1x18x18x4xf32, #tpu.memory_space<vmem>>, vector<1x8x16x4xf32>
    %24 = vector.shape_cast %23 : vector<1x8x16x4xf32> to vector<8x16x4xf32>
    %25 = arith.truncf %24 : vector<8x16x4xf32> to vector<8x16x4xbf16>
    %c2_20 = arith.constant 2 : index
    %c0_21 = arith.constant 0 : index
    %c0_22 = arith.constant 0 : index
    %c0_23 = arith.constant 0 : index
    %26 = vector.load %arg3[%c2_20, %c0_21, %c0_22, %c0_23] : memref<9x8x4x128xbf16, #tpu.memory_space<vmem>>, vector<1x8x4x128xbf16>
    %27 = vector.shape_cast %26 : vector<1x8x4x128xbf16> to vector<8x4x128xbf16>
    %cst_24 = arith.constant dense<0.000000e+00> : vector<8x16x128xf32>
    %28 = tpu.matmul %25, %27, %cst_24 {dimension_numbers = #tpu.dot_dimension_numbers<[2], [1], [1], [2], [0, 0, 0, 1, 1, 2], [0], [0]>} : vector<8x16x4xbf16>, vector<8x4x128xbf16>, vector<8x16x128xf32> -> vector<8x16x128xf32>
    %29 = arith.addf %20, %28 : vector<8x16x128xf32>
    %c1_i32 = arith.constant 1 : i32
    %30 = arith.addi %1, %c1_i32 : i32
    %c0_25 = arith.constant 0 : index
    %31 = arith.index_cast %30 : i32 to index
    %c0_26 = arith.constant 0 : index
    %c0_27 = arith.constant 0 : index
    %32 = vector.load %arg2[%c0_25, %31, %c0_26, %c0_27] : memref<1x18x18x4xf32, #tpu.memory_space<vmem>>, vector<1x8x16x4xf32>
    %33 = vector.shape_cast %32 : vector<1x8x16x4xf32> to vector<8x16x4xf32>
    %34 = arith.truncf %33 : vector<8x16x4xf32> to vector<8x16x4xbf16>
    %c3 = arith.constant 3 : index
    %c0_28 = arith.constant 0 : index
    %c0_29 = arith.constant 0 : index
    %c0_30 = arith.constant 0 : index
    %35 = vector.load %arg3[%c3, %c0_28, %c0_29, %c0_30] : memref<9x8x4x128xbf16, #tpu.memory_space<vmem>>, vector<1x8x4x128xbf16>
    %36 = vector.shape_cast %35 : vector<1x8x4x128xbf16> to vector<8x4x128xbf16>
    %cst_31 = arith.constant dense<0.000000e+00> : vector<8x16x128xf32>
    %37 = tpu.matmul %34, %36, %cst_31 {dimension_numbers = #tpu.dot_dimension_numbers<[2], [1], [1], [2], [0, 0, 0, 1, 1, 2], [0], [0]>} : vector<8x16x4xbf16>, vector<8x4x128xbf16>, vector<8x16x128xf32> -> vector<8x16x128xf32>
    %38 = arith.addf %29, %37 : vector<8x16x128xf32>
    %c1_i32_32 = arith.constant 1 : i32
    %39 = arith.addi %1, %c1_i32_32 : i32
    %c0_33 = arith.constant 0 : index
    %40 = arith.index_cast %39 : i32 to index
    %c1_34 = arith.constant 1 : index
    %c0_35 = arith.constant 0 : index
    %41 = vector.load %arg2[%c0_33, %40, %c1_34, %c0_35] : memref<1x18x18x4xf32, #tpu.memory_space<vmem>>, vector<1x8x16x4xf32>
    %42 = vector.shape_cast %41 : vector<1x8x16x4xf32> to vector<8x16x4xf32>
    %43 = arith.truncf %42 : vector<8x16x4xf32> to vector<8x16x4xbf16>
    %c4 = arith.constant 4 : index
    %c0_36 = arith.constant 0 : index
    %c0_37 = arith.constant 0 : index
    %c0_38 = arith.constant 0 : index
    %44 = vector.load %arg3[%c4, %c0_36, %c0_37, %c0_38] : memref<9x8x4x128xbf16, #tpu.memory_space<vmem>>, vector<1x8x4x128xbf16>
    %45 = vector.shape_cast %44 : vector<1x8x4x128xbf16> to vector<8x4x128xbf16>
    %cst_39 = arith.constant dense<0.000000e+00> : vector<8x16x128xf32>
    %46 = tpu.matmul %43, %45, %cst_39 {dimension_numbers = #tpu.dot_dimension_numbers<[2], [1], [1], [2], [0, 0, 0, 1, 1, 2], [0], [0]>} : vector<8x16x4xbf16>, vector<8x4x128xbf16>, vector<8x16x128xf32> -> vector<8x16x128xf32>
    %47 = arith.addf %38, %46 : vector<8x16x128xf32>
    %c1_i32_40 = arith.constant 1 : i32
    %48 = arith.addi %1, %c1_i32_40 : i32
    %c0_41 = arith.constant 0 : index
    %49 = arith.index_cast %48 : i32 to index
    %c2_42 = arith.constant 2 : index
    %c0_43 = arith.constant 0 : index
    %50 = vector.load %arg2[%c0_41, %49, %c2_42, %c0_43] : memref<1x18x18x4xf32, #tpu.memory_space<vmem>>, vector<1x8x16x4xf32>
    %51 = vector.shape_cast %50 : vector<1x8x16x4xf32> to vector<8x16x4xf32>
    %52 = arith.truncf %51 : vector<8x16x4xf32> to vector<8x16x4xbf16>
    %c5 = arith.constant 5 : index
    %c0_44 = arith.constant 0 : index
    %c0_45 = arith.constant 0 : index
    %c0_46 = arith.constant 0 : index
    %53 = vector.load %arg3[%c5, %c0_44, %c0_45, %c0_46] : memref<9x8x4x128xbf16, #tpu.memory_space<vmem>>, vector<1x8x4x128xbf16>
    %54 = vector.shape_cast %53 : vector<1x8x4x128xbf16> to vector<8x4x128xbf16>
    %cst_47 = arith.constant dense<0.000000e+00> : vector<8x16x128xf32>
    %55 = tpu.matmul %52, %54, %cst_47 {dimension_numbers = #tpu.dot_dimension_numbers<[2], [1], [1], [2], [0, 0, 0, 1, 1, 2], [0], [0]>} : vector<8x16x4xbf16>, vector<8x4x128xbf16>, vector<8x16x128xf32> -> vector<8x16x128xf32>
    %56 = arith.addf %47, %55 : vector<8x16x128xf32>
    %c2_i32 = arith.constant 2 : i32
    %57 = arith.addi %1, %c2_i32 : i32
    %c0_48 = arith.constant 0 : index
    %58 = arith.index_cast %57 : i32 to index
    %c0_49 = arith.constant 0 : index
    %c0_50 = arith.constant 0 : index
    %59 = vector.load %arg2[%c0_48, %58, %c0_49, %c0_50] : memref<1x18x18x4xf32, #tpu.memory_space<vmem>>, vector<1x8x16x4xf32>
    %60 = vector.shape_cast %59 : vector<1x8x16x4xf32> to vector<8x16x4xf32>
    %61 = arith.truncf %60 : vector<8x16x4xf32> to vector<8x16x4xbf16>
    %c6 = arith.constant 6 : index
    %c0_51 = arith.constant 0 : index
    %c0_52 = arith.constant 0 : index
    %c0_53 = arith.constant 0 : index
    %62 = vector.load %arg3[%c6, %c0_51, %c0_52, %c0_53] : memref<9x8x4x128xbf16, #tpu.memory_space<vmem>>, vector<1x8x4x128xbf16>
    %63 = vector.shape_cast %62 : vector<1x8x4x128xbf16> to vector<8x4x128xbf16>
    %cst_54 = arith.constant dense<0.000000e+00> : vector<8x16x128xf32>
    %64 = tpu.matmul %61, %63, %cst_54 {dimension_numbers = #tpu.dot_dimension_numbers<[2], [1], [1], [2], [0, 0, 0, 1, 1, 2], [0], [0]>} : vector<8x16x4xbf16>, vector<8x4x128xbf16>, vector<8x16x128xf32> -> vector<8x16x128xf32>
    %65 = arith.addf %56, %64 : vector<8x16x128xf32>
    %c2_i32_55 = arith.constant 2 : i32
    %66 = arith.addi %1, %c2_i32_55 : i32
    %c0_56 = arith.constant 0 : index
    %67 = arith.index_cast %66 : i32 to index
    %c1_57 = arith.constant 1 : index
    %c0_58 = arith.constant 0 : index
    %68 = vector.load %arg2[%c0_56, %67, %c1_57, %c0_58] : memref<1x18x18x4xf32, #tpu.memory_space<vmem>>, vector<1x8x16x4xf32>
    %69 = vector.shape_cast %68 : vector<1x8x16x4xf32> to vector<8x16x4xf32>
    %70 = arith.truncf %69 : vector<8x16x4xf32> to vector<8x16x4xbf16>
    %c7 = arith.constant 7 : index
    %c0_59 = arith.constant 0 : index
    %c0_60 = arith.constant 0 : index
    %c0_61 = arith.constant 0 : index
    %71 = vector.load %arg3[%c7, %c0_59, %c0_60, %c0_61] : memref<9x8x4x128xbf16, #tpu.memory_space<vmem>>, vector<1x8x4x128xbf16>
    %72 = vector.shape_cast %71 : vector<1x8x4x128xbf16> to vector<8x4x128xbf16>
    %cst_62 = arith.constant dense<0.000000e+00> : vector<8x16x128xf32>
    %73 = tpu.matmul %70, %72, %cst_62 {dimension_numbers = #tpu.dot_dimension_numbers<[2], [1], [1], [2], [0, 0, 0, 1, 1, 2], [0], [0]>} : vector<8x16x4xbf16>, vector<8x4x128xbf16>, vector<8x16x128xf32> -> vector<8x16x128xf32>
    %74 = arith.addf %65, %73 : vector<8x16x128xf32>
    %c2_i32_63 = arith.constant 2 : i32
    %75 = arith.addi %1, %c2_i32_63 : i32
    %c0_64 = arith.constant 0 : index
    %76 = arith.index_cast %75 : i32 to index
    %c2_65 = arith.constant 2 : index
    %c0_66 = arith.constant 0 : index
    %77 = vector.load %arg2[%c0_64, %76, %c2_65, %c0_66] : memref<1x18x18x4xf32, #tpu.memory_space<vmem>>, vector<1x8x16x4xf32>
    %78 = vector.shape_cast %77 : vector<1x8x16x4xf32> to vector<8x16x4xf32>
    %79 = arith.truncf %78 : vector<8x16x4xf32> to vector<8x16x4xbf16>
    %c8 = arith.constant 8 : index
    %c0_67 = arith.constant 0 : index
    %c0_68 = arith.constant 0 : index
    %c0_69 = arith.constant 0 : index
    %80 = vector.load %arg3[%c8, %c0_67, %c0_68, %c0_69] : memref<9x8x4x128xbf16, #tpu.memory_space<vmem>>, vector<1x8x4x128xbf16>
    %81 = vector.shape_cast %80 : vector<1x8x4x128xbf16> to vector<8x4x128xbf16>
    %cst_70 = arith.constant dense<0.000000e+00> : vector<8x16x128xf32>
    %82 = tpu.matmul %79, %81, %cst_70 {dimension_numbers = #tpu.dot_dimension_numbers<[2], [1], [1], [2], [0, 0, 0, 1, 1, 2], [0], [0]>} : vector<8x16x4xbf16>, vector<8x4x128xbf16>, vector<8x16x128xf32> -> vector<8x16x128xf32>
    %83 = arith.addf %74, %82 : vector<8x16x128xf32>
    %c0_71 = arith.constant 0 : index
    %c0_72 = arith.constant 0 : index
    %c0_73 = arith.constant 0 : index
    %c0_74 = arith.constant 0 : index
    %84 = vector.load %arg5[%c0_71, %c0_72, %c0_73, %c0_74] : memref<1x8x16x128xf32, #tpu.memory_space<vmem>>, vector<1x8x16x128xf32>
    %85 = vector.shape_cast %84 : vector<1x8x16x128xf32> to vector<8x16x128xf32>
    %86 = vector.shape_cast %83 : vector<8x16x128xf32> to vector<1x8x16x128xf32>
    tpu.vector_store %arg5[%c0_71, %c0_72, %c0_73, %c0_74], %86 {strides = array<i32>} : memref<1x8x16x128xf32, #tpu.memory_space<vmem>>, vector<1x8x16x128xf32>,
    return
  }
  func.func @transform_0(%arg0: i32, %arg1: i32) -> (i32, i32, i32, i32) {
    %c0_i32 = arith.constant 0 : i32
    %c0_i32_0 = arith.constant 0 : i32
    %c0_i32_1 = arith.constant 0 : i32
    %c0_i32_2 = arith.constant 0 : i32
    return %arg0, %c0_i32, %c0_i32_0, %c0_i32_1 : i32, i32, i32, i32
  }
  func.func @transform_1(%arg0: i32, %arg1: i32) -> (i32, i32, i32, i32) {
    %c0_i32 = arith.constant 0 : i32
    %c0_i32_0 = arith.constant 0 : i32
    %c0_i32_1 = arith.constant 0 : i32
    %c0_i32_2 = arith.constant 0 : i32
    %c0_i32_3 = arith.constant 0 : i32
    return %c0_i32, %c0_i32_0, %c0_i32_1, %c0_i32_2 : i32, i32, i32, i32
  }
  func.func @transform_2(%arg0: i32, %arg1: i32) -> (i32, i32, i32) {
    %c0_i32 = arith.constant 0 : i32
    %c0_i32_0 = arith.constant 0 : i32
    %c0_i32_1 = arith.constant 0 : i32
    return %arg1, %c0_i32, %c0_i32_0 : i32, i32, i32
  }
  func.func @transform_3(%arg0: i32, %arg1: i32) -> (i32, i32, i32, i32) {
    %c0_i32 = arith.constant 0 : i32
    %c0_i32_0 = arith.constant 0 : i32
    %c0_i32_1 = arith.constant 0 : i32
    return %arg0, %arg1, %c0_i32, %c0_i32_0 : i32, i32, i32, i32
  }
}

</mosaic_0001>

<llo_original>
// kernel: vit_embedding_forward.1
$region0: #{vit_embedding_forward.1}
  #allocation0 [shape = 'u32[]', space=smem, size = 0x4, offset = 0x4, fixed_abs, tag = 'smem constant byte address 0x4 - core index']
  #allocation1 [shape = 'u32[144,128]{1,0:T(1,128)}', space=vmem, size = 0x12000, scoped, tag = 'internal scratch']
  %s0 = inlined_call_operand.vmem [shape: f32[2,18,18,4], index: 0, kind: input, shape index: {}]
  %s1 = inlined_call_operand.vmem [shape: bf16[9,8,4,128], index: 1, kind: input, shape index: {}]
  %s2 = inlined_call_operand.vmem [shape: f32[16,16,128], index: 2, kind: input, shape index: {}]
  %s3 = inlined_call_operand.vmem [shape: f32[2,16,16,128], index: 3, kind: output, shape index: {}]
  %s4 = sld [smem:[#allocation0]]
  $region45: #{vit_embedding_forward.1} parent=0
    _
  %s6 = ssub.s32 1, %s4
  %s7 = scalar_select 0, %s6, %s4
  loop: start=0, step=1, limit=6
  $region2: #{vit_embedding_forward.1} parent=0 // loop_pre_header
    _
  $region3: #{vit_embedding_forward.1} parent=0 // loop_header
    %s9 = sphi 0, %s13
    %p10 = scmp.ge.s32.totalorder %s9, 6
    %s16 = sphi 0, %s28
    %s17 = sphi 0, %s24
    %s18 = sphi 0, %s16
    %s19 = sphi 0, %s17
    %s20 = sphi 0, %s18
    %s21 = sphi 0, %s19
    %s31 = sphi 0, %s33
    %s34 = sphi 0, %s31
    %s35 = sphi 0, %s34
    %s51 = sphi 0, %s35
    %s55 = sphi 0, %s55
    %s57 = sphi 0, %s55
    %s58 = sphi 0, %s57
    %s72 = sphi 0, %s58
    %s78 = sphi 0, %s80
    %s81 = sphi 0, %s78
    %s82 = sphi 0, %s81
    %s98 = sphi 0, %s82
    %s106 = sphi 0, %s108
    %s109 = sphi 0, %s106
    %s110 = sphi 0, %s109
    %s126 = sphi 0, %s110
  $region4: #{vit_embedding_forward.1} parent=0 // loop_header_branch
    %12 = sbr.rel (%p10) target = $region8
  $region5: #{vit_embedding_forward.1} parent=0 // loop_body
    %s14 = ssub.s32 %s9, 1
    %s15 = ssub.s32 %s9, 2
    %s22 = sadd.s32 1, %s17
    %p23 = scmp.ge.s32.totalorder %s22, 2
    %s24 = scalar_select %p23, 0, %s22
    %s25 = sadd.s32 1, %s16
    %s26 = scalar_select %p23, %s25, %s16
    %p27 = scmp.ge.s32.totalorder %s26, 2
    %s28 = scalar_select %p27, 0, %s26
    %s29 = ssub.s32 %s16, %s28
    %p30 = scmp.eq.s32.totalorder %s29, 0
    %s32 = sadd.s32 %s31, 1
    %s33 = scalar_select %p30, %s31, %s32
    %p36 = pneg %p30
    %p37 = scmp.eq.s32.totalorder %s9, 3
    %p38 = por %p36, %p37
    %p39 = scmp.ne.s32.totalorder %s31, %s34
    %p40 = scmp.eq.s32.totalorder %s9, 0
    %p41 = por %p39, %p40
    %p42 = scmp.ne.s32.totalorder %s31, %s34
    %p43 = scmp.eq.s32.totalorder %s14, 3
    %p44 = por %p42, %p43
    %p45 = scmp.ne.s32.totalorder %s34, %s35
    %p46 = scmp.eq.s32.totalorder %s14, 0
    %p47 = por %p45, %p46
    %p48 = scmp.ne.s32.totalorder %s34, %s35
    %p49 = scmp.eq.s32.totalorder %s15, 3
    %p50 = por %p48, %p49
    %p52 = scmp.ne.s32.totalorder %s35, %s51
    %p53 = scmp.eq.s32.totalorder %s15, 0
    %p54 = por %p52, %p53
    %s56 = sadd.s32 %s55, 1
    %p59 = scmp.eq.s32.totalorder %s9, 3
    %p60 = scmp.ne.s32.totalorder %s55, %s57
    %p61 = scmp.eq.s32.totalorder %s9, 0
    %p62 = por %p60, %p61
    %p63 = scmp.ne.s32.totalorder %s55, %s57
    %p64 = scmp.eq.s32.totalorder %s14, 3
    %p65 = por %p63, %p64
    %p66 = scmp.ne.s32.totalorder %s57, %s58
    %p67 = scmp.eq.s32.totalorder %s14, 0
    %p68 = por %p66, %p67
    %p69 = scmp.ne.s32.totalorder %s57, %s58
    %p70 = scmp.eq.s32.totalorder %s15, 3
    %p71 = por %p69, %p70
    %p73 = scmp.ne.s32.totalorder %s58, %s72
    %p74 = scmp.eq.s32.totalorder %s15, 0
    %p75 = por %p73, %p74
    %s76 = ssub.s32 %s17, %s24
    %p77 = scmp.eq.s32.totalorder %s76, 0
    %s79 = sadd.s32 %s78, 1
    %s80 = scalar_select %p77, %s78, %s79
    %p83 = pneg %p77
    %p84 = scmp.eq.s32.totalorder %s9, 3
    %p85 = por %p83, %p84
    %p86 = scmp.ne.s32.totalorder %s78, %s81
    %p87 = scmp.eq.s32.totalorder %s9, 0
    %p88 = por %p86, %p87
    %p89 = scmp.ne.s32.totalorder %s78, %s81
    %p90 = scmp.eq.s32.totalorder %s14, 3
    %p91 = por %p89, %p90
    %p92 = scmp.ne.s32.totalorder %s81, %s82
    %p93 = scmp.eq.s32.totalorder %s14, 0
    %p94 = por %p92, %p93
    %p95 = scmp.ne.s32.totalorder %s81, %s82
    %p96 = scmp.eq.s32.totalorder %s15, 3
    %p97 = por %p95, %p96
    %p99 = scmp.ne.s32.totalorder %s82, %s98
    %p100 = scmp.eq.s32.totalorder %s15, 0
    %p101 = por %p99, %p100
    %s102 = ssub.s32 %s16, %s28
    %s103 = ssub.s32 %s17, %s24
    %s104 = sor.u32 %s102, %s103
    %p105 = scmp.eq.s32.totalorder %s104, 0
    %s107 = sadd.s32 %s106, 1
    %s108 = scalar_select %p105, %s106, %s107
    %p111 = pneg %p105
    %p112 = scmp.eq.s32.totalorder %s9, 3
    %p113 = por %p111, %p112
    %p114 = scmp.ne.s32.totalorder %s106, %s109
    %p115 = scmp.eq.s32.totalorder %s9, 0
    %p116 = por %p114, %p115
    %p117 = scmp.ne.s32.totalorder %s106, %s109
    %p118 = scmp.eq.s32.totalorder %s14, 3
    %p119 = por %p117, %p118
    %p120 = scmp.ne.s32.totalorder %s109, %s110
    %p121 = scmp.eq.s32.totalorder %s14, 0
    %p122 = por %p120, %p121
    %p123 = scmp.ne.s32.totalorder %s109, %s110
    %p124 = scmp.eq.s32.totalorder %s15, 3
    %p125 = por %p123, %p124
    %p127 = scmp.ne.s32.totalorder %s110, %s126
    %p128 = scmp.eq.s32.totalorder %s15, 0
    %p129 = por %p127, %p128
    %p130 = scmp.le.s32.totalorder 1, %s9
    %p131 = scmp.lt.s32.totalorder %s9, 5
    %p132 = pnand %p130, %p131
    %p133 = pneg %p132
    // Predicated region
    $region9: #{vit_embedding_forward.1} parent=5 // pred_check
      _
    $region10: #{vit_embedding_forward.1} parent=5 // pred_check_branch
      %135 = sbr.rel (%p132) target = $region12
    $region11: #{vit_embedding_forward.1} parent=5 // pred_region
      %s136 = ssub.s32 %s9, 1
      // Predicated region
      $region13: #{vit_embedding_forward.1} parent=11 // pred_check
        %p137 = pneg %p68
      $region14: #{vit_embedding_forward.1} parent=11 // pred_check_branch
        %139 = sbr.rel (%p137) target = $region16
      $region15: #{vit_embedding_forward.1} parent=11 // pred_region
        _
      $region16: #{vit_embedding_forward.1} parent=11 // pred_fallthru
        _
    $region12: #{vit_embedding_forward.1} parent=5 // pred_fallthru
      _
    %p140 = scmp.lt.s32.totalorder %s9, 4
    // Predicated region
    $region17: #{vit_embedding_forward.1} parent=5 // pred_check
      %p141 = pneg %p140
    $region18: #{vit_embedding_forward.1} parent=5 // pred_check_branch
      %143 = sbr.rel (%p141) target = $region20
    $region19: #{vit_embedding_forward.1} parent=5 // pred_region
      // Predicated region
      $region21: #{vit_embedding_forward.1} parent=19 // pred_check
        %p144 = pneg %p41
      $region22: #{vit_embedding_forward.1} parent=19 // pred_check_branch
        %146 = sbr.rel (%p144) target = $region24
      $region23: #{vit_embedding_forward.1} parent=19 // pred_region
        %p147 = scmp.lt.s32.totalorder %s16, 1
        %s148 = scalar_select %p147, %s16, 1
        %s149 = smul.addr %s148, 54
        %s150 = smul.addr %s149, 8
        %s151 = scalar_lea.vmem %s0, %s150
      $region24: #{vit_embedding_forward.1} parent=19 // pred_fallthru
        _
      // Predicated region
      $region25: #{vit_embedding_forward.1} parent=19 // pred_check
        %p152 = pneg %p88
      $region26: #{vit_embedding_forward.1} parent=19 // pred_check_branch
        %154 = sbr.rel (%p152) target = $region28
      $region27: #{vit_embedding_forward.1} parent=19 // pred_region
        %s155 = smul.u32 8, %s17
        %p156 = scmp.lt.s32.totalorder %s155, 15
        %s157 = scalar_select %p156, %s155, 15
        %s158 = smul.addr %s157, 2
        %s159 = smul.addr %s158, 8
        %s160 = scalar_lea.vmem %s2, %s159
        %s161 = smul.u32 8, %s17
      $region28: #{vit_embedding_forward.1} parent=19 // pred_fallthru
        _
    $region20: #{vit_embedding_forward.1} parent=5 // pred_fallthru
      _
    %p162 = scmp.le.s32.totalorder 1, %s9
    %p163 = scmp.lt.s32.totalorder %s9, 5
    %p164 = pnand %p162, %p163
    %p165 = pneg %p164
    // Predicated region
    $region29: #{vit_embedding_forward.1} parent=5 // pred_check
      _
    $region30: #{vit_embedding_forward.1} parent=5 // pred_check_branch
      %167 = sbr.rel (%p164) target = $region32
    $region31: #{vit_embedding_forward.1} parent=5 // pred_region
      %s168 = ssub.s32 %s9, 1
      %p169 = scmp.lt.s32.totalorder %s18, 1
      %s170 = scalar_select %p169, %s18, 1
      %s171 = smul.addr %s170, 54
      %s172 = smul.addr %s171, 8
      %s173 = scalar_lea.vmem %s0, %s172
      %p174 = pneg %p47
      %p175 = pneg %p44
      %p176 = pneg %p68
      %p177 = pneg %p65
      %s178 = smul.u32 8, %s19
      %p179 = scmp.lt.s32.totalorder %s178, 15
      %s180 = scalar_select %p179, %s178, 15
      %s181 = smul.addr %s180, 2
      %s182 = smul.addr %s181, 8
      %s183 = scalar_lea.vmem %s2, %s182
      %p184 = pneg %p94
      %p185 = pneg %p91
      %p186 = pneg %p122
      %p187 = pneg %p119
      %s188 = smul.u32 8, %s19
      %p189 = scmp.lt.s32.totalorder %s18, 1
      %s190 = scalar_select %p189, %s18, 1
      %p191 = scmp.lt.s32.totalorder %s188, 15
      %s192 = scalar_select %p191, %s188, 15
      %s193 = smul.addr %s192, 2
      %s194 = smul.addr %s190, 32
      %s195 = sadd.s32 %s193, %s194
      %s196 = smul.addr %s195, 8
      %s197 = scalar_lea.vmem %s3, %s196
      %p198 = scmp.lt.s32.totalorder %s18, 1
      %s199 = scalar_select %p198, %s18, 1
      %s200 = smul.addr %s199, 54
      %s201 = smul.addr %s200, 8
      %s202 = scalar_lea.vmem %s0, %s201
      %s203 = smul.u32 8, %s19
      %p204 = scmp.lt.s32.totalorder %s203, 15
      %s205 = scalar_select %p204, %s203, 15
      %s206 = smul.addr %s205, 2
      %s207 = smul.addr %s206, 8
      %s208 = scalar_lea.vmem %s2, %s207
      %s209 = smul.u32 8, %s19
      %s210 = smul.u32 8, %s19
      %p211 = scmp.lt.s32.totalorder %s18, 1
      %s212 = scalar_select %p211, %s18, 1
      %p213 = scmp.lt.s32.totalorder %s210, 15
      %s214 = scalar_select %p213, %s210, 15
      %s215 = smul.addr %s214, 2
      %s216 = smul.addr %s212, 32
      %s217 = sadd.s32 %s215, %s216
      %s218 = smul.addr %s217, 8
      %s219 = scalar_lea.vmem %s3, %s218
      %s220 = smul.u32 8, %s19
      %s222 = smul.u32 %s19, 8
      %v223 = vld [vmem:[%s208] sm:$0xff]
      %v224 = vld [vmem:[%s208 + $0x8] sm:$0xff]
      %v225 = vld [vmem:[%s208 + $0x10] sm:$0xff]
      %v226 = vld [vmem:[%s208 + $0x18] sm:$0xff]
      %v227 = vld [vmem:[%s208 + $0x20] sm:$0xff]
      %v228 = vld [vmem:[%s208 + $0x28] sm:$0xff]
      %v229 = vld [vmem:[%s208 + $0x30] sm:$0xff]
      %v230 = vld [vmem:[%s208 + $0x38] sm:$0xff]
      %v231 = vld [vmem:[%s208 + $0x40] sm:$0xff]
      %v232 = vld [vmem:[%s208 + $0x48] sm:$0xff]
      %v233 = vld [vmem:[%s208 + $0x50] sm:$0xff]
      %v234 = vld [vmem:[%s208 + $0x58] sm:$0xff]
      %v235 = vld [vmem:[%s208 + $0x60] sm:$0xff]
      %v236 = vld [vmem:[%s208 + $0x68] sm:$0xff]
      %v237 = vld [vmem:[%s208 + $0x70] sm:$0xff]
      %v238 = vld [vmem:[%s208 + $0x78] sm:$0xff]
      %s239 = smul.u32 %s222, 24
      %s240 = scalar_lea.vmem %s202, %s239
      %v241 = vld [vmem:[%s240] sm:$0xff]
      %v242 = vld [vmem:[%s240 + $0x8] sm:$0xff]
      %v243 = vld [vmem:[%s240 + $0x18] sm:$0xff]
      %v244 = vld [vmem:[%s240 + $0x20] sm:$0xff]
      %v245 = vld [vmem:[%s240 + $0x30] sm:$0xff]
      %v246 = vld [vmem:[%s240 + $0x38] sm:$0xff]
      %v247 = vld [vmem:[%s240 + $0x48] sm:$0xff]
      %v248 = vld [vmem:[%s240 + $0x50] sm:$0xff]
      %v249 = vld [vmem:[%s240 + $0x60] sm:$0xff]
      %v250 = vld [vmem:[%s240 + $0x68] sm:$0xff]
      %v251 = vld [vmem:[%s240 + $0x78] sm:$0xff]
      %v252 = vld [vmem:[%s240 + $0x80] sm:$0xff]
      %v253 = vld [vmem:[%s240 + $0x90] sm:$0xff]
      %v254 = vld [vmem:[%s240 + $0x98] sm:$0xff]
      %v255 = vld [vmem:[%s240 + $0xa8] sm:$0xff]
      %v256 = vld [vmem:[%s240 + $0xb0] sm:$0xff]
      %v257 = vpack.c.bf16 %v242, %v241
      %v258 = vpack.c.bf16 %v244, %v243
      %v259 = vpack.c.bf16 %v246, %v245
      %v260 = vpack.c.bf16 %v248, %v247
      %v261 = vpack.c.bf16 %v250, %v249
      %v262 = vpack.c.bf16 %v252, %v251
      %v263 = vpack.c.bf16 %v254, %v253
      %v264 = vpack.c.bf16 %v256, %v255
      %v265 = vld [vmem:[%s1] sm:$0x3]
      %v266 = vld [vmem:[%s1 + $0x2] sm:$0x3]
      %v267 = vld [vmem:[%s1 + $0x4] sm:$0x3]
      %v268 = vld [vmem:[%s1 + $0x6] sm:$0x3]
      %v269 = vld [vmem:[%s1 + $0x8] sm:$0x3]
      %v270 = vld [vmem:[%s1 + $0xa] sm:$0x3]
      %v271 = vld [vmem:[%s1 + $0xc] sm:$0x3]
      %v272 = vld [vmem:[%s1 + $0xe] sm:$0x3]
      %vm273 = vcmask 31744
      %v275 = vsel %vm273, %v257, 0
      %vm277 = vcmask 1041408
      %v279 = vsel %vm277, %v265, 0
      %281 = vmatprep.subr.bf16.mxu0 0
      %282 = vmatpush1.bf16.msra.mxu0 %v279
      %283 = vmatprep.subr.bf16.mxu0 0
      %284 = vmatpush1.bf16.msra.mxu0 0
      %285 = vmatprep.subr.bf16.mxu0 0
      %286 = vmatpush1.bf16.msra.mxu0 0
      %287 = vmatprep.subr.bf16.mxu0 0
      %288 = vmatpush1.bf16.msra.mxu0 0
      %289 = vmatprep.subr.bf16.mxu0 0
      %290 = vmatpush1.bf16.msra.mxu0 0
      %291 = vmatprep.subr.bf16.mxu0 0
      %292 = vmatpush1.bf16.msra.mxu0 0
      %293 = vmatprep.subr.bf16.mxu0 0
      %294 = vmatpush1.bf16.msra.mxu0 0
      %295 = vmatprep.subr.bf16.mxu0 0
      %296 = vmatpush1.bf16.msra.mxu0 0
      %297 = vmatprep.subr.bf16.mxu0 0
      %298 = vmatpush1.bf16.msra.mxu0 0
      %299 = vmatprep.subr.bf16.mxu0 0
      %300 = vmatpush1.bf16.msra.mxu0 0
      %301 = vmatprep.subr.bf16.mxu0 0
      %302 = vmatpush1.bf16.msra.mxu0 0
      %303 = vmatprep.subr.bf16.mxu0 0
      %304 = vmatpush1.bf16.msra.mxu0 0
      %305 = vmatprep.subr.bf16.mxu0 0
      %306 = vmatpush1.bf16.msra.mxu0 0
      %307 = vmatprep.subr.bf16.mxu0 0
      %308 = vmatpush1.bf16.msra.mxu0 0
      %309 = vmatprep.subr.bf16.mxu0 0
      %310 = vmatpush1.bf16.msra.mxu0 0
      %311 = vmatprep.subr.bf16.mxu0 0
      %312 = vmatpush1.bf16.msra.mxu0 0
      %313 = vmatprep.mubr.bf16.mxu0 0
      %314 = vmatmul.mubr.bf16.gmra.mrb[0].mxu0 %v275
      %v315 = vpop.f32.mrb[0].mxu0
      %v316 = vadd.f32 0.0, %v315
      %v317 = vpop.f32.mrb[0].mxu0
      %v318 = vpop.f32.mrb[0].mxu0
      %v319 = vadd.f32 0.0, %v318
      %v320 = vpop.f32.mrb[0].mxu0
      %321 = vdwg.mxu0
      %v323 = vsel %vm273, %v258, 0
      %v326 = vsel %vm277, %v266, 0
      %328 = vmatprep.subr.bf16.mxu0 0
      %329 = vmatpush1.bf16.msra.mxu0 %v326
      %330 = vmatprep.subr.bf16.mxu0 0
      %331 = vmatpush1.bf16.msra.mxu0 0
      %332 = vmatprep.subr.bf16.mxu0 0
      %333 = vmatpush1.bf16.msra.mxu0 0
      %334 = vmatprep.subr.bf16.mxu0 0
      %335 = vmatpush1.bf16.msra.mxu0 0
      %336 = vmatprep.subr.bf16.mxu0 0
      %337 = vmatpush1.bf16.msra.mxu0 0
      %338 = vmatprep.subr.bf16.mxu0 0
      %339 = vmatpush1.bf16.msra.mxu0 0
      %340 = vmatprep.subr.bf16.mxu0 0
      %341 = vmatpush1.bf16.msra.mxu0 0
      %342 = vmatprep.subr.bf16.mxu0 0
      %343 = vmatpush1.bf16.msra.mxu0 0
      %344 = vmatprep.subr.bf16.mxu0 0
      %345 = vmatpush1.bf16.msra.mxu0 0
      %346 = vmatprep.subr.bf16.mxu0 0
      %347 = vmatpush1.bf16.msra.mxu0 0
      %348 = vmatprep.subr.bf16.mxu0 0
      %349 = vmatpush1.bf16.msra.mxu0 0
      %350 = vmatprep.subr.bf16.mxu0 0
      %351 = vmatpush1.bf16.msra.mxu0 0
      %352 = vmatprep.subr.bf16.mxu0 0
      %353 = vmatpush1.bf16.msra.mxu0 0
      %354 = vmatprep.subr.bf16.mxu0 0
      %355 = vmatpush1.bf16.msra.mxu0 0
      %356 = vmatprep.subr.bf16.mxu0 0
      %357 = vmatpush1.bf16.msra.mxu0 0
      %358 = vmatprep.subr.bf16.mxu0 0
      %359 = vmatpush1.bf16.msra.mxu0 0
      %360 = vmatprep.mubr.bf16.mxu0 0
      %361 = vmatmul.mubr.bf16.gmra.mrb[0].mxu0 %v323
      %v362 = vpop.f32.mrb[0].mxu0
      %v363 = vadd.f32 0.0, %v362
      %v364 = vpop.f32.mrb[0].mxu0
      %v365 = vpop.f32.mrb[0].mxu0
      %v366 = vadd.f32 0.0, %v365
      %v367 = vpop.f32.mrb[0].mxu0
      %368 = vdwg.mxu0
      %v370 = vsel %vm273, %v259, 0
      %v373 = vsel %vm277, %v267, 0
      %375 = vmatprep.subr.bf16.mxu0 0
      %376 = vmatpush1.bf16.msra.mxu0 %v373
      %377 = vmatprep.subr.bf16.mxu0 0
      %378 = vmatpush1.bf16.msra.mxu0 0
      %379 = vmatprep.subr.bf16.mxu0 0
      %380 = vmatpush1.bf16.msra.mxu0 0
      %381 = vmatprep.subr.bf16.mxu0 0
      %382 = vmatpush1.bf16.msra.mxu0 0
      %383 = vmatprep.subr.bf16.mxu0 0
      %384 = vmatpush1.bf16.msra.mxu0 0
      %385 = vmatprep.subr.bf16.mxu0 0
      %386 = vmatpush1.bf16.msra.mxu0 0
      %387 = vmatprep.subr.bf16.mxu0 0
      %388 = vmatpush1.bf16.msra.mxu0 0
      %389 = vmatprep.subr.bf16.mxu0 0
      %390 = vmatpush1.bf16.msra.mxu0 0
      %391 = vmatprep.subr.bf16.mxu0 0
      %392 = vmatpush1.bf16.msra.mxu0 0
      %393 = vmatprep.subr.bf16.mxu0 0
      %394 = vmatpush1.bf16.msra.mxu0 0
      %395 = vmatprep.subr.bf16.mxu0 0
      %396 = vmatpush1.bf16.msra.mxu0 0
      %397 = vmatprep.subr.bf16.mxu0 0
      %398 = vmatpush1.bf16.msra.mxu0 0
      %399 = vmatprep.subr.bf16.mxu0 0
      %400 = vmatpush1.bf16.msra.mxu0 0
      %401 = vmatprep.subr.bf16.mxu0 0
      %402 = vmatpush1.bf16.msra.mxu0 0
      %403 = vmatprep.subr.bf16.mxu0 0
      %404 = vmatpush1.bf16.msra.mxu0 0
      %405 = vmatprep.subr.bf16.mxu0 0
      %406 = vmatpush1.bf16.msra.mxu0 0
      %407 = vmatprep.mubr.bf16.mxu0 0
      %408 = vmatmul.mubr.bf16.gmra.mrb[0].mxu0 %v370
      %v409 = vpop.f32.mrb[0].mxu0
      %v410 = vadd.f32 0.0, %v409
      %v411 = vpop.f32.mrb[0].mxu0
      %v412 = vpop.f32.mrb[0].mxu0
      %v413 = vadd.f32 0.0, %v412
      %v414 = vpop.f32.mrb[0].mxu0
      %415 = vdwg.mxu0
      %v417 = vsel %vm273, %v260, 0
      %v420 = vsel %vm277, %v268, 0
      %422 = vmatprep.subr.bf16.mxu0 0
      %423 = vmatpush1.bf16.msra.mxu0 %v420
      %424 = vmatprep.subr.bf16.mxu0 0
      %425 = vmatpush1.bf16.msra.mxu0 0
      %426 = vmatprep.subr.bf16.mxu0 0
      %427 = vmatpush1.bf16.msra.mxu0 0
      %428 = vmatprep.subr.bf16.mxu0 0
      %429 = vmatpush1.bf16.msra.mxu0 0
      %430 = vmatprep.subr.bf16.mxu0 0
      %431 = vmatpush1.bf16.msra.mxu0 0
      %432 = vmatprep.subr.bf16.mxu0 0
      %433 = vmatpush1.bf16.msra.mxu0 0
      %434 = vmatprep.subr.bf16.mxu0 0
      %435 = vmatpush1.bf16.msra.mxu0 0
      %436 = vmatprep.subr.bf16.mxu0 0
      %437 = vmatpush1.bf16.msra.mxu0 0
      %438 = vmatprep.subr.bf16.mxu0 0
      %439 = vmatpush1.bf16.msra.mxu0 0
      %440 = vmatprep.subr.bf16.mxu0 0
      %441 = vmatpush1.bf16.msra.mxu0 0
      %442 = vmatprep.subr.bf16.mxu0 0
      %443 = vmatpush1.bf16.msra.mxu0 0
      %444 = vmatprep.subr.bf16.mxu0 0
      %445 = vmatpush1.bf16.msra.mxu0 0
      %446 = vmatprep.subr.bf16.mxu0 0
      %447 = vmatpush1.bf16.msra.mxu0 0
      %448 = vmatprep.subr.bf16.mxu0 0
      %449 = vmatpush1.bf16.msra.mxu0 0
      %450 = vmatprep.subr.bf16.mxu0 0
      %451 = vmatpush1.bf16.msra.mxu0 0
      %452 = vmatprep.subr.bf16.mxu0 0
      %453 = vmatpush1.bf16.msra.mxu0 0
      %454 = vmatprep.mubr.bf16.mxu0 0
      %455 = vmatmul.mubr.bf16.gmra.mrb[0].mxu0 %v417
      %v456 = vpop.f32.mrb[0].mxu0
      %v457 = vadd.f32 0.0, %v456
      %v458 = vpop.f32.mrb[0].mxu0
      %v459 = vpop.f32.mrb[0].mxu0
      %v460 = vadd.f32 0.0, %v459
      %v461 = vpop.f32.mrb[0].mxu0
      %462 = vdwg.mxu0
      %v464 = vsel %vm273, %v261, 0
      %v467 = vsel %vm277, %v269, 0
      %469 = vmatprep.subr.bf16.mxu0 0
      %470 = vmatpush1.bf16.msra.mxu0 %v467
      %471 = vmatprep.subr.bf16.mxu0 0
      %472 = vmatpush1.bf16.msra.mxu0 0
      %473 = vmatprep.subr.bf16.mxu0 0
      %474 = vmatpush1.bf16.msra.mxu0 0
      %475 = vmatprep.subr.bf16.mxu0 0
      %476 = vmatpush1.bf16.msra.mxu0 0
      %477 = vmatprep.subr.bf16.mxu0 0
      %478 = vmatpush1.bf16.msra.mxu0 0
      %479 = vmatprep.subr.bf16.mxu0 0
      %480 = vmatpush1.bf16.msra.mxu0 0
      %481 = vmatprep.subr.bf16.mxu0 0
      %482 = vmatpush1.bf16.msra.mxu0 0
      %483 = vmatprep.subr.bf16.mxu0 0
      %484 = vmatpush1.bf16.msra.mxu0 0
      %485 = vmatprep.subr.bf16.mxu0 0
      %486 = vmatpush1.bf16.msra.mxu0 0
      %487 = vmatprep.subr.bf16.mxu0 0
      %488 = vmatpush1.bf16.msra.mxu0 0
      %489 = vmatprep.subr.bf16.mxu0 0
      %490 = vmatpush1.bf16.msra.mxu0 0
      %491 = vmatprep.subr.bf16.mxu0 0
      %492 = vmatpush1.bf16.msra.mxu0 0
      %493 = vmatprep.subr.bf16.mxu0 0
      %494 = vmatpush1.bf16.msra.mxu0 0
      %495 = vmatprep.subr.bf16.mxu0 0
      %496 = vmatpush1.bf16.msra.mxu0 0
      %497 = vmatprep.subr.bf16.mxu0 0
      %498 = vmatpush1.bf16.msra.mxu0 0
      %499 = vmatprep.subr.bf16.mxu0 0
      %500 = vmatpush1.bf16.msra.mxu0 0
      %501 = vmatprep.mubr.bf16.mxu0 0
      %502 = vmatmul.mubr.bf16.gmra.mrb[0].mxu0 %v464
      %v503 = vpop.f32.mrb[0].mxu0
      %v504 = vadd.f32 0.0, %v503
      %v505 = vpop.f32.mrb[0].mxu0
      %v506 = vpop.f32.mrb[0].mxu0
      %v507 = vadd.f32 0.0, %v506
      %v508 = vpop.f32.mrb[0].mxu0
      %509 = vdwg.mxu0
      %v511 = vsel %vm273, %v262, 0
      %v514 = vsel %vm277, %v270, 0
      %516 = vmatprep.subr.bf16.mxu0 0
      %517 = vmatpush1.bf16.msra.mxu0 %v514
      %518 = vmatprep.subr.bf16.mxu0 0
      %519 = vmatpush1.bf16.msra.mxu0 0
      %520 = vmatprep.subr.bf16.mxu0 0
      %521 = vmatpush1.bf16.msra.mxu0 0
      %522 = vmatprep.subr.bf16.mxu0 0
      %523 = vmatpush1.bf16.msra.mxu0 0
      %524 = vmatprep.subr.bf16.mxu0 0
      %525 = vmatpush1.bf16.msra.mxu0 0
      %526 = vmatprep.subr.bf16.mxu0 0
      %527 = vmatpush1.bf16.msra.mxu0 0
      %528 = vmatprep.subr.bf16.mxu0 0
      %529 = vmatpush1.bf16.msra.mxu0 0
      %530 = vmatprep.subr.bf16.mxu0 0
      %531 = vmatpush1.bf16.msra.mxu0 0
      %532 = vmatprep.subr.bf16.mxu0 0
      %533 = vmatpush1.bf16.msra.mxu0 0
      %534 = vmatprep.subr.bf16.mxu0 0
      %535 = vmatpush1.bf16.msra.mxu0 0
      %536 = vmatprep.subr.bf16.mxu0 0
      %537 = vmatpush1.bf16.msra.mxu0 0
      %538 = vmatprep.subr.bf16.mxu0 0
      %539 = vmatpush1.bf16.msra.mxu0 0
      %540 = vmatprep.subr.bf16.mxu0 0
      %541 = vmatpush1.bf16.msra.mxu0 0
      %542 = vmatprep.subr.bf16.mxu0 0
      %543 = vmatpush1.bf16.msra.mxu0 0
      %544 = vmatprep.subr.bf16.mxu0 0
      %545 = vmatpush1.bf16.msra.mxu0 0
      %546 = vmatprep.subr.bf16.mxu0 0
      %547 = vmatpush1.bf16.msra.mxu0 0
      %548 = vmatprep.mubr.bf16.mxu0 0
      %549 = vmatmul.mubr.bf16.gmra.mrb[0].mxu0 %v511
      %v550 = vpop.f32.mrb[0].mxu0
      %v551 = vadd.f32 0.0, %v550
      %v552 = vpop.f32.mrb[0].mxu0
      %v553 = vpop.f32.mrb[0].mxu0
      %v554 = vadd.f32 0.0, %v553
      %v555 = vpop.f32.mrb[0].mxu0
      %556 = vdwg.mxu0
      %v558 = vsel %vm273, %v263, 0
      %v561 = vsel %vm277, %v271, 0
      %563 = vmatprep.subr.bf16.mxu0 0
      %564 = vmatpush1.bf16.msra.mxu0 %v561
      %565 = vmatprep.subr.bf16.mxu0 0
      %566 = vmatpush1.bf16.msra.mxu0 0
      %567 = vmatprep.subr.bf16.mxu0 0
      %568 = vmatpush1.bf16.msra.mxu0 0
      %569 = vmatprep.subr.bf16.mxu0 0
      %570 = vmatpush1.bf16.msra.mxu0 0
      %571 = vmatprep.subr.bf16.mxu0 0
      %572 = vmatpush1.bf16.msra.mxu0 0
      %573 = vmatprep.subr.bf16.mxu0 0
      %574 = vmatpush1.bf16.msra.mxu0 0
      %575 = vmatprep.subr.bf16.mxu0 0
      %576 = vmatpush1.bf16.msra.mxu0 0
      %577 = vmatprep.subr.bf16.mxu0 0
      %578 = vmatpush1.bf16.msra.mxu0 0
      %579 = vmatprep.subr.bf16.mxu0 0
      %580 = vmatpush1.bf16.msra.mxu0 0
      %581 = vmatprep.subr.bf16.mxu0 0
      %582 = vmatpush1.bf16.msra.mxu0 0
      %583 = vmatprep.subr.bf16.mxu0 0
      %584 = vmatpush1.bf16.msra.mxu0 0
      %585 = vmatprep.subr.bf16.mxu0 0
      %586 = vmatpush1.bf16.msra.mxu0 0
      %587 = vmatprep.subr.bf16.mxu0 0
      %588 = vmatpush1.bf16.msra.mxu0 0
      %589 = vmatprep.subr.bf16.mxu0 0
      %590 = vmatpush1.bf16.msra.mxu0 0
      %591 = vmatprep.subr.bf16.mxu0 0
      %592 = vmatpush1.bf16.msra.mxu0 0
      %593 = vmatprep.subr.bf16.mxu0 0
      %594 = vmatpush1.bf16.msra.mxu0 0
      %595 = vmatprep.mubr.bf16.mxu0 0
      %596 = vmatmul.mubr.bf16.gmra.mrb[0].mxu0 %v558
      %v597 = vpop.f32.mrb[0].mxu0
      %v598 = vadd.f32 0.0, %v597
      %v599 = vpop.f32.mrb[0].mxu0
      %v600 = vpop.f32.mrb[0].mxu0
      %v601 = vadd.f32 0.0, %v600
      %v602 = vpop.f32.mrb[0].mxu0
      %603 = vdwg.mxu0
      %v605 = vsel %vm273, %v264, 0
      %v608 = vsel %vm277, %v272, 0
      %610 = vmatprep.subr.bf16.mxu0 0
      %611 = vmatpush1.bf16.msra.mxu0 %v608
      %612 = vmatprep.subr.bf16.mxu0 0
      %613 = vmatpush1.bf16.msra.mxu0 0
      %614 = vmatprep.subr.bf16.mxu0 0
      %615 = vmatpush1.bf16.msra.mxu0 0
      %616 = vmatprep.subr.bf16.mxu0 0
      %617 = vmatpush1.bf16.msra.mxu0 0
      %618 = vmatprep.subr.bf16.mxu0 0
      %619 = vmatpush1.bf16.msra.mxu0 0
      %620 = vmatprep.subr.bf16.mxu0 0
      %621 = vmatpush1.bf16.msra.mxu0 0
      %622 = vmatprep.subr.bf16.mxu0 0
      %623 = vmatpush1.bf16.msra.mxu0 0
      %624 = vmatprep.subr.bf16.mxu0 0
      %625 = vmatpush1.bf16.msra.mxu0 0
      %626 = vmatprep.subr.bf16.mxu0 0
      %627 = vmatpush1.bf16.msra.mxu0 0
      %628 = vmatprep.subr.bf16.mxu0 0
      %629 = vmatpush1.bf16.msra.mxu0 0
      %630 = vmatprep.subr.bf16.mxu0 0
      %631 = vmatpush1.bf16.msra.mxu0 0
      %632 = vmatprep.subr.bf16.mxu0 0
      %633 = vmatpush1.bf16.msra.mxu0 0
      %634 = vmatprep.subr.bf16.mxu0 0
      %635 = vmatpush1.bf16.msra.mxu0 0
      %636 = vmatprep.subr.bf16.mxu0 0
      %637 = vmatpush1.bf16.msra.mxu0 0
      %638 = vmatprep.subr.bf16.mxu0 0
      %639 = vmatpush1.bf16.msra.mxu0 0
      %640 = vmatprep.subr.bf16.mxu0 0
      %641 = vmatpush1.bf16.msra.mxu0 0
      %642 = vmatprep.mubr.bf16.mxu0 0
      %643 = vmatmul.mubr.bf16.gmra.mrb[0].mxu0 %v605
      %v644 = vpop.f32.mrb[0].mxu0
      %v645 = vadd.f32 0.0, %v644
      %v646 = vpop.f32.mrb[0].mxu0
      %v647 = vpop.f32.mrb[0].mxu0
      %v648 = vadd.f32 0.0, %v647
      %v649 = vpop.f32.mrb[0].mxu0
      %650 = vdwg.mxu0
      %v651 = vadd.f32 %v223, %v316
      %v652 = vadd.f32 %v224, %v319
      %v653 = vadd.f32 %v225, %v363
      %v654 = vadd.f32 %v226, %v366
      %v655 = vadd.f32 %v227, %v410
      %v656 = vadd.f32 %v228, %v413
      %v657 = vadd.f32 %v229, %v457
      %v658 = vadd.f32 %v230, %v460
      %v659 = vadd.f32 %v231, %v504
      %v660 = vadd.f32 %v232, %v507
      %v661 = vadd.f32 %v233, %v551
      %v662 = vadd.f32 %v234, %v554
      %v663 = vadd.f32 %v235, %v598
      %v664 = vadd.f32 %v236, %v601
      %v665 = vadd.f32 %v237, %v645
      %v666 = vadd.f32 %v238, %v648
      %v667 = vld [vmem:[%s240 + $0x1] sm:$0xff]
      %v668 = vld [vmem:[%s240 + $0x9] sm:$0xff]
      %v669 = vld [vmem:[%s240 + $0x19] sm:$0xff]
      %v670 = vld [vmem:[%s240 + $0x21] sm:$0xff]
      %v671 = vld [vmem:[%s240 + $0x31] sm:$0xff]
      %v672 = vld [vmem:[%s240 + $0x39] sm:$0xff]
      %v673 = vld [vmem:[%s240 + $0x49] sm:$0xff]
      %v674 = vld [vmem:[%s240 + $0x51] sm:$0xff]
      %v675 = vld [vmem:[%s240 + $0x61] sm:$0xff]
      %v676 = vld [vmem:[%s240 + $0x69] sm:$0xff]
      %v677 = vld [vmem:[%s240 + $0x79] sm:$0xff]
      %v678 = vld [vmem:[%s240 + $0x81] sm:$0xff]
      %v679 = vld [vmem:[%s240 + $0x91] sm:$0xff]
      %v680 = vld [vmem:[%s240 + $0x99] sm:$0xff]
      %v681 = vld [vmem:[%s240 + $0xa9] sm:$0xff]
      %v682 = vld [vmem:[%s240 + $0xb1] sm:$0xff]
      %v683 = vpack.c.bf16 %v668, %v667
      %v684 = vpack.c.bf16 %v670, %v669
      %v685 = vpack.c.bf16 %v672, %v671
      %v686 = vpack.c.bf16 %v674, %v673
      %v687 = vpack.c.bf16 %v676, %v675
      %v688 = vpack.c.bf16 %v678, %v677
      %v689 = vpack.c.bf16 %v680, %v679
      %v690 = vpack.c.bf16 %v682, %v681
      %s691 = scalar_lea.vmem %s1, 16
      %v692 = vld [vmem:[%s691] sm:$0x3]
      %v693 = vld [vmem:[%s691 + $0x2] sm:$0x3]
      %v694 = vld [vmem:[%s691 + $0x4] sm:$0x3]
      %v695 = vld [vmem:[%s691 + $0x6] sm:$0x3]
      %v696 = vld [vmem:[%s691 + $0x8] sm:$0x3]
      %v697 = vld [vmem:[%s691 + $0xa] sm:$0x3]
      %v698 = vld [vmem:[%s691 + $0xc] sm:$0x3]
      %v699 = vld [vmem:[%s691 + $0xe] sm:$0x3]
      %v701 = vsel %vm273, %v683, 0
      %v704 = vsel %vm277, %v692, 0
      %706 = vmatprep.subr.bf16.mxu0 0
      %707 = vmatpush1.bf16.msra.mxu0 %v704
      %708 = vmatprep.subr.bf16.mxu0 0
      %709 = vmatpush1.bf16.msra.mxu0 0
      %710 = vmatprep.subr.bf16.mxu0 0
      %711 = vmatpush1.bf16.msra.mxu0 0
      %712 = vmatprep.subr.bf16.mxu0 0
      %713 = vmatpush1.bf16.msra.mxu0 0
      %714 = vmatprep.subr.bf16.mxu0 0
      %715 = vmatpush1.bf16.msra.mxu0 0
      %716 = vmatprep.subr.bf16.mxu0 0
      %717 = vmatpush1.bf16.msra.mxu0 0
      %718 = vmatprep.subr.bf16.mxu0 0
      %719 = vmatpush1.bf16.msra.mxu0 0
      %720 = vmatprep.subr.bf16.mxu0 0
      %721 = vmatpush1.bf16.msra.mxu0 0
      %722 = vmatprep.subr.bf16.mxu0 0
      %723 = vmatpush1.bf16.msra.mxu0 0
      %724 = vmatprep.subr.bf16.mxu0 0
      %725 = vmatpush1.bf16.msra.mxu0 0
      %726 = vmatprep.subr.bf16.mxu0 0
      %727 = vmatpush1.bf16.msra.mxu0 0
      %728 = vmatprep.subr.bf16.mxu0 0
      %729 = vmatpush1.bf16.msra.mxu0 0
      %730 = vmatprep.subr.bf16.mxu0 0
      %731 = vmatpush1.bf16.msra.mxu0 0
      %732 = vmatprep.subr.bf16.mxu0 0
      %733 = vmatpush1.bf16.msra.mxu0 0
      %734 = vmatprep.subr.bf16.mxu0 0
      %735 = vmatpush1.bf16.msra.mxu0 0
      %736 = vmatprep.subr.bf16.mxu0 0
      %737 = vmatpush1.bf16.msra.mxu0 0
      %738 = vmatprep.mubr.bf16.mxu0 0
      %739 = vmatmul.mubr.bf16.gmra.mrb[0].mxu0 %v701
      %v740 = vpop.f32.mrb[0].mxu0
      %v741 = vadd.f32 0.0, %v740
      %v742 = vpop.f32.mrb[0].mxu0
      %v743 = vpop.f32.mrb[0].mxu0
      %v744 = vadd.f32 0.0, %v743
      %v745 = vpop.f32.mrb[0].mxu0
      %746 = vdwg.mxu0
      %v748 = vsel %vm273, %v684, 0
      %v751 = vsel %vm277, %v693, 0
      %753 = vmatprep.subr.bf16.mxu0 0
      %754 = vmatpush1.bf16.msra.mxu0 %v751
      %755 = vmatprep.subr.bf16.mxu0 0
      %756 = vmatpush1.bf16.msra.mxu0 0
      %757 = vmatprep.subr.bf16.mxu0 0
      %758 = vmatpush1.bf16.msra.mxu0 0
      %759 = vmatprep.subr.bf16.mxu0 0
      %760 = vmatpush1.bf16.msra.mxu0 0
      %761 = vmatprep.subr.bf16.mxu0 0
      %762 = vmatpush1.bf16.msra.mxu0 0
      %763 = vmatprep.subr.bf16.mxu0 0
      %764 = vmatpush1.bf16.msra.mxu0 0
      %765 = vmatprep.subr.bf16.mxu0 0
      %766 = vmatpush1.bf16.msra.mxu0 0
      %767 = vmatprep.subr.bf16.mxu0 0
      %768 = vmatpush1.bf16.msra.mxu0 0
      %769 = vmatprep.subr.bf16.mxu0 0
      %770 = vmatpush1.bf16.msra.mxu0 0
      %771 = vmatprep.subr.bf16.mxu0 0
      %772 = vmatpush1.bf16.msra.mxu0 0
      %773 = vmatprep.subr.bf16.mxu0 0
      %774 = vmatpush1.bf16.msra.mxu0 0
      %775 = vmatprep.subr.bf16.mxu0 0
      %776 = vmatpush1.bf16.msra.mxu0 0
      %777 = vmatprep.subr.bf16.mxu0 0
      %778 = vmatpush1.bf16.msra.mxu0 0
      %779 = vmatprep.subr.bf16.mxu0 0
      %780 = vmatpush1.bf16.msra.mxu0 0
      %781 = vmatprep.subr.bf16.mxu0 0
      %782 = vmatpush1.bf16.msra.mxu0 0
      %783 = vmatprep.subr.bf16.mxu0 0
      %784 = vmatpush1.bf16.msra.mxu0 0
      %785 = vmatprep.mubr.bf16.mxu0 0
      %786 = vmatmul.mubr.bf16.gmra.mrb[0].mxu0 %v748
      %v787 = vpop.f32.mrb[0].mxu0
      %v788 = vadd.f32 0.0, %v787
      %v789 = vpop.f32.mrb[0].mxu0
      %v790 = vpop.f32.mrb[0].mxu0
      %v791 = vadd.f32 0.0, %v790
      %v792 = vpop.f32.mrb[0].mxu0
      %793 = vdwg.mxu0
      %v795 = vsel %vm273, %v685, 0
      %v798 = vsel %vm277, %v694, 0
      %800 = vmatprep.subr.bf16.mxu0 0
      %801 = vmatpush1.bf16.msra.mxu0 %v798
      %802 = vmatprep.subr.bf16.mxu0 0
      %803 = vmatpush1.bf16.msra.mxu0 0
      %804 = vmatprep.subr.bf16.mxu0 0
      %805 = vmatpush1.bf16.msra.mxu0 0
      %806 = vmatprep.subr.bf16.mxu0 0
      %807 = vmatpush1.bf16.msra.mxu0 0
      %808 = vmatprep.subr.bf16.mxu0 0
      %809 = vmatpush1.bf16.msra.mxu0 0
      %810 = vmatprep.subr.bf16.mxu0 0
      %811 = vmatpush1.bf16.msra.mxu0 0
      %812 = vmatprep.subr.bf16.mxu0 0
      %813 = vmatpush1.bf16.msra.mxu0 0
      %814 = vmatprep.subr.bf16.mxu0 0
      %815 = vmatpush1.bf16.msra.mxu0 0
      %816 = vmatprep.subr.bf16.mxu0 0
      %817 = vmatpush1.bf16.msra.mxu0 0
      %818 = vmatprep.subr.bf16.mxu0 0
      %819 = vmatpush1.bf16.msra.mxu0 0
      %820 = vmatprep.subr.bf16.mxu0 0
      %821 = vmatpush1.bf16.msra.mxu0 0
      %822 = vmatprep.subr.bf16.mxu0 0
      %823 = vmatpush1.bf16.msra.mxu0 0
      %824 = vmatprep.subr.bf16.mxu0 0
      %825 = vmatpush1.bf16.msra.mxu0 0
      %826 = vmatprep.subr.bf16.mxu0 0
      %827 = vmatpush1.bf16.msra.mxu0 0
      %828 = vmatprep.subr.bf16.mxu0 0
      %829 = vmatpush1.bf16.msra.mxu0 0
      %830 = vmatprep.subr.bf16.mxu0 0
      %831 = vmatpush1.bf16.msra.mxu0 0
      %832 = vmatprep.mubr.bf16.mxu0 0
      %833 = vmatmul.mubr.bf16.gmra.mrb[0].mxu0 %v795
      %v834 = vpop.f32.mrb[0].mxu0
      %v835 = vadd.f32 0.0, %v834
      %v836 = vpop.f32.mrb[0].mxu0
      %v837 = vpop.f32.mrb[0].mxu0
      %v838 = vadd.f32 0.0, %v837
      %v839 = vpop.f32.mrb[0].mxu0
      %840 = vdwg.mxu0
      %v842 = vsel %vm273, %v686, 0
      %v845 = vsel %vm277, %v695, 0
      %847 = vmatprep.subr.bf16.mxu0 0
      %848 = vmatpush1.bf16.msra.mxu0 %v845
      %849 = vmatprep.subr.bf16.mxu0 0
      %850 = vmatpush1.bf16.msra.mxu0 0
      %851 = vmatprep.subr.bf16.mxu0 0
      %852 = vmatpush1.bf16.msra.mxu0 0
      %853 = vmatprep.subr.bf16.mxu0 0
      %854 = vmatpush1.bf16.msra.mxu0 0
      %855 = vmatprep.subr.bf16.mxu0 0
      %856 = vmatpush1.bf16.msra.mxu0 0
      %857 = vmatprep.subr.bf16.mxu0 0
      %858 = vmatpush1.bf16.msra.mxu0 0
      %859 = vmatprep.subr.bf16.mxu0 0
      %860 = vmatpush1.bf16.msra.mxu0 0
      %861 = vmatprep.subr.bf16.mxu0 0
      %862 = vmatpush1.bf16.msra.mxu0 0
      %863 = vmatprep.subr.bf16.mxu0 0
      %864 = vmatpush1.bf16.msra.mxu0 0
      %865 = vmatprep.subr.bf16.mxu0 0
      %866 = vmatpush1.bf16.msra.mxu0 0
      %867 = vmatprep.subr.bf16.mxu0 0
      %868 = vmatpush1.bf16.msra.mxu0 0
      %869 = vmatprep.subr.bf16.mxu0 0
      %870 = vmatpush1.bf16.msra.mxu0 0
      %871 = vmatprep.subr.bf16.mxu0 0
      %872 = vmatpush1.bf16.msra.mxu0 0
      %873 = vmatprep.subr.bf16.mxu0 0
      %874 = vmatpush1.bf16.msra.mxu0 0
      %875 = vmatprep.subr.bf16.mxu0 0
      %876 = vmatpush1.bf16.msra.mxu0 0
      %877 = vmatprep.subr.bf16.mxu0 0
      %878 = vmatpush1.bf16.msra.mxu0 0
      %879 = vmatprep.mubr.bf16.mxu0 0
      %880 = vmatmul.mubr.bf16.gmra.mrb[0].mxu0 %v842
      %v881 = vpop.f32.mrb[0].mxu0
      %v882 = vadd.f32 0.0, %v881
      %v883 = vpop.f32.mrb[0].mxu0
      %v884 = vpop.f32.mrb[0].mxu0
      %v885 = vadd.f32 0.0, %v884
      %v886 = vpop.f32.mrb[0].mxu0
      %887 = vdwg.mxu0
      %v889 = vsel %vm273, %v687, 0
      %v892 = vsel %vm277, %v696, 0
      %894 = vmatprep.subr.bf16.mxu0 0
      %895 = vmatpush1.bf16.msra.mxu0 %v892
      %896 = vmatprep.subr.bf16.mxu0 0
      %897 = vmatpush1.bf16.msra.mxu0 0
      %898 = vmatprep.subr.bf16.mxu0 0
      %899 = vmatpush1.bf16.msra.mxu0 0
      %900 = vmatprep.subr.bf16.mxu0 0
      %901 = vmatpush1.bf16.msra.mxu0 0
      %902 = vmatprep.subr.bf16.mxu0 0
      %903 = vmatpush1.bf16.msra.mxu0 0
      %904 = vmatprep.subr.bf16.mxu0 0
      %905 = vmatpush1.bf16.msra.mxu0 0
      %906 = vmatprep.subr.bf16.mxu0 0
      %907 = vmatpush1.bf16.msra.mxu0 0
      %908 = vmatprep.subr.bf16.mxu0 0
      %909 = vmatpush1.bf16.msra.mxu0 0
      %910 = vmatprep.subr.bf16.mxu0 0
      %911 = vmatpush1.bf16.msra.mxu0 0
      %912 = vmatprep.subr.bf16.mxu0 0
      %913 = vmatpush1.bf16.msra.mxu0 0
      %914 = vmatprep.subr.bf16.mxu0 0
      %915 = vmatpush1.bf16.msra.mxu0 0
      %916 = vmatprep.subr.bf16.mxu0 0
      %917 = vmatpush1.bf16.msra.mxu0 0
      %918 = vmatprep.subr.bf16.mxu0 0
      %919 = vmatpush1.bf16.msra.mxu0 0
      %920 = vmatprep.subr.bf16.mxu0 0
      %921 = vmatpush1.bf16.msra.mxu0 0
      %922 = vmatprep.subr.bf16.mxu0 0
      %923 = vmatpush1.bf16.msra.mxu0 0
      %924 = vmatprep.subr.bf16.mxu0 0
      %925 = vmatpush1.bf16.msra.mxu0 0
      %926 = vmatprep.mubr.bf16.mxu0 0
      %927 = vmatmul.mubr.bf16.gmra.mrb[0].mxu0 %v889
      %v928 = vpop.f32.mrb[0].mxu0
      %v929 = vadd.f32 0.0, %v928
      %v930 = vpop.f32.mrb[0].mxu0
      %v931 = vpop.f32.mrb[0].mxu0
      %v932 = vadd.f32 0.0, %v931
      %v933 = vpop.f32.mrb[0].mxu0
      %934 = vdwg.mxu0
      %v936 = vsel %vm273, %v688, 0
      %v939 = vsel %vm277, %v697, 0
      %941 = vmatprep.subr.bf16.mxu0 0
      %942 = vmatpush1.bf16.msra.mxu0 %v939
      %943 = vmatprep.subr.bf16.mxu0 0
      %944 = vmatpush1.bf16.msra.mxu0 0
      %945 = vmatprep.subr.bf16.mxu0 0
      %946 = vmatpush1.bf16.msra.mxu0 0
      %947 = vmatprep.subr.bf16.mxu0 0
      %948 = vmatpush1.bf16.msra.mxu0 0
      %949 = vmatprep.subr.bf16.mxu0 0
      %950 = vmatpush1.bf16.msra.mxu0 0
      %951 = vmatprep.subr.bf16.mxu0 0
      %952 = vmatpush1.bf16.msra.mxu0 0
      %953 = vmatprep.subr.bf16.mxu0 0
      %954 = vmatpush1.bf16.msra.mxu0 0
      %955 = vmatprep.subr.bf16.mxu0 0
      %956 = vmatpush1.bf16.msra.mxu0 0
      %957 = vmatprep.subr.bf16.mxu0 0
      %958 = vmatpush1.bf16.msra.mxu0 0
      %959 = vmatprep.subr.bf16.mxu0 0
      %960 = vmatpush1.bf16.msra.mxu0 0
      %961 = vmatprep.subr.bf16.mxu0 0
      %962 = vmatpush1.bf16.msra.mxu0 0
      %963 = vmatprep.subr.bf16.mxu0 0
      %964 = vmatpush1.bf16.msra.mxu0 0
      %965 = vmatprep.subr.bf16.mxu0 0
      %966 = vmatpush1.bf16.msra.mxu0 0
      %967 = vmatprep.subr.bf16.mxu0 0
      %968 = vmatpush1.bf16.msra.mxu0 0
      %969 = vmatprep.subr.bf16.mxu0 0
      %970 = vmatpush1.bf16.msra.mxu0 0
      %971 = vmatprep.subr.bf16.mxu0 0
      %972 = vmatpush1.bf16.msra.mxu0 0
      %973 = vmatprep.mubr.bf16.mxu0 0
      %974 = vmatmul.mubr.bf16.gmra.mrb[0].mxu0 %v936
      %v975 = vpop.f32.mrb[0].mxu0
      %v976 = vadd.f32 0.0, %v975
      %v977 = vpop.f32.mrb[0].mxu0
      %v978 = vpop.f32.mrb[0].mxu0
      %v979 = vadd.f32 0.0, %v978
      %v980 = vpop.f32.mrb[0].mxu0
      %981 = vdwg.mxu0
      %v983 = vsel %vm273, %v689, 0
      %v986 = vsel %vm277, %v698, 0
      %988 = vmatprep.subr.bf16.mxu0 0
      %989 = vmatpush1.bf16.msra.mxu0 %v986
      %990 = vmatprep.subr.bf16.mxu0 0
      %991 = vmatpush1.bf16.msra.mxu0 0
      %992 = vmatprep.subr.bf16.mxu0 0
      %993 = vmatpush1.bf16.msra.mxu0 0
      %994 = vmatprep.subr.bf16.mxu0 0
      %995 = vmatpush1.bf16.msra.mxu0 0
      %996 = vmatprep.subr.bf16.mxu0 0
      %997 = vmatpush1.bf16.msra.mxu0 0
      %998 = vmatprep.subr.bf16.mxu0 0
      %999 = vmatpush1.bf16.msra.mxu0 0
      %1000 = vmatprep.subr.bf16.mxu0 0
      %1001 = vmatpush1.bf16.msra.mxu0 0
      %1002 = vmatprep.subr.bf16.mxu0 0
      %1003 = vmatpush1.bf16.msra.mxu0 0
      %1004 = vmatprep.subr.bf16.mxu0 0
      %1005 = vmatpush1.bf16.msra.mxu0 0
      %1006 = vmatprep.subr.bf16.mxu0 0
      %1007 = vmatpush1.bf16.msra.mxu0 0
      %1008 = vmatprep.subr.bf16.mxu0 0
      %1009 = vmatpush1.bf16.msra.mxu0 0
      %1010 = vmatprep.subr.bf16.mxu0 0
      %1011 = vmatpush1.bf16.msra.mxu0 0
      %1012 = vmatprep.subr.bf16.mxu0 0
      %1013 = vmatpush1.bf16.msra.mxu0 0
      %1014 = vmatprep.subr.bf16.mxu0 0
      %1015 = vmatpush1.bf16.msra.mxu0 0
      %1016 = vmatprep.subr.bf16.mxu0 0
      %1017 = vmatpush1.bf16.msra.mxu0 0
      %1018 = vmatprep.subr.bf16.mxu0 0
      %1019 = vmatpush1.bf16.msra.mxu0 0
      %1020 = vmatprep.mubr.bf16.mxu0 0
      %1021 = vmatmul.mubr.bf16.gmra.mrb[0].mxu0 %v983
      %v1022 = vpop.f32.mrb[0].mxu0
      %v1023 = vadd.f32 0.0, %v1022
      %v1024 = vpop.f32.mrb[0].mxu0
      %v1025 = vpop.f32.mrb[0].mxu0
      %v1026 = vadd.f32 0.0, %v1025
      %v1027 = vpop.f32.mrb[0].mxu0
      %1028 = vdwg.mxu0
      %v1030 = vsel %vm273, %v690, 0
      %v1033 = vsel %vm277, %v699, 0
      %1035 = vmatprep.subr.bf16.mxu0 0
      %1036 = vmatpush1.bf16.msra.mxu0 %v1033
      %1037 = vmatprep.subr.bf16.mxu0 0
      %1038 = vmatpush1.bf16.msra.mxu0 0
      %1039 = vmatprep.subr.bf16.mxu0 0
      %1040 = vmatpush1.bf16.msra.mxu0 0
      %1041 = vmatprep.subr.bf16.mxu0 0
      %1042 = vmatpush1.bf16.msra.mxu0 0
      %1043 = vmatprep.subr.bf16.mxu0 0
      %1044 = vmatpush1.bf16.msra.mxu0 0
      %1045 = vmatprep.subr.bf16.mxu0 0
      %1046 = vmatpush1.bf16.msra.mxu0 0
      %1047 = vmatprep.subr.bf16.mxu0 0
      %1048 = vmatpush1.bf16.msra.mxu0 0
      %1049 = vmatprep.subr.bf16.mxu0 0
      %1050 = vmatpush1.bf16.msra.mxu0 0
      %1051 = vmatprep.subr.bf16.mxu0 0
      %1052 = vmatpush1.bf16.msra.mxu0 0
      %1053 = vmatprep.subr.bf16.mxu0 0
      %1054 = vmatpush1.bf16.msra.mxu0 0
      %1055 = vmatprep.subr.bf16.mxu0 0
      %1056 = vmatpush1.bf16.msra.mxu0 0
      %1057 = vmatprep.subr.bf16.mxu0 0
      %1058 = vmatpush1.bf16.msra.mxu0 0
      %1059 = vmatprep.subr.bf16.mxu0 0
      %1060 = vmatpush1.bf16.msra.mxu0 0
      %1061 = vmatprep.subr.bf16.mxu0 0
      %1062 = vmatpush1.bf16.msra.mxu0 0
      %1063 = vmatprep.subr.bf16.mxu0 0
      %1064 = vmatpush1.bf16.msra.mxu0 0
      %1065 = vmatprep.subr.bf16.mxu0 0
      %1066 = vmatpush1.bf16.msra.mxu0 0
      %1067 = vmatprep.mubr.bf16.mxu0 0
      %1068 = vmatmul.mubr.bf16.gmra.mrb[0].mxu0 %v1030
      %v1069 = vpop.f32.mrb[0].mxu0
      %v1070 = vadd.f32 0.0, %v1069
      %v1071 = vpop.f32.mrb[0].mxu0
      %v1072 = vpop.f32.mrb[0].mxu0
      %v1073 = vadd.f32 0.0, %v1072
      %v1074 = vpop.f32.mrb[0].mxu0
      %1075 = vdwg.mxu0
      %v1076 = vadd.f32 %v651, %v741
      %v1077 = vadd.f32 %v652, %v744
      %v1078 = vadd.f32 %v653, %v788
      %v1079 = vadd.f32 %v654, %v791
      %v1080 = vadd.f32 %v655, %v835
      %v1081 = vadd.f32 %v656, %v838
      %v1082 = vadd.f32 %v657, %v882
      %v1083 = vadd.f32 %v658, %v885
      %v1084 = vadd.f32 %v659, %v929
      %v1085 = vadd.f32 %v660, %v932
      %v1086 = vadd.f32 %v661, %v976
      %v1087 = vadd.f32 %v662, %v979
      %v1088 = vadd.f32 %v663, %v1023
      %v1089 = vadd.f32 %v664, %v1026
      %v1090 = vadd.f32 %v665, %v1070
      %v1091 = vadd.f32 %v666, %v1073
      %v1092 = vld [vmem:[%s240 + $0x2] sm:$0xff]
      %v1093 = vld [vmem:[%s240 + $0xa] sm:$0xff]
      %v1094 = vld [vmem:[%s240 + $0x1a] sm:$0xff]
      %v1095 = vld [vmem:[%s240 + $0x22] sm:$0xff]
      %v1096 = vld [vmem:[%s240 + $0x32] sm:$0xff]
      %v1097 = vld [vmem:[%s240 + $0x3a] sm:$0xff]
      %v1098 = vld [vmem:[%s240 + $0x4a] sm:$0xff]
      %v1099 = vld [vmem:[%s240 + $0x52] sm:$0xff]
      %v1100 = vld [vmem:[%s240 + $0x62] sm:$0xff]
      %v1101 = vld [vmem:[%s240 + $0x6a] sm:$0xff]
      %v1102 = vld [vmem:[%s240 + $0x7a] sm:$0xff]
      %v1103 = vld [vmem:[%s240 + $0x82] sm:$0xff]
      %v1104 = vld [vmem:[%s240 + $0x92] sm:$0xff]
      %v1105 = vld [vmem:[%s240 + $0x9a] sm:$0xff]
      %v1106 = vld [vmem:[%s240 + $0xaa] sm:$0xff]
      %v1107 = vld [vmem:[%s240 + $0xb2] sm:$0xff]
      %v1108 = vpack.c.bf16 %v1093, %v1092
      %v1109 = vpack.c.bf16 %v1095, %v1094
      %v1110 = vpack.c.bf16 %v1097, %v1096
      %v1111 = vpack.c.bf16 %v1099, %v1098
      %v1112 = vpack.c.bf16 %v1101, %v1100
      %v1113 = vpack.c.bf16 %v1103, %v1102
      %v1114 = vpack.c.bf16 %v1105, %v1104
      %v1115 = vpack.c.bf16 %v1107, %v1106
      %s1116 = scalar_lea.vmem %s1, 32
      %v1117 = vld [vmem:[%s1116] sm:$0x3]
      %v1118 = vld [vmem:[%s1116 + $0x2] sm:$0x3]
      %v1119 = vld [vmem:[%s1116 + $0x4] sm:$0x3]
      %v1120 = vld [vmem:[%s1116 + $0x6] sm:$0x3]
      %v1121 = vld [vmem:[%s1116 + $0x8] sm:$0x3]
      %v1122 = vld [vmem:[%s1116 + $0xa] sm:$0x3]
      %v1123 = vld [vmem:[%s1116 + $0xc] sm:$0x3]
      %v1124 = vld [vmem:[%s1116 + $0xe] sm:$0x3]
      %v1126 = vsel %vm273, %v1108, 0
      %v1129 = vsel %vm277, %v1117, 0
      %1131 = vmatprep.subr.bf16.mxu0 0
      %1132 = vmatpush1.bf16.msra.mxu0 %v1129
      %1133 = vmatprep.subr.bf16.mxu0 0
      %1134 = vmatpush1.bf16.msra.mxu0 0
      %1135 = vmatprep.subr.bf16.mxu0 0
      %1136 = vmatpush1.bf16.msra.mxu0 0
      %1137 = vmatprep.subr.bf16.mxu0 0
      %1138 = vmatpush1.bf16.msra.mxu0 0
      %1139 = vmatprep.subr.bf16.mxu0 0
      %1140 = vmatpush1.bf16.msra.mxu0 0
      %1141 = vmatprep.subr.bf16.mxu0 0
      %1142 = vmatpush1.bf16.msra.mxu0 0
      %1143 = vmatprep.subr.bf16.mxu0 0
      %1144 = vmatpush1.bf16.msra.mxu0 0
      %1145 = vmatprep.subr.bf16.mxu0 0
      %1146 = vmatpush1.bf16.msra.mxu0 0
      %1147 = vmatprep.subr.bf16.mxu0 0
      %1148 = vmatpush1.bf16.msra.mxu0 0
      %1149 = vmatprep.subr.bf16.mxu0 0
      %1150 = vmatpush1.bf16.msra.mxu0 0
      %1151 = vmatprep.subr.bf16.mxu0 0
      %1152 = vmatpush1.bf16.msra.mxu0 0
      %1153 = vmatprep.subr.bf16.mxu0 0
      %1154 = vmatpush1.bf16.msra.mxu0 0
      %1155 = vmatprep.subr.bf16.mxu0 0
      %1156 = vmatpush1.bf16.msra.mxu0 0
      %1157 = vmatprep.subr.bf16.mxu0 0
      %1158 = vmatpush1.bf16.msra.mxu0 0
      %1159 = vmatprep.subr.bf16.mxu0 0
      %1160 = vmatpush1.bf16.msra.mxu0 0
      %1161 = vmatprep.subr.bf16.mxu0 0
      %1162 = vmatpush1.bf16.msra.mxu0 0
      %1163 = vmatprep.mubr.bf16.mxu0 0
      %1164 = vmatmul.mubr.bf16.gmra.mrb[0].mxu0 %v1126
      %v1165 = vpop.f32.mrb[0].mxu0
      %v1166 = vadd.f32 0.0, %v1165
      %v1167 = vpop.f32.mrb[0].mxu0
      %v1168 = vpop.f32.mrb[0].mxu0
      %v1169 = vadd.f32 0.0, %v1168
      %v1170 = vpop.f32.mrb[0].mxu0
      %1171 = vdwg.mxu0
      %v1173 = vsel %vm273, %v1109, 0
      %v1176 = vsel %vm277, %v1118, 0
      %1178 = vmatprep.subr.bf16.mxu0 0
      %1179 = vmatpush1.bf16.msra.mxu0 %v1176
      %1180 = vmatprep.subr.bf16.mxu0 0
      %1181 = vmatpush1.bf16.msra.mxu0 0
      %1182 = vmatprep.subr.bf16.mxu0 0
      %1183 = vmatpush1.bf16.msra.mxu0 0
      %1184 = vmatprep.subr.bf16.mxu0 0
      %1185 = vmatpush1.bf16.msra.mxu0 0
      %1186 = vmatprep.subr.bf16.mxu0 0
      %1187 = vmatpush1.bf16.msra.mxu0 0
      %1188 = vmatprep.subr.bf16.mxu0 0
      %1189 = vmatpush1.bf16.msra.mxu0 0
      %1190 = vmatprep.subr.bf16.mxu0 0
      %1191 = vmatpush1.bf16.msra.mxu0 0
      %1192 = vmatprep.subr.bf16.mxu0 0
      %1193 = vmatpush1.bf16.msra.mxu0 0
      %1194 = vmatprep.subr.bf16.mxu0 0
      %1195 = vmatpush1.bf16.msra.mxu0 0
      %1196 = vmatprep.subr.bf16.mxu0 0
      %1197 = vmatpush1.bf16.msra.mxu0 0
      %1198 = vmatprep.subr.bf16.mxu0 0
      %1199 = vmatpush1.bf16.msra.mxu0 0
      %1200 = vmatprep.subr.bf16.mxu0 0
      %1201 = vmatpush1.bf16.msra.mxu0 0
      %1202 = vmatprep.subr.bf16.mxu0 0
      %1203 = vmatpush1.bf16.msra.mxu0 0
      %1204 = vmatprep.subr.bf16.mxu0 0
      %1205 = vmatpush1.bf16.msra.mxu0 0
      %1206 = vmatprep.subr.bf16.mxu0 0
      %1207 = vmatpush1.bf16.msra.mxu0 0
      %1208 = vmatprep.subr.bf16.mxu0 0
      %1209 = vmatpush1.bf16.msra.mxu0 0
      %1210 = vmatprep.mubr.bf16.mxu0 0
      %1211 = vmatmul.mubr.bf16.gmra.mrb[0].mxu0 %v1173
      %v1212 = vpop.f32.mrb[0].mxu0
      %v1213 = vadd.f32 0.0, %v1212
      %v1214 = vpop.f32.mrb[0].mxu0
      %v1215 = vpop.f32.mrb[0].mxu0
      %v1216 = vadd.f32 0.0, %v1215
      %v1217 = vpop.f32.mrb[0].mxu0
      %1218 = vdwg.mxu0
      %v1220 = vsel %vm273, %v1110, 0
      %v1223 = vsel %vm277, %v1119, 0
      %1225 = vmatprep.subr.bf16.mxu0 0
      %1226 = vmatpush1.bf16.msra.mxu0 %v1223
      %1227 = vmatprep.subr.bf16.mxu0 0
      %1228 = vmatpush1.bf16.msra.mxu0 0
      %1229 = vmatprep.subr.bf16.mxu0 0
      %1230 = vmatpush1.bf16.msra.mxu0 0
      %1231 = vmatprep.subr.bf16.mxu0 0
      %1232 = vmatpush1.bf16.msra.mxu0 0
      %1233 = vmatprep.subr.bf16.mxu0 0
      %1234 = vmatpush1.bf16.msra.mxu0 0
      %1235 = vmatprep.subr.bf16.mxu0 0
      %1236 = vmatpush1.bf16.msra.mxu0 0
      %1237 = vmatprep.subr.bf16.mxu0 0
      %1238 = vmatpush1.bf16.msra.mxu0 0
      %1239 = vmatprep.subr.bf16.mxu0 0
      %1240 = vmatpush1.bf16.msra.mxu0 0
      %1241 = vmatprep.subr.bf16.mxu0 0
      %1242 = vmatpush1.bf16.msra.mxu0 0
      %1243 = vmatprep.subr.bf16.mxu0 0
      %1244 = vmatpush1.bf16.msra.mxu0 0
      %1245 = vmatprep.subr.bf16.mxu0 0
      %1246 = vmatpush1.bf16.msra.mxu0 0
      %1247 = vmatprep.subr.bf16.mxu0 0
      %1248 = vmatpush1.bf16.msra.mxu0 0
      %1249 = vmatprep.subr.bf16.mxu0 0
      %1250 = vmatpush1.bf16.msra.mxu0 0
      %1251 = vmatprep.subr.bf16.mxu0 0
      %1252 = vmatpush1.bf16.msra.mxu0 0
      %1253 = vmatprep.subr.bf16.mxu0 0
      %1254 = vmatpush1.bf16.msra.mxu0 0
      %1255 = vmatprep.subr.bf16.mxu0 0
      %1256 = vmatpush1.bf16.msra.mxu0 0
      %1257 = vmatprep.mubr.bf16.mxu0 0
      %1258 = vmatmul.mubr.bf16.gmra.mrb[0].mxu0 %v1220
      %v1259 = vpop.f32.mrb[0].mxu0
      %v1260 = vadd.f32 0.0, %v1259
      %v1261 = vpop.f32.mrb[0].mxu0
      %v1262 = vpop.f32.mrb[0].mxu0
      %v1263 = vadd.f32 0.0, %v1262
      %v1264 = vpop.f32.mrb[0].mxu0
      %1265 = vdwg.mxu0
      %v1267 = vsel %vm273, %v1111, 0
      %v1270 = vsel %vm277, %v1120, 0
      %1272 = vmatprep.subr.bf16.mxu0 0
      %1273 = vmatpush1.bf16.msra.mxu0 %v1270
      %1274 = vmatprep.subr.bf16.mxu0 0
      %1275 = vmatpush1.bf16.msra.mxu0 0
      %1276 = vmatprep.subr.bf16.mxu0 0
      %1277 = vmatpush1.bf16.msra.mxu0 0
      %1278 = vmatprep.subr.bf16.mxu0 0
      %1279 = vmatpush1.bf16.msra.mxu0 0
      %1280 = vmatprep.subr.bf16.mxu0 0
      %1281 = vmatpush1.bf16.msra.mxu0 0
      %1282 = vmatprep.subr.bf16.mxu0 0
      %1283 = vmatpush1.bf16.msra.mxu0 0
      %1284 = vmatprep.subr.bf16.mxu0 0
      %1285 = vmatpush1.bf16.msra.mxu0 0
      %1286 = vmatprep.subr.bf16.mxu0 0
      %1287 = vmatpush1.bf16.msra.mxu0 0
      %1288 = vmatprep.subr.bf16.mxu0 0
      %1289 = vmatpush1.bf16.msra.mxu0 0
      %1290 = vmatprep.subr.bf16.mxu0 0
      %1291 = vmatpush1.bf16.msra.mxu0 0
      %1292 = vmatprep.subr.bf16.mxu0 0
      %1293 = vmatpush1.bf16.msra.mxu0 0
      %1294 = vmatprep.subr.bf16.mxu0 0
      %1295 = vmatpush1.bf16.msra.mxu0 0
      %1296 = vmatprep.subr.bf16.mxu0 0
      %1297 = vmatpush1.bf16.msra.mxu0 0
      %1298 = vmatprep.subr.bf16.mxu0 0
      %1299 = vmatpush1.bf16.msra.mxu0 0
      %1300 = vmatprep.subr.bf16.mxu0 0
      %1301 = vmatpush1.bf16.msra.mxu0 0
      %1302 = vmatprep.subr.bf16.mxu0 0
      %1303 = vmatpush1.bf16.msra.mxu0 0
      %1304 = vmatprep.mubr.bf16.mxu0 0
      %1305 = vmatmul.mubr.bf16.gmra.mrb[0].mxu0 %v1267
      %v1306 = vpop.f32.mrb[0].mxu0
      %v1307 = vadd.f32 0.0, %v1306
      %v1308 = vpop.f32.mrb[0].mxu0
      %v1309 = vpop.f32.mrb[0].mxu0
      %v1310 = vadd.f32 0.0, %v1309
      %v1311 = vpop.f32.mrb[0].mxu0
      %1312 = vdwg.mxu0
      %v1314 = vsel %vm273, %v1112, 0
      %v1317 = vsel %vm277, %v1121, 0
      %1319 = vmatprep.subr.bf16.mxu0 0
      %1320 = vmatpush1.bf16.msra.mxu0 %v1317
      %1321 = vmatprep.subr.bf16.mxu0 0
      %1322 = vmatpush1.bf16.msra.mxu0 0
      %1323 = vmatprep.subr.bf16.mxu0 0
      %1324 = vmatpush1.bf16.msra.mxu0 0
      %1325 = vmatprep.subr.bf16.mxu0 0
      %1326 = vmatpush1.bf16.msra.mxu0 0
      %1327 = vmatprep.subr.bf16.mxu0 0
      %1328 = vmatpush1.bf16.msra.mxu0 0
      %1329 = vmatprep.subr.bf16.mxu0 0
      %1330 = vmatpush1.bf16.msra.mxu0 0
      %1331 = vmatprep.subr.bf16.mxu0 0
      %1332 = vmatpush1.bf16.msra.mxu0 0
      %1333 = vmatprep.subr.bf16.mxu0 0
      %1334 = vmatpush1.bf16.msra.mxu0 0
      %1335 = vmatprep.subr.bf16.mxu0 0
      %1336 = vmatpush1.bf16.msra.mxu0 0
      %1337 = vmatprep.subr.bf16.mxu0 0
      %1338 = vmatpush1.bf16.msra.mxu0 0
      %1339 = vmatprep.subr.bf16.mxu0 0
      %1340 = vmatpush1.bf16.msra.mxu0 0
      %1341 = vmatprep.subr.bf16.mxu0 0
      %1342 = vmatpush1.bf16.msra.mxu0 0
      %1343 = vmatprep.subr.bf16.mxu0 0
      %1344 = vmatpush1.bf16.msra.mxu0 0
      %1345 = vmatprep.subr.bf16.mxu0 0
      %1346 = vmatpush1.bf16.msra.mxu0 0
      %1347 = vmatprep.subr.bf16.mxu0 0
      %1348 = vmatpush1.bf16.msra.mxu0 0
      %1349 = vmatprep.subr.bf16.mxu0 0
      %1350 = vmatpush1.bf16.msra.mxu0 0
      %1351 = vmatprep.mubr.bf16.mxu0 0
      %1352 = vmatmul.mubr.bf16.gmra.mrb[0].mxu0 %v1314
      %v1353 = vpop.f32.mrb[0].mxu0
      %v1354 = vadd.f32 0.0, %v1353
      %v1355 = vpop.f32.mrb[0].mxu0
      %v1356 = vpop.f32.mrb[0].mxu0
      %v1357 = vadd.f32 0.0, %v1356
      %v1358 = vpop.f32.mrb[0].mxu0
      %1359 = vdwg.mxu0
      %v1361 = vsel %vm273, %v1113, 0
      %v1364 = vsel %vm277, %v1122, 0
      %1366 = vmatprep.subr.bf16.mxu0 0
      %1367 = vmatpush1.bf16.msra.mxu0 %v1364
      %1368 = vmatprep.subr.bf16.mxu0 0
      %1369 = vmatpush1.bf16.msra.mxu0 0
      %1370 = vmatprep.subr.bf16.mxu0 0
      %1371 = vmatpush1.bf16.msra.mxu0 0
      %1372 = vmatprep.subr.bf16.mxu0 0
      %1373 = vmatpush1.bf16.msra.mxu0 0
      %1374 = vmatprep.subr.bf16.mxu0 0
      %1375 = vmatpush1.bf16.msra.mxu0 0
      %1376 = vmatprep.subr.bf16.mxu0 0
      %1377 = vmatpush1.bf16.msra.mxu0 0
      %1378 = vmatprep.subr.bf16.mxu0 0
      %1379 = vmatpush1.bf16.msra.mxu0 0
      %1380 = vmatprep.subr.bf16.mxu0 0
      %1381 = vmatpush1.bf16.msra.mxu0 0
      %1382 = vmatprep.subr.bf16.mxu0 0
      %1383 = vmatpush1.bf16.msra.mxu0 0
      %1384 = vmatprep.subr.bf16.mxu0 0
      %1385 = vmatpush1.bf16.msra.mxu0 0
      %1386 = vmatprep.subr.bf16.mxu0 0
      %1387 = vmatpush1.bf16.msra.mxu0 0
      %1388 = vmatprep.subr.bf16.mxu0 0
      %1389 = vmatpush1.bf16.msra.mxu0 0
      %1390 = vmatprep.subr.bf16.mxu0 0
      %1391 = vmatpush1.bf16.msra.mxu0 0
      %1392 = vmatprep.subr.bf16.mxu0 0
      %1393 = vmatpush1.bf16.msra.mxu0 0
      %1394 = vmatprep.subr.bf16.mxu0 0
      %1395 = vmatpush1.bf16.msra.mxu0 0
      %1396 = vmatprep.subr.bf16.mxu0 0
      %1397 = vmatpush1.bf16.msra.mxu0 0
      %1398 = vmatprep.mubr.bf16.mxu0 0
      %1399 = vmatmul.mubr.bf16.gmra.mrb[0].mxu0 %v1361
      %v1400 = vpop.f32.mrb[0].mxu0
      %v1401 = vadd.f32 0.0, %v1400
      %v1402 = vpop.f32.mrb[0].mxu0
      %v1403 = vpop.f32.mrb[0].mxu0
      %v1404 = vadd.f32 0.0, %v1403
      %v1405 = vpop.f32.mrb[0].mxu0
      %1406 = vdwg.mxu0
      %v1408 = vsel %vm273, %v1114, 0
      %v1411 = vsel %vm277, %v1123, 0
      %1413 = vmatprep.subr.bf16.mxu0 0
      %1414 = vmatpush1.bf16.msra.mxu0 %v1411
      %1415 = vmatprep.subr.bf16.mxu0 0
      %1416 = vmatpush1.bf16.msra.mxu0 0
      %1417 = vmatprep.subr.bf16.mxu0 0
      %1418 = vmatpush1.bf16.msra.mxu0 0
      %1419 = vmatprep.subr.bf16.mxu0 0
      %1420 = vmatpush1.bf16.msra.mxu0 0
      %1421 = vmatprep.subr.bf16.mxu0 0
      %1422 = vmatpush1.bf16.msra.mxu0 0
      %1423 = vmatprep.subr.bf16.mxu0 0
      %1424 = vmatpush1.bf16.msra.mxu0 0
      %1425 = vmatprep.subr.bf16.mxu0 0
      %1426 = vmatpush1.bf16.msra.mxu0 0
      %1427 = vmatprep.subr.bf16.mxu0 0
      %1428 = vmatpush1.bf16.msra.mxu0 0
      %1429 = vmatprep.subr.bf16.mxu0 0
      %1430 = vmatpush1.bf16.msra.mxu0 0
      %1431 = vmatprep.subr.bf16.mxu0 0
      %1432 = vmatpush1.bf16.msra.mxu0 0
      %1433 = vmatprep.subr.bf16.mxu0 0
      %1434 = vmatpush1.bf16.msra.mxu0 0
      %1435 = vmatprep.subr.bf16.mxu0 0
      %1436 = vmatpush1.bf16.msra.mxu0 0
      %1437 = vmatprep.subr.bf16.mxu0 0
      %1438 = vmatpush1.bf16.msra.mxu0 0
      %1439 = vmatprep.subr.bf16.mxu0 0
      %1440 = vmatpush1.bf16.msra.mxu0 0
      %1441 = vmatprep.subr.bf16.mxu0 0
      %1442 = vmatpush1.bf16.msra.mxu0 0
      %1443 = vmatprep.subr.bf16.mxu0 0
      %1444 = vmatpush1.bf16.msra.mxu0 0
      %1445 = vmatprep.mubr.bf16.mxu0 0
      %1446 = vmatmul.mubr.bf16.gmra.mrb[0].mxu0 %v1408
      %v1447 = vpop.f32.mrb[0].mxu0
      %v1448 = vadd.f32 0.0, %v1447
      %v1449 = vpop.f32.mrb[0].mxu0
      %v1450 = vpop.f32.mrb[0].mxu0
      %v1451 = vadd.f32 0.0, %v1450
      %v1452 = vpop.f32.mrb[0].mxu0
      %1453 = vdwg.mxu0
      %v1455 = vsel %vm273, %v1115, 0
      %v1458 = vsel %vm277, %v1124, 0
      %1460 = vmatprep.subr.bf16.mxu0 0
      %1461 = vmatpush1.bf16.msra.mxu0 %v1458
      %1462 = vmatprep.subr.bf16.mxu0 0
      %1463 = vmatpush1.bf16.msra.mxu0 0
      %1464 = vmatprep.subr.bf16.mxu0 0
      %1465 = vmatpush1.bf16.msra.mxu0 0
      %1466 = vmatprep.subr.bf16.mxu0 0
      %1467 = vmatpush1.bf16.msra.mxu0 0
      %1468 = vmatprep.subr.bf16.mxu0 0
      %1469 = vmatpush1.bf16.msra.mxu0 0
      %1470 = vmatprep.subr.bf16.mxu0 0
      %1471 = vmatpush1.bf16.msra.mxu0 0
      %1472 = vmatprep.subr.bf16.mxu0 0
      %1473 = vmatpush1.bf16.msra.mxu0 0
      %1474 = vmatprep.subr.bf16.mxu0 0
      %1475 = vmatpush1.bf16.msra.mxu0 0
      %1476 = vmatprep.subr.bf16.mxu0 0
      %1477 = vmatpush1.bf16.msra.mxu0 0
      %1478 = vmatprep.subr.bf16.mxu0 0
      %1479 = vmatpush1.bf16.msra.mxu0 0
      %1480 = vmatprep.subr.bf16.mxu0 0
      %1481 = vmatpush1.bf16.msra.mxu0 0
      %1482 = vmatprep.subr.bf16.mxu0 0
      %1483 = vmatpush1.bf16.msra.mxu0 0
      %1484 = vmatprep.subr.bf16.mxu0 0
      %1485 = vmatpush1.bf16.msra.mxu0 0
      %1486 = vmatprep.subr.bf16.mxu0 0
      %1487 = vmatpush1.bf16.msra.mxu0 0
      %1488 = vmatprep.subr.bf16.mxu0 0
      %1489 = vmatpush1.bf16.msra.mxu0 0
      %1490 = vmatprep.subr.bf16.mxu0 0
      %1491 = vmatpush1.bf16.msra.mxu0 0
      %1492 = vmatprep.mubr.bf16.mxu0 0
      %1493 = vmatmul.mubr.bf16.gmra.mrb[0].mxu0 %v1455
      %v1494 = vpop.f32.mrb[0].mxu0
      %v1495 = vadd.f32 0.0, %v1494
      %v1496 = vpop.f32.mrb[0].mxu0
      %v1497 = vpop.f32.mrb[0].mxu0
      %v1498 = vadd.f32 0.0, %v1497
      %v1499 = vpop.f32.mrb[0].mxu0
      %1500 = vdwg.mxu0
      %v1501 = vadd.f32 %v1076, %v1166
      %v1502 = vadd.f32 %v1077, %v1169
      %v1503 = vadd.f32 %v1078, %v1213
      %v1504 = vadd.f32 %v1079, %v1216
      %v1505 = vadd.f32 %v1080, %v1260
      %v1506 = vadd.f32 %v1081, %v1263
      %v1507 = vadd.f32 %v1082, %v1307
      %v1508 = vadd.f32 %v1083, %v1310
      %v1509 = vadd.f32 %v1084, %v1354
      %v1510 = vadd.f32 %v1085, %v1357
      %v1511 = vadd.f32 %v1086, %v1401
      %v1512 = vadd.f32 %v1087, %v1404
      %v1513 = vadd.f32 %v1088, %v1448
      %v1514 = vadd.f32 %v1089, %v1451
      %v1515 = vadd.f32 %v1090, %v1495
      %v1516 = vadd.f32 %v1091, %v1498
      %s1517 = sadd.s32 %s222, 1
      %s1518 = smul.u32 %s1517, 24
      %s1519 = scalar_lea.vmem %s202, %s1518
      %v1520 = vld [vmem:[%s1519] sm:$0xff]
      %v1521 = vld [vmem:[%s1519 + $0x8] sm:$0xff]
      %v1522 = vld [vmem:[%s1519 + $0x18] sm:$0xff]
      %v1523 = vld [vmem:[%s1519 + $0x20] sm:$0xff]
      %v1524 = vld [vmem:[%s1519 + $0x30] sm:$0xff]
      %v1525 = vld [vmem:[%s1519 + $0x38] sm:$0xff]
      %v1526 = vld [vmem:[%s1519 + $0x48] sm:$0xff]
      %v1527 = vld [vmem:[%s1519 + $0x50] sm:$0xff]
      %v1528 = vld [vmem:[%s1519 + $0x60] sm:$0xff]
      %v1529 = vld [vmem:[%s1519 + $0x68] sm:$0xff]
      %v1530 = vld [vmem:[%s1519 + $0x78] sm:$0xff]
      %v1531 = vld [vmem:[%s1519 + $0x80] sm:$0xff]
      %v1532 = vld [vmem:[%s1519 + $0x90] sm:$0xff]
      %v1533 = vld [vmem:[%s1519 + $0x98] sm:$0xff]
      %v1534 = vld [vmem:[%s1519 + $0xa8] sm:$0xff]
      %v1535 = vld [vmem:[%s1519 + $0xb0] sm:$0xff]
      %v1536 = vpack.c.bf16 %v1521, %v1520
      %v1537 = vpack.c.bf16 %v1523, %v1522
      %v1538 = vpack.c.bf16 %v1525, %v1524
      %v1539 = vpack.c.bf16 %v1527, %v1526
      %v1540 = vpack.c.bf16 %v1529, %v1528
      %v1541 = vpack.c.bf16 %v1531, %v1530
      %v1542 = vpack.c.bf16 %v1533, %v1532
      %v1543 = vpack.c.bf16 %v1535, %v1534
      %s1544 = scalar_lea.vmem %s1, 48
      %v1545 = vld [vmem:[%s1544] sm:$0x3]
      %v1546 = vld [vmem:[%s1544 + $0x2] sm:$0x3]
      %v1547 = vld [vmem:[%s1544 + $0x4] sm:$0x3]
      %v1548 = vld [vmem:[%s1544 + $0x6] sm:$0x3]
      %v1549 = vld [vmem:[%s1544 + $0x8] sm:$0x3]
      %v1550 = vld [vmem:[%s1544 + $0xa] sm:$0x3]
      %v1551 = vld [vmem:[%s1544 + $0xc] sm:$0x3]
      %v1552 = vld [vmem:[%s1544 + $0xe] sm:$0x3]
      %v1554 = vsel %vm273, %v1536, 0
      %v1557 = vsel %vm277, %v1545, 0
      %1559 = vmatprep.subr.bf16.mxu0 0
      %1560 = vmatpush1.bf16.msra.mxu0 %v1557
      %1561 = vmatprep.subr.bf16.mxu0 0
      %1562 = vmatpush1.bf16.msra.mxu0 0
      %1563 = vmatprep.subr.bf16.mxu0 0
      %1564 = vmatpush1.bf16.msra.mxu0 0
      %1565 = vmatprep.subr.bf16.mxu0 0
      %1566 = vmatpush1.bf16.msra.mxu0 0
      %1567 = vmatprep.subr.bf16.mxu0 0
      %1568 = vmatpush1.bf16.msra.mxu0 0
      %1569 = vmatprep.subr.bf16.mxu0 0
      %1570 = vmatpush1.bf16.msra.mxu0 0
      %1571 = vmatprep.subr.bf16.mxu0 0
      %1572 = vmatpush1.bf16.msra.mxu0 0
      %1573 = vmatprep.subr.bf16.mxu0 0
      %1574 = vmatpush1.bf16.msra.mxu0 0
      %1575 = vmatprep.subr.bf16.mxu0 0
      %1576 = vmatpush1.bf16.msra.mxu0 0
      %1577 = vmatprep.subr.bf16.mxu0 0
      %1578 = vmatpush1.bf16.msra.mxu0 0
      %1579 = vmatprep.subr.bf16.mxu0 0
      %1580 = vmatpush1.bf16.msra.mxu0 0
      %1581 = vmatprep.subr.bf16.mxu0 0
      %1582 = vmatpush1.bf16.msra.mxu0 0
      %1583 = vmatprep.subr.bf16.mxu0 0
      %1584 = vmatpush1.bf16.msra.mxu0 0
      %1585 = vmatprep.subr.bf16.mxu0 0
      %1586 = vmatpush1.bf16.msra.mxu0 0
      %1587 = vmatprep.subr.bf16.mxu0 0
      %1588 = vmatpush1.bf16.msra.mxu0 0
      %1589 = vmatprep.subr.bf16.mxu0 0
      %1590 = vmatpush1.bf16.msra.mxu0 0
      %1591 = vmatprep.mubr.bf16.mxu0 0
      %1592 = vmatmul.mubr.bf16.gmra.mrb[0].mxu0 %v1554
      %v1593 = vpop.f32.mrb[0].mxu0
      %v1594 = vadd.f32 0.0, %v1593
      %v1595 = vpop.f32.mrb[0].mxu0
      %v1596 = vpop.f32.mrb[0].mxu0
      %v1597 = vadd.f32 0.0, %v1596
      %v1598 = vpop.f32.mrb[0].mxu0
      %1599 = vdwg.mxu0
      %v1601 = vsel %vm273, %v1537, 0
      %v1604 = vsel %vm277, %v1546, 0
      %1606 = vmatprep.subr.bf16.mxu0 0
      %1607 = vmatpush1.bf16.msra.mxu0 %v1604
      %1608 = vmatprep.subr.bf16.mxu0 0
      %1609 = vmatpush1.bf16.msra.mxu0 0
      %1610 = vmatprep.subr.bf16.mxu0 0
      %1611 = vmatpush1.bf16.msra.mxu0 0
      %1612 = vmatprep.subr.bf16.mxu0 0
      %1613 = vmatpush1.bf16.msra.mxu0 0
      %1614 = vmatprep.subr.bf16.mxu0 0
      %1615 = vmatpush1.bf16.msra.mxu0 0
      %1616 = vmatprep.subr.bf16.mxu0 0
      %1617 = vmatpush1.bf16.msra.mxu0 0
      %1618 = vmatprep.subr.bf16.mxu0 0
      %1619 = vmatpush1.bf16.msra.mxu0 0
      %1620 = vmatprep.subr.bf16.mxu0 0
      %1621 = vmatpush1.bf16.msra.mxu0 0
      %1622 = vmatprep.subr.bf16.mxu0 0
      %1623 = vmatpush1.bf16.msra.mxu0 0
      %1624 = vmatprep.subr.bf16.mxu0 0
      %1625 = vmatpush1.bf16.msra.mxu0 0
      %1626 = vmatprep.subr.bf16.mxu0 0
      %1627 = vmatpush1.bf16.msra.mxu0 0
      %1628 = vmatprep.subr.bf16.mxu0 0
      %1629 = vmatpush1.bf16.msra.mxu0 0
      %1630 = vmatprep.subr.bf16.mxu0 0
      %1631 = vmatpush1.bf16.msra.mxu0 0
      %1632 = vmatprep.subr.bf16.mxu0 0
      %1633 = vmatpush1.bf16.msra.mxu0 0
      %1634 = vmatprep.subr.bf16.mxu0 0
      %1635 = vmatpush1.bf16.msra.mxu0 0
      %1636 = vmatprep.subr.bf16.mxu0 0
      %1637 = vmatpush1.bf16.msra.mxu0 0
      %1638 = vmatprep.mubr.bf16.mxu0 0
      %1639 = vmatmul.mubr.bf16.gmra.mrb[0].mxu0 %v1601
      %v1640 = vpop.f32.mrb[0].mxu0
      %v1641 = vadd.f32 0.0, %v1640
      %v1642 = vpop.f32.mrb[0].mxu0
      %v1643 = vpop.f32.mrb[0].mxu0
      %v1644 = vadd.f32 0.0, %v1643
      %v1645 = vpop.f32.mrb[0].mxu0
      %1646 = vdwg.mxu0
      %v1648 = vsel %vm273, %v1538, 0
      %v1651 = vsel %vm277, %v1547, 0
      %1653 = vmatprep.subr.bf16.mxu0 0
      %1654 = vmatpush1.bf16.msra.mxu0 %v1651
      %1655 = vmatprep.subr.bf16.mxu0 0
      %1656 = vmatpush1.bf16.msra.mxu0 0
      %1657 = vmatprep.subr.bf16.mxu0 0
      %1658 = vmatpush1.bf16.msra.mxu0 0
      %1659 = vmatprep.subr.bf16.mxu0 0
      %1660 = vmatpush1.bf16.msra.mxu0 0
      %1661 = vmatprep.subr.bf16.mxu0 0
      %1662 = vmatpush1.bf16.msra.mxu0 0
      %1663 = vmatprep.subr.bf16.mxu0 0
      %1664 = vmatpush1.bf16.msra.mxu0 0
      %1665 = vmatprep.subr.bf16.mxu0 0
      %1666 = vmatpush1.bf16.msra.mxu0 0
      %1667 = vmatprep.subr.bf16.mxu0 0
      %1668 = vmatpush1.bf16.msra.mxu0 0
      %1669 = vmatprep.subr.bf16.mxu0 0
      %1670 = vmatpush1.bf16.msra.mxu0 0
      %1671 = vmatprep.subr.bf16.mxu0 0
      %1672 = vmatpush1.bf16.msra.mxu0 0
      %1673 = vmatprep.subr.bf16.mxu0 0
      %1674 = vmatpush1.bf16.msra.mxu0 0
      %1675 = vmatprep.subr.bf16.mxu0 0
      %1676 = vmatpush1.bf16.msra.mxu0 0
      %1677 = vmatprep.subr.bf16.mxu0 0
      %1678 = vmatpush1.bf16.msra.mxu0 0
      %1679 = vmatprep.subr.bf16.mxu0 0
      %1680 = vmatpush1.bf16.msra.mxu0 0
      %1681 = vmatprep.subr.bf16.mxu0 0
      %1682 = vmatpush1.bf16.msra.mxu0 0
      %1683 = vmatprep.subr.bf16.mxu0 0
      %1684 = vmatpush1.bf16.msra.mxu0 0
      %1685 = vmatprep.mubr.bf16.mxu0 0
      %1686 = vmatmul.mubr.bf16.gmra.mrb[0].mxu0 %v1648
      %v1687 = vpop.f32.mrb[0].mxu0
      %v1688 = vadd.f32 0.0, %v1687
      %v1689 = vpop.f32.mrb[0].mxu0
      %v1690 = vpop.f32.mrb[0].mxu0
      %v1691 = vadd.f32 0.0, %v1690
      %v1692 = vpop.f32.mrb[0].mxu0
      %1693 = vdwg.mxu0
      %v1695 = vsel %vm273, %v1539, 0
      %v1698 = vsel %vm277, %v1548, 0
      %1700 = vmatprep.subr.bf16.mxu0 0
      %1701 = vmatpush1.bf16.msra.mxu0 %v1698
      %1702 = vmatprep.subr.bf16.mxu0 0
      %1703 = vmatpush1.bf16.msra.mxu0 0
      %1704 = vmatprep.subr.bf16.mxu0 0
      %1705 = vmatpush1.bf16.msra.mxu0 0
      %1706 = vmatprep.subr.bf16.mxu0 0
      %1707 = vmatpush1.bf16.msra.mxu0 0
      %1708 = vmatprep.subr.bf16.mxu0 0
      %1709 = vmatpush1.bf16.msra.mxu0 0
      %1710 = vmatprep.subr.bf16.mxu0 0
      %1711 = vmatpush1.bf16.msra.mxu0 0
      %1712 = vmatprep.subr.bf16.mxu0 0
      %1713 = vmatpush1.bf16.msra.mxu0 0
      %1714 = vmatprep.subr.bf16.mxu0 0
      %1715 = vmatpush1.bf16.msra.mxu0 0
      %1716 = vmatprep.subr.bf16.mxu0 0
      %1717 = vmatpush1.bf16.msra.mxu0 0
      %1718 = vmatprep.subr.bf16.mxu0 0
      %1719 = vmatpush1.bf16.msra.mxu0 0
      %1720 = vmatprep.subr.bf16.mxu0 0
      %1721 = vmatpush1.bf16.msra.mxu0 0
      %1722 = vmatprep.subr.bf16.mxu0 0
      %1723 = vmatpush1.bf16.msra.mxu0 0
      %1724 = vmatprep.subr.bf16.mxu0 0
      %1725 = vmatpush1.bf16.msra.mxu0 0
      %1726 = vmatprep.subr.bf16.mxu0 0
      %1727 = vmatpush1.bf16.msra.mxu0 0
      %1728 = vmatprep.subr.bf16.mxu0 0
      %1729 = vmatpush1.bf16.msra.mxu0 0
      %1730 = vmatprep.subr.bf16.mxu0 0
      %1731 = vmatpush1.bf16.msra.mxu0 0
      %1732 = vmatprep.mubr.bf16.mxu0 0
      %1733 = vmatmul.mubr.bf16.gmra.mrb[0].mxu0 %v1695
      %v1734 = vpop.f32.mrb[0].mxu0
      %v1735 = vadd.f32 0.0, %v1734
      %v1736 = vpop.f32.mrb[0].mxu0
      %v1737 = vpop.f32.mrb[0].mxu0
      %v1738 = vadd.f32 0.0, %v1737
      %v1739 = vpop.f32.mrb[0].mxu0
      %1740 = vdwg.mxu0
      %v1742 = vsel %vm273, %v1540, 0
      %v1745 = vsel %vm277, %v1549, 0
      %1747 = vmatprep.subr.bf16.mxu0 0
      %1748 = vmatpush1.bf16.msra.mxu0 %v1745
      %1749 = vmatprep.subr.bf16.mxu0 0
      %1750 = vmatpush1.bf16.msra.mxu0 0
      %1751 = vmatprep.subr.bf16.mxu0 0
      %1752 = vmatpush1.bf16.msra.mxu0 0
      %1753 = vmatprep.subr.bf16.mxu0 0
      %1754 = vmatpush1.bf16.msra.mxu0 0
      %1755 = vmatprep.subr.bf16.mxu0 0
      %1756 = vmatpush1.bf16.msra.mxu0 0
      %1757 = vmatprep.subr.bf16.mxu0 0
      %1758 = vmatpush1.bf16.msra.mxu0 0
      %1759 = vmatprep.subr.bf16.mxu0 0
      %1760 = vmatpush1.bf16.msra.mxu0 0
      %1761 = vmatprep.subr.bf16.mxu0 0
      %1762 = vmatpush1.bf16.msra.mxu0 0
      %1763 = vmatprep.subr.bf16.mxu0 0
      %1764 = vmatpush1.bf16.msra.mxu0 0
      %1765 = vmatprep.subr.bf16.mxu0 0
      %1766 = vmatpush1.bf16.msra.mxu0 0
      %1767 = vmatprep.subr.bf16.mxu0 0
      %1768 = vmatpush1.bf16.msra.mxu0 0
      %1769 = vmatprep.subr.bf16.mxu0 0
      %1770 = vmatpush1.bf16.msra.mxu0 0
      %1771 = vmatprep.subr.bf16.mxu0 0
      %1772 = vmatpush1.bf16.msra.mxu0 0
      %1773 = vmatprep.subr.bf16.mxu0 0
      %1774 = vmatpush1.bf16.msra.mxu0 0
      %1775 = vmatprep.subr.bf16.mxu0 0
      %1776 = vmatpush1.bf16.msra.mxu0 0
      %1777 = vmatprep.subr.bf16.mxu0 0
      %1778 = vmatpush1.bf16.msra.mxu0 0
      %1779 = vmatprep.mubr.bf16.mxu0 0
      %1780 = vmatmul.mubr.bf16.gmra.mrb[0].mxu0 %v1742
      %v1781 = vpop.f32.mrb[0].mxu0
      %v1782 = vadd.f32 0.0, %v1781
      %v1783 = vpop.f32.mrb[0].mxu0
      %v1784 = vpop.f32.mrb[0].mxu0
      %v1785 = vadd.f32 0.0, %v1784
      %v1786 = vpop.f32.mrb[0].mxu0
      %1787 = vdwg.mxu0
      %v1789 = vsel %vm273, %v1541, 0
      %v1792 = vsel %vm277, %v1550, 0
      %1794 = vmatprep.subr.bf16.mxu0 0
      %1795 = vmatpush1.bf16.msra.mxu0 %v1792
      %1796 = vmatprep.subr.bf16.mxu0 0
      %1797 = vmatpush1.bf16.msra.mxu0 0
      %1798 = vmatprep.subr.bf16.mxu0 0
      %1799 = vmatpush1.bf16.msra.mxu0 0
      %1800 = vmatprep.subr.bf16.mxu0 0
      %1801 = vmatpush1.bf16.msra.mxu0 0
      %1802 = vmatprep.subr.bf16.mxu0 0
      %1803 = vmatpush1.bf16.msra.mxu0 0
      %1804 = vmatprep.subr.bf16.mxu0 0
      %1805 = vmatpush1.bf16.msra.mxu0 0
      %1806 = vmatprep.subr.bf16.mxu0 0
      %1807 = vmatpush1.bf16.msra.mxu0 0
      %1808 = vmatprep.subr.bf16.mxu0 0
      %1809 = vmatpush1.bf16.msra.mxu0 0
      %1810 = vmatprep.subr.bf16.mxu0 0
      %1811 = vmatpush1.bf16.msra.mxu0 0
      %1812 = vmatprep.subr.bf16.mxu0 0
      %1813 = vmatpush1.bf16.msra.mxu0 0
      %1814 = vmatprep.subr.bf16.mxu0 0
      %1815 = vmatpush1.bf16.msra.mxu0 0
      %1816 = vmatprep.subr.bf16.mxu0 0
      %1817 = vmatpush1.bf16.msra.mxu0 0
      %1818 = vmatprep.subr.bf16.mxu0 0
      %1819 = vmatpush1.bf16.msra.mxu0 0
      %1820 = vmatprep.subr.bf16.mxu0 0
      %1821 = vmatpush1.bf16.msra.mxu0 0
      %1822 = vmatprep.subr.bf16.mxu0 0
      %1823 = vmatpush1.bf16.msra.mxu0 0
      %1824 = vmatprep.subr.bf16.mxu0 0
      %1825 = vmatpush1.bf16.msra.mxu0 0
      %1826 = vmatprep.mubr.bf16.mxu0 0
      %1827 = vmatmul.mubr.bf16.gmra.mrb[0].mxu0 %v1789
      %v1828 = vpop.f32.mrb[0].mxu0
      %v1829 = vadd.f32 0.0, %v1828
      %v1830 = vpop.f32.mrb[0].mxu0
      %v1831 = vpop.f32.mrb[0].mxu0
      %v1832 = vadd.f32 0.0, %v1831
      %v1833 = vpop.f32.mrb[0].mxu0
      %1834 = vdwg.mxu0
      %v1836 = vsel %vm273, %v1542, 0
      %v1839 = vsel %vm277, %v1551, 0
      %1841 = vmatprep.subr.bf16.mxu0 0
      %1842 = vmatpush1.bf16.msra.mxu0 %v1839
      %1843 = vmatprep.subr.bf16.mxu0 0
      %1844 = vmatpush1.bf16.msra.mxu0 0
      %1845 = vmatprep.subr.bf16.mxu0 0
      %1846 = vmatpush1.bf16.msra.mxu0 0
      %1847 = vmatprep.subr.bf16.mxu0 0
      %1848 = vmatpush1.bf16.msra.mxu0 0
      %1849 = vmatprep.subr.bf16.mxu0 0
      %1850 = vmatpush1.bf16.msra.mxu0 0
      %1851 = vmatprep.subr.bf16.mxu0 0
      %1852 = vmatpush1.bf16.msra.mxu0 0
      %1853 = vmatprep.subr.bf16.mxu0 0
      %1854 = vmatpush1.bf16.msra.mxu0 0
      %1855 = vmatprep.subr.bf16.mxu0 0
      %1856 = vmatpush1.bf16.msra.mxu0 0
      %1857 = vmatprep.subr.bf16.mxu0 0
      %1858 = vmatpush1.bf16.msra.mxu0 0
      %1859 = vmatprep.subr.bf16.mxu0 0
      %1860 = vmatpush1.bf16.msra.mxu0 0
      %1861 = vmatprep.subr.bf16.mxu0 0
      %1862 = vmatpush1.bf16.msra.mxu0 0
      %1863 = vmatprep.subr.bf16.mxu0 0
      %1864 = vmatpush1.bf16.msra.mxu0 0
      %1865 = vmatprep.subr.bf16.mxu0 0
      %1866 = vmatpush1.bf16.msra.mxu0 0
      %1867 = vmatprep.subr.bf16.mxu0 0
      %1868 = vmatpush1.bf16.msra.mxu0 0
      %1869 = vmatprep.subr.bf16.mxu0 0
      %1870 = vmatpush1.bf16.msra.mxu0 0
      %1871 = vmatprep.subr.bf16.mxu0 0
      %1872 = vmatpush1.bf16.msra.mxu0 0
      %1873 = vmatprep.mubr.bf16.mxu0 0
      %1874 = vmatmul.mubr.bf16.gmra.mrb[0].mxu0 %v1836
      %v1875 = vpop.f32.mrb[0].mxu0
      %v1876 = vadd.f32 0.0, %v1875
      %v1877 = vpop.f32.mrb[0].mxu0
      %v1878 = vpop.f32.mrb[0].mxu0
      %v1879 = vadd.f32 0.0, %v1878
      %v1880 = vpop.f32.mrb[0].mxu0
      %1881 = vdwg.mxu0
      %v1883 = vsel %vm273, %v1543, 0
      %v1886 = vsel %vm277, %v1552, 0
      %1888 = vmatprep.subr.bf16.mxu0 0
      %1889 = vmatpush1.bf16.msra.mxu0 %v1886
      %1890 = vmatprep.subr.bf16.mxu0 0
      %1891 = vmatpush1.bf16.msra.mxu0 0
      %1892 = vmatprep.subr.bf16.mxu0 0
      %1893 = vmatpush1.bf16.msra.mxu0 0
      %1894 = vmatprep.subr.bf16.mxu0 0
      %1895 = vmatpush1.bf16.msra.mxu0 0
      %1896 = vmatprep.subr.bf16.mxu0 0
      %1897 = vmatpush1.bf16.msra.mxu0 0
      %1898 = vmatprep.subr.bf16.mxu0 0
      %1899 = vmatpush1.bf16.msra.mxu0 0
      %1900 = vmatprep.subr.bf16.mxu0 0
      %1901 = vmatpush1.bf16.msra.mxu0 0
      %1902 = vmatprep.subr.bf16.mxu0 0
      %1903 = vmatpush1.bf16.msra.mxu0 0
      %1904 = vmatprep.subr.bf16.mxu0 0
      %1905 = vmatpush1.bf16.msra.mxu0 0
      %1906 = vmatprep.subr.bf16.mxu0 0
      %1907 = vmatpush1.bf16.msra.mxu0 0
      %1908 = vmatprep.subr.bf16.mxu0 0
      %1909 = vmatpush1.bf16.msra.mxu0 0
      %1910 = vmatprep.subr.bf16.mxu0 0
      %1911 = vmatpush1.bf16.msra.mxu0 0
      %1912 = vmatprep.subr.bf16.mxu0 0
      %1913 = vmatpush1.bf16.msra.mxu0 0
      %1914 = vmatprep.subr.bf16.mxu0 0
      %1915 = vmatpush1.bf16.msra.mxu0 0
      %1916 = vmatprep.subr.bf16.mxu0 0
      %1917 = vmatpush1.bf16.msra.mxu0 0
      %1918 = vmatprep.subr.bf16.mxu0 0
      %1919 = vmatpush1.bf16.msra.mxu0 0
      %1920 = vmatprep.mubr.bf16.mxu0 0
      %1921 = vmatmul.mubr.bf16.gmra.mrb[0].mxu0 %v1883
      %v1922 = vpop.f32.mrb[0].mxu0
      %v1923 = vadd.f32 0.0, %v1922
      %v1924 = vpop.f32.mrb[0].mxu0
      %v1925 = vpop.f32.mrb[0].mxu0
      %v1926 = vadd.f32 0.0, %v1925
      %v1927 = vpop.f32.mrb[0].mxu0
      %1928 = vdwg.mxu0
      %v1929 = vadd.f32 %v1501, %v1594
      %v1930 = vadd.f32 %v1502, %v1597
      %v1931 = vadd.f32 %v1503, %v1641
      %v1932 = vadd.f32 %v1504, %v1644
      %v1933 = vadd.f32 %v1505, %v1688
      %v1934 = vadd.f32 %v1506, %v1691
      %v1935 = vadd.f32 %v1507, %v1735
      %v1936 = vadd.f32 %v1508, %v1738
      %v1937 = vadd.f32 %v1509, %v1782
      %v1938 = vadd.f32 %v1510, %v1785
      %v1939 = vadd.f32 %v1511, %v1829
      %v1940 = vadd.f32 %v1512, %v1832
      %v1941 = vadd.f32 %v1513, %v1876
      %v1942 = vadd.f32 %v1514, %v1879
      %v1943 = vadd.f32 %v1515, %v1923
      %v1944 = vadd.f32 %v1516, %v1926
      %v1945 = vld [vmem:[%s1519 + $0x1] sm:$0xff]
      %v1946 = vld [vmem:[%s1519 + $0x9] sm:$0xff]
      %v1947 = vld [vmem:[%s1519 + $0x19] sm:$0xff]
      %v1948 = vld [vmem:[%s1519 + $0x21] sm:$0xff]
      %v1949 = vld [vmem:[%s1519 + $0x31] sm:$0xff]
      %v1950 = vld [vmem:[%s1519 + $0x39] sm:$0xff]
      %v1951 = vld [vmem:[%s1519 + $0x49] sm:$0xff]
      %v1952 = vld [vmem:[%s1519 + $0x51] sm:$0xff]
      %v1953 = vld [vmem:[%s1519 + $0x61] sm:$0xff]
      %v1954 = vld [vmem:[%s1519 + $0x69] sm:$0xff]
      %v1955 = vld [vmem:[%s1519 + $0x79] sm:$0xff]
      %v1956 = vld [vmem:[%s1519 + $0x81] sm:$0xff]
      %v1957 = vld [vmem:[%s1519 + $0x91] sm:$0xff]
      %v1958 = vld [vmem:[%s1519 + $0x99] sm:$0xff]
      %v1959 = vld [vmem:[%s1519 + $0xa9] sm:$0xff]
      %v1960 = vld [vmem:[%s1519 + $0xb1] sm:$0xff]
      %v1961 = vpack.c.bf16 %v1946, %v1945
      %v1962 = vpack.c.bf16 %v1948, %v1947
      %v1963 = vpack.c.bf16 %v1950, %v1949
      %v1964 = vpack.c.bf16 %v1952, %v1951
      %v1965 = vpack.c.bf16 %v1954, %v1953
      %v1966 = vpack.c.bf16 %v1956, %v1955
      %v1967 = vpack.c.bf16 %v1958, %v1957
      %v1968 = vpack.c.bf16 %v1960, %v1959
      %s1969 = scalar_lea.vmem %s1, 64
      %v1970 = vld [vmem:[%s1969] sm:$0x3]
      %v1971 = vld [vmem:[%s1969 + $0x2] sm:$0x3]
      %v1972 = vld [vmem:[%s1969 + $0x4] sm:$0x3]
      %v1973 = vld [vmem:[%s1969 + $0x6] sm:$0x3]
      %v1974 = vld [vmem:[%s1969 + $0x8] sm:$0x3]
      %v1975 = vld [vmem:[%s1969 + $0xa] sm:$0x3]
      %v1976 = vld [vmem:[%s1969 + $0xc] sm:$0x3]
      %v1977 = vld [vmem:[%s1969 + $0xe] sm:$0x3]
      %v1979 = vsel %vm273, %v1961, 0
      %v1982 = vsel %vm277, %v1970, 0
      %1984 = vmatprep.subr.bf16.mxu0 0
      %1985 = vmatpush1.bf16.msra.mxu0 %v1982
      %1986 = vmatprep.subr.bf16.mxu0 0
      %1987 = vmatpush1.bf16.msra.mxu0 0
      %1988 = vmatprep.subr.bf16.mxu0 0
      %1989 = vmatpush1.bf16.msra.mxu0 0
      %1990 = vmatprep.subr.bf16.mxu0 0
      %1991 = vmatpush1.bf16.msra.mxu0 0
      %1992 = vmatprep.subr.bf16.mxu0 0
      %1993 = vmatpush1.bf16.msra.mxu0 0
      %1994 = vmatprep.subr.bf16.mxu0 0
      %1995 = vmatpush1.bf16.msra.mxu0 0
      %1996 = vmatprep.subr.bf16.mxu0 0
      %1997 = vmatpush1.bf16.msra.mxu0 0
      %1998 = vmatprep.subr.bf16.mxu0 0
      %1999 = vmatpush1.bf16.msra.mxu0 0
      %2000 = vmatprep.subr.bf16.mxu0 0
      %2001 = vmatpush1.bf16.msra.mxu0 0
      %2002 = vmatprep.subr.bf16.mxu0 0
      %2003 = vmatpush1.bf16.msra.mxu0 0
      %2004 = vmatprep.subr.bf16.mxu0 0
      %2005 = vmatpush1.bf16.msra.mxu0 0
      %2006 = vmatprep.subr.bf16.mxu0 0
      %2007 = vmatpush1.bf16.msra.mxu0 0
      %2008 = vmatprep.subr.bf16.mxu0 0
      %2009 = vmatpush1.bf16.msra.mxu0 0
      %2010 = vmatprep.subr.bf16.mxu0 0
      %2011 = vmatpush1.bf16.msra.mxu0 0
      %2012 = vmatprep.subr.bf16.mxu0 0
      %2013 = vmatpush1.bf16.msra.mxu0 0
      %2014 = vmatprep.subr.bf16.mxu0 0
      %2015 = vmatpush1.bf16.msra.mxu0 0
      %2016 = vmatprep.mubr.bf16.mxu0 0
      %2017 = vmatmul.mubr.bf16.gmra.mrb[0].mxu0 %v1979
      %v2018 = vpop.f32.mrb[0].mxu0
      %v2019 = vadd.f32 0.0, %v2018
      %v2020 = vpop.f32.mrb[0].mxu0
      %v2021 = vpop.f32.mrb[0].mxu0
      %v2022 = vadd.f32 0.0, %v2021
      %v2023 = vpop.f32.mrb[0].mxu0
      %2024 = vdwg.mxu0
      %v2026 = vsel %vm273, %v1962, 0
      %v2029 = vsel %vm277, %v1971, 0
      %2031 = vmatprep.subr.bf16.mxu0 0
      %2032 = vmatpush1.bf16.msra.mxu0 %v2029
      %2033 = vmatprep.subr.bf16.mxu0 0
      %2034 = vmatpush1.bf16.msra.mxu0 0
      %2035 = vmatprep.subr.bf16.mxu0 0
      %2036 = vmatpush1.bf16.msra.mxu0 0
      %2037 = vmatprep.subr.bf16.mxu0 0
      %2038 = vmatpush1.bf16.msra.mxu0 0
      %2039 = vmatprep.subr.bf16.mxu0 0
      %2040 = vmatpush1.bf16.msra.mxu0 0
      %2041 = vmatprep.subr.bf16.mxu0 0
      %2042 = vmatpush1.bf16.msra.mxu0 0
      %2043 = vmatprep.subr.bf16.mxu0 0
      %2044 = vmatpush1.bf16.msra.mxu0 0
      %2045 = vmatprep.subr.bf16.mxu0 0
      %2046 = vmatpush1.bf16.msra.mxu0 0
      %2047 = vmatprep.subr.bf16.mxu0 0
      %2048 = vmatpush1.bf16.msra.mxu0 0
      %2049 = vmatprep.subr.bf16.mxu0 0
      %2050 = vmatpush1.bf16.msra.mxu0 0
      %2051 = vmatprep.subr.bf16.mxu0 0
      %2052 = vmatpush1.bf16.msra.mxu0 0
      %2053 = vmatprep.subr.bf16.mxu0 0
      %2054 = vmatpush1.bf16.msra.mxu0 0
      %2055 = vmatprep.subr.bf16.mxu0 0
      %2056 = vmatpush1.bf16.msra.mxu0 0
      %2057 = vmatprep.subr.bf16.mxu0 0
      %2058 = vmatpush1.bf16.msra.mxu0 0
      %2059 = vmatprep.subr.bf16.mxu0 0
      %2060 = vmatpush1.bf16.msra.mxu0 0
      %2061 = vmatprep.subr.bf16.mxu0 0
      %2062 = vmatpush1.bf16.msra.mxu0 0
      %2063 = vmatprep.mubr.bf16.mxu0 0
      %2064 = vmatmul.mubr.bf16.gmra.mrb[0].mxu0 %v2026
      %v2065 = vpop.f32.mrb[0].mxu0
      %v2066 = vadd.f32 0.0, %v2065
      %v2067 = vpop.f32.mrb[0].mxu0
      %v2068 = vpop.f32.mrb[0].mxu0
      %v2069 = vadd.f32 0.0, %v2068
      %v2070 = vpop.f32.mrb[0].mxu0
      %2071 = vdwg.mxu0
      %v2073 = vsel %vm273, %v1963, 0
      %v2076 = vsel %vm277, %v1972, 0
      %2078 = vmatprep.subr.bf16.mxu0 0
      %2079 = vmatpush1.bf16.msra.mxu0 %v2076
      %2080 = vmatprep.subr.bf16.mxu0 0
      %2081 = vmatpush1.bf16.msra.mxu0 0
      %2082 = vmatprep.subr.bf16.mxu0 0
      %2083 = vmatpush1.bf16.msra.mxu0 0
      %2084 = vmatprep.subr.bf16.mxu0 0
      %2085 = vmatpush1.bf16.msra.mxu0 0
      %2086 = vmatprep.subr.bf16.mxu0 0
      %2087 = vmatpush1.bf16.msra.mxu0 0
      %2088 = vmatprep.subr.bf16.mxu0 0
      %2089 = vmatpush1.bf16.msra.mxu0 0
      %2090 = vmatprep.subr.bf16.mxu0 0
      %2091 = vmatpush1.bf16.msra.mxu0 0
      %2092 = vmatprep.subr.bf16.mxu0 0
      %2093 = vmatpush1.bf16.msra.mxu0 0
      %2094 = vmatprep.subr.bf16.mxu0 0
      %2095 = vmatpush1.bf16.msra.mxu0 0
      %2096 = vmatprep.subr.bf16.mxu0 0
      %2097 = vmatpush1.bf16.msra.mxu0 0
      %2098 = vmatprep.subr.bf16.mxu0 0
      %2099 = vmatpush1.bf16.msra.mxu0 0
      %2100 = vmatprep.subr.bf16.mxu0 0
      %2101 = vmatpush1.bf16.msra.mxu0 0
      %2102 = vmatprep.subr.bf16.mxu0 0
      %2103 = vmatpush1.bf16.msra.mxu0 0
      %2104 = vmatprep.subr.bf16.mxu0 0
      %2105 = vmatpush1.bf16.msra.mxu0 0
      %2106 = vmatprep.subr.bf16.mxu0 0
      %2107 = vmatpush1.bf16.msra.mxu0 0
      %2108 = vmatprep.subr.bf16.mxu0 0
      %2109 = vmatpush1.bf16.msra.mxu0 0
      %2110 = vmatprep.mubr.bf16.mxu0 0
      %2111 = vmatmul.mubr.bf16.gmra.mrb[0].mxu0 %v2073
      %v2112 = vpop.f32.mrb[0].mxu0
      %v2113 = vadd.f32 0.0, %v2112
      %v2114 = vpop.f32.mrb[0].mxu0
      %v2115 = vpop.f32.mrb[0].mxu0
      %v2116 = vadd.f32 0.0, %v2115
      %v2117 = vpop.f32.mrb[0].mxu0
      %2118 = vdwg.mxu0
      %v2120 = vsel %vm273, %v1964, 0
      %v2123 = vsel %vm277, %v1973, 0
      %2125 = vmatprep.subr.bf16.mxu0 0
      %2126 = vmatpush1.bf16.msra.mxu0 %v2123
      %2127 = vmatprep.subr.bf16.mxu0 0
      %2128 = vmatpush1.bf16.msra.mxu0 0
      %2129 = vmatprep.subr.bf16.mxu0 0
      %2130 = vmatpush1.bf16.msra.mxu0 0
      %2131 = vmatprep.subr.bf16.mxu0 0
      %2132 = vmatpush1.bf16.msra.mxu0 0
      %2133 = vmatprep.subr.bf16.mxu0 0
      %2134 = vmatpush1.bf16.msra.mxu0 0
      %2135 = vmatprep.subr.bf16.mxu0 0
      %2136 = vmatpush1.bf16.msra.mxu0 0
      %2137 = vmatprep.subr.bf16.mxu0 0
      %2138 = vmatpush1.bf16.msra.mxu0 0
      %2139 = vmatprep.subr.bf16.mxu0 0
      %2140 = vmatpush1.bf16.msra.mxu0 0
      %2141 = vmatprep.subr.bf16.mxu0 0
      %2142 = vmatpush1.bf16.msra.mxu0 0
      %2143 = vmatprep.subr.bf16.mxu0 0
      %2144 = vmatpush1.bf16.msra.mxu0 0
      %2145 = vmatprep.subr.bf16.mxu0 0
      %2146 = vmatpush1.bf16.msra.mxu0 0
      %2147 = vmatprep.subr.bf16.mxu0 0
      %2148 = vmatpush1.bf16.msra.mxu0 0
      %2149 = vmatprep.subr.bf16.mxu0 0
      %2150 = vmatpush1.bf16.msra.mxu0 0
      %2151 = vmatprep.subr.bf16.mxu0 0
      %2152 = vmatpush1.bf16.msra.mxu0 0
      %2153 = vmatprep.subr.bf16.mxu0 0
      %2154 = vmatpush1.bf16.msra.mxu0 0
      %2155 = vmatprep.subr.bf16.mxu0 0
      %2156 = vmatpush1.bf16.msra.mxu0 0
      %2157 = vmatprep.mubr.bf16.mxu0 0
      %2158 = vmatmul.mubr.bf16.gmra.mrb[0].mxu0 %v2120
      %v2159 = vpop.f32.mrb[0].mxu0
      %v2160 = vadd.f32 0.0, %v2159
      %v2161 = vpop.f32.mrb[0].mxu0
      %v2162 = vpop.f32.mrb[0].mxu0
      %v2163 = vadd.f32 0.0, %v2162
      %v2164 = vpop.f32.mrb[0].mxu0
      %2165 = vdwg.mxu0
      %v2167 = vsel %vm273, %v1965, 0
      %v2170 = vsel %vm277, %v1974, 0
      %2172 = vmatprep.subr.bf16.mxu0 0
      %2173 = vmatpush1.bf16.msra.mxu0 %v2170
      %2174 = vmatprep.subr.bf16.mxu0 0
      %2175 = vmatpush1.bf16.msra.mxu0 0
      %2176 = vmatprep.subr.bf16.mxu0 0
      %2177 = vmatpush1.bf16.msra.mxu0 0
      %2178 = vmatprep.subr.bf16.mxu0 0
      %2179 = vmatpush1.bf16.msra.mxu0 0
      %2180 = vmatprep.subr.bf16.mxu0 0
      %2181 = vmatpush1.bf16.msra.mxu0 0
      %2182 = vmatprep.subr.bf16.mxu0 0
      %2183 = vmatpush1.bf16.msra.mxu0 0
      %2184 = vmatprep.subr.bf16.mxu0 0
      %2185 = vmatpush1.bf16.msra.mxu0 0
      %2186 = vmatprep.subr.bf16.mxu0 0
      %2187 = vmatpush1.bf16.msra.mxu0 0
      %2188 = vmatprep.subr.bf16.mxu0 0
      %2189 = vmatpush1.bf16.msra.mxu0 0
      %2190 = vmatprep.subr.bf16.mxu0 0
      %2191 = vmatpush1.bf16.msra.mxu0 0
      %2192 = vmatprep.subr.bf16.mxu0 0
      %2193 = vmatpush1.bf16.msra.mxu0 0
      %2194 = vmatprep.subr.bf16.mxu0 0
      %2195 = vmatpush1.bf16.msra.mxu0 0
      %2196 = vmatprep.subr.bf16.mxu0 0
      %2197 = vmatpush1.bf16.msra.mxu0 0
      %2198 = vmatprep.subr.bf16.mxu0 0
      %2199 = vmatpush1.bf16.msra.mxu0 0
      %2200 = vmatprep.subr.bf16.mxu0 0
      %2201 = vmatpush1.bf16.msra.mxu0 0
      %2202 = vmatprep.subr.bf16.mxu0 0
      %2203 = vmatpush1.bf16.msra.mxu0 0
      %2204 = vmatprep.mubr.bf16.mxu0 0
      %2205 = vmatmul.mubr.bf16.gmra.mrb[0].mxu0 %v2167
      %v2206 = vpop.f32.mrb[0].mxu0
      %v2207 = vadd.f32 0.0, %v2206
      %v2208 = vpop.f32.mrb[0].mxu0
      %v2209 = vpop.f32.mrb[0].mxu0
      %v2210 = vadd.f32 0.0, %v2209
      %v2211 = vpop.f32.mrb[0].mxu0
      %2212 = vdwg.mxu0
      %v2214 = vsel %vm273, %v1966, 0
      %v2217 = vsel %vm277, %v1975, 0
      %2219 = vmatprep.subr.bf16.mxu0 0
      %2220 = vmatpush1.bf16.msra.mxu0 %v2217
      %2221 = vmatprep.subr.bf16.mxu0 0
      %2222 = vmatpush1.bf16.msra.mxu0 0
      %2223 = vmatprep.subr.bf16.mxu0 0
      %2224 = vmatpush1.bf16.msra.mxu0 0
      %2225 = vmatprep.subr.bf16.mxu0 0
      %2226 = vmatpush1.bf16.msra.mxu0 0
      %2227 = vmatprep.subr.bf16.mxu0 0
      %2228 = vmatpush1.bf16.msra.mxu0 0
      %2229 = vmatprep.subr.bf16.mxu0 0
      %2230 = vmatpush1.bf16.msra.mxu0 0
      %2231 = vmatprep.subr.bf16.mxu0 0
      %2232 = vmatpush1.bf16.msra.mxu0 0
      %2233 = vmatprep.subr.bf16.mxu0 0
      %2234 = vmatpush1.bf16.msra.mxu0 0
      %2235 = vmatprep.subr.bf16.mxu0 0
      %2236 = vmatpush1.bf16.msra.mxu0 0
      %2237 = vmatprep.subr.bf16.mxu0 0
      %2238 = vmatpush1.bf16.msra.mxu0 0
      %2239 = vmatprep.subr.bf16.mxu0 0
      %2240 = vmatpush1.bf16.msra.mxu0 0
      %2241 = vmatprep.subr.bf16.mxu0 0
      %2242 = vmatpush1.bf16.msra.mxu0 0
      %2243 = vmatprep.subr.bf16.mxu0 0
      %2244 = vmatpush1.bf16.msra.mxu0 0
      %2245 = vmatprep.subr.bf16.mxu0 0
      %2246 = vmatpush1.bf16.msra.mxu0 0
      %2247 = vmatprep.subr.bf16.mxu0 0
      %2248 = vmatpush1.bf16.msra.mxu0 0
      %2249 = vmatprep.subr.bf16.mxu0 0
      %2250 = vmatpush1.bf16.msra.mxu0 0
      %2251 = vmatprep.mubr.bf16.mxu0 0
      %2252 = vmatmul.mubr.bf16.gmra.mrb[0].mxu0 %v2214
      %v2253 = vpop.f32.mrb[0].mxu0
      %v2254 = vadd.f32 0.0, %v2253
      %v2255 = vpop.f32.mrb[0].mxu0
      %v2256 = vpop.f32.mrb[0].mxu0
      %v2257 = vadd.f32 0.0, %v2256
      %v2258 = vpop.f32.mrb[0].mxu0
      %2259 = vdwg.mxu0
      %v2261 = vsel %vm273, %v1967, 0
      %v2264 = vsel %vm277, %v1976, 0
      %2266 = vmatprep.subr.bf16.mxu0 0
      %2267 = vmatpush1.bf16.msra.mxu0 %v2264
      %2268 = vmatprep.subr.bf16.mxu0 0
      %2269 = vmatpush1.bf16.msra.mxu0 0
      %2270 = vmatprep.subr.bf16.mxu0 0
      %2271 = vmatpush1.bf16.msra.mxu0 0
      %2272 = vmatprep.subr.bf16.mxu0 0
      %2273 = vmatpush1.bf16.msra.mxu0 0
      %2274 = vmatprep.subr.bf16.mxu0 0
      %2275 = vmatpush1.bf16.msra.mxu0 0
      %2276 = vmatprep.subr.bf16.mxu0 0
      %2277 = vmatpush1.bf16.msra.mxu0 0
      %2278 = vmatprep.subr.bf16.mxu0 0
      %2279 = vmatpush1.bf16.msra.mxu0 0
      %2280 = vmatprep.subr.bf16.mxu0 0
      %2281 = vmatpush1.bf16.msra.mxu0 0
      %2282 = vmatprep.subr.bf16.mxu0 0
      %2283 = vmatpush1.bf16.msra.mxu0 0
      %2284 = vmatprep.subr.bf16.mxu0 0
      %2285 = vmatpush1.bf16.msra.mxu0 0
      %2286 = vmatprep.subr.bf16.mxu0 0
      %2287 = vmatpush1.bf16.msra.mxu0 0
      %2288 = vmatprep.subr.bf16.mxu0 0
      %2289 = vmatpush1.bf16.msra.mxu0 0
      %2290 = vmatprep.subr.bf16.mxu0 0
      %2291 = vmatpush1.bf16.msra.mxu0 0
      %2292 = vmatprep.subr.bf16.mxu0 0
      %2293 = vmatpush1.bf16.msra.mxu0 0
      %2294 = vmatprep.subr.bf16.mxu0 0
      %2295 = vmatpush1.bf16.msra.mxu0 0
      %2296 = vmatprep.subr.bf16.mxu0 0
      %2297 = vmatpush1.bf16.msra.mxu0 0
      %2298 = vmatprep.mubr.bf16.mxu0 0
      %2299 = vmatmul.mubr.bf16.gmra.mrb[0].mxu0 %v2261
      %v2300 = vpop.f32.mrb[0].mxu0
      %v2301 = vadd.f32 0.0, %v2300
      %v2302 = vpop.f32.mrb[0].mxu0
      %v2303 = vpop.f32.mrb[0].mxu0
      %v2304 = vadd.f32 0.0, %v2303
      %v2305 = vpop.f32.mrb[0].mxu0
      %2306 = vdwg.mxu0
      %v2308 = vsel %vm273, %v1968, 0
      %v2311 = vsel %vm277, %v1977, 0
      %2313 = vmatprep.subr.bf16.mxu0 0
      %2314 = vmatpush1.bf16.msra.mxu0 %v2311
      %2315 = vmatprep.subr.bf16.mxu0 0
      %2316 = vmatpush1.bf16.msra.mxu0 0
      %2317 = vmatprep.subr.bf16.mxu0 0
      %2318 = vmatpush1.bf16.msra.mxu0 0
      %2319 = vmatprep.subr.bf16.mxu0 0
      %2320 = vmatpush1.bf16.msra.mxu0 0
      %2321 = vmatprep.subr.bf16.mxu0 0
      %2322 = vmatpush1.bf16.msra.mxu0 0
      %2323 = vmatprep.subr.bf16.mxu0 0
      %2324 = vmatpush1.bf16.msra.mxu0 0
      %2325 = vmatprep.subr.bf16.mxu0 0
      %2326 = vmatpush1.bf16.msra.mxu0 0
      %2327 = vmatprep.subr.bf16.mxu0 0
      %2328 = vmatpush1.bf16.msra.mxu0 0
      %2329 = vmatprep.subr.bf16.mxu0 0
      %2330 = vmatpush1.bf16.msra.mxu0 0
      %2331 = vmatprep.subr.bf16.mxu0 0
      %2332 = vmatpush1.bf16.msra.mxu0 0
      %2333 = vmatprep.subr.bf16.mxu0 0
      %2334 = vmatpush1.bf16.msra.mxu0 0
      %2335 = vmatprep.subr.bf16.mxu0 0
      %2336 = vmatpush1.bf16.msra.mxu0 0
      %2337 = vmatprep.subr.bf16.mxu0 0
      %2338 = vmatpush1.bf16.msra.mxu0 0
      %2339 = vmatprep.subr.bf16.mxu0 0
      %2340 = vmatpush1.bf16.msra.mxu0 0
      %2341 = vmatprep.subr.bf16.mxu0 0
      %2342 = vmatpush1.bf16.msra.mxu0 0
      %2343 = vmatprep.subr.bf16.mxu0 0
      %2344 = vmatpush1.bf16.msra.mxu0 0
      %2345 = vmatprep.mubr.bf16.mxu0 0
      %2346 = vmatmul.mubr.bf16.gmra.mrb[0].mxu0 %v2308
      %v2347 = vpop.f32.mrb[0].mxu0
      %v2348 = vadd.f32 0.0, %v2347
      %v2349 = vpop.f32.mrb[0].mxu0
      %v2350 = vpop.f32.mrb[0].mxu0
      %v2351 = vadd.f32 0.0, %v2350
      %v2352 = vpop.f32.mrb[0].mxu0
      %2353 = vdwg.mxu0
      %v2354 = vadd.f32 %v1929, %v2019
      %v2355 = vadd.f32 %v1930, %v2022
      %v2356 = vadd.f32 %v1931, %v2066
      %v2357 = vadd.f32 %v1932, %v2069
      %v2358 = vadd.f32 %v1933, %v2113
      %v2359 = vadd.f32 %v1934, %v2116
      %v2360 = vadd.f32 %v1935, %v2160
      %v2361 = vadd.f32 %v1936, %v2163
      %v2362 = vadd.f32 %v1937, %v2207
      %v2363 = vadd.f32 %v1938, %v2210
      %v2364 = vadd.f32 %v1939, %v2254
      %v2365 = vadd.f32 %v1940, %v2257
      %v2366 = vadd.f32 %v1941, %v2301
      %v2367 = vadd.f32 %v1942, %v2304
      %v2368 = vadd.f32 %v1943, %v2348
      %v2369 = vadd.f32 %v1944, %v2351
      %v2370 = vld [vmem:[%s1519 + $0x2] sm:$0xff]
      %v2371 = vld [vmem:[%s1519 + $0xa] sm:$0xff]
      %v2372 = vld [vmem:[%s1519 + $0x1a] sm:$0xff]
      %v2373 = vld [vmem:[%s1519 + $0x22] sm:$0xff]
      %v2374 = vld [vmem:[%s1519 + $0x32] sm:$0xff]
      %v2375 = vld [vmem:[%s1519 + $0x3a] sm:$0xff]
      %v2376 = vld [vmem:[%s1519 + $0x4a] sm:$0xff]
      %v2377 = vld [vmem:[%s1519 + $0x52] sm:$0xff]
      %v2378 = vld [vmem:[%s1519 + $0x62] sm:$0xff]
      %v2379 = vld [vmem:[%s1519 + $0x6a] sm:$0xff]
      %v2380 = vld [vmem:[%s1519 + $0x7a] sm:$0xff]
      %v2381 = vld [vmem:[%s1519 + $0x82] sm:$0xff]
      %v2382 = vld [vmem:[%s1519 + $0x92] sm:$0xff]
      %v2383 = vld [vmem:[%s1519 + $0x9a] sm:$0xff]
      %v2384 = vld [vmem:[%s1519 + $0xaa] sm:$0xff]
      %v2385 = vld [vmem:[%s1519 + $0xb2] sm:$0xff]
      %v2386 = vpack.c.bf16 %v2371, %v2370
      %v2387 = vpack.c.bf16 %v2373, %v2372
      %v2388 = vpack.c.bf16 %v2375, %v2374
      %v2389 = vpack.c.bf16 %v2377, %v2376
      %v2390 = vpack.c.bf16 %v2379, %v2378
      %v2391 = vpack.c.bf16 %v2381, %v2380
      %v2392 = vpack.c.bf16 %v2383, %v2382
      %v2393 = vpack.c.bf16 %v2385, %v2384
      %s2394 = scalar_lea.vmem %s1, 80
      %v2395 = vld [vmem:[%s2394] sm:$0x3]
      %v2396 = vld [vmem:[%s2394 + $0x2] sm:$0x3]
      %v2397 = vld [vmem:[%s2394 + $0x4] sm:$0x3]
      %v2398 = vld [vmem:[%s2394 + $0x6] sm:$0x3]
      %v2399 = vld [vmem:[%s2394 + $0x8] sm:$0x3]
      %v2400 = vld [vmem:[%s2394 + $0xa] sm:$0x3]
      %v2401 = vld [vmem:[%s2394 + $0xc] sm:$0x3]
      %v2402 = vld [vmem:[%s2394 + $0xe] sm:$0x3]
      %v2404 = vsel %vm273, %v2386, 0
      %v2407 = vsel %vm277, %v2395, 0
      %2409 = vmatprep.subr.bf16.mxu0 0
      %2410 = vmatpush1.bf16.msra.mxu0 %v2407
      %2411 = vmatprep.subr.bf16.mxu0 0
      %2412 = vmatpush1.bf16.msra.mxu0 0
      %2413 = vmatprep.subr.bf16.mxu0 0
      %2414 = vmatpush1.bf16.msra.mxu0 0
      %2415 = vmatprep.subr.bf16.mxu0 0
      %2416 = vmatpush1.bf16.msra.mxu0 0
      %2417 = vmatprep.subr.bf16.mxu0 0
      %2418 = vmatpush1.bf16.msra.mxu0 0
      %2419 = vmatprep.subr.bf16.mxu0 0
      %2420 = vmatpush1.bf16.msra.mxu0 0
      %2421 = vmatprep.subr.bf16.mxu0 0
      %2422 = vmatpush1.bf16.msra.mxu0 0
      %2423 = vmatprep.subr.bf16.mxu0 0
      %2424 = vmatpush1.bf16.msra.mxu0 0
      %2425 = vmatprep.subr.bf16.mxu0 0
      %2426 = vmatpush1.bf16.msra.mxu0 0
      %2427 = vmatprep.subr.bf16.mxu0 0
      %2428 = vmatpush1.bf16.msra.mxu0 0
      %2429 = vmatprep.subr.bf16.mxu0 0
      %2430 = vmatpush1.bf16.msra.mxu0 0
      %2431 = vmatprep.subr.bf16.mxu0 0
      %2432 = vmatpush1.bf16.msra.mxu0 0
      %2433 = vmatprep.subr.bf16.mxu0 0
      %2434 = vmatpush1.bf16.msra.mxu0 0
      %2435 = vmatprep.subr.bf16.mxu0 0
      %2436 = vmatpush1.bf16.msra.mxu0 0
      %2437 = vmatprep.subr.bf16.mxu0 0
      %2438 = vmatpush1.bf16.msra.mxu0 0
      %2439 = vmatprep.subr.bf16.mxu0 0
      %2440 = vmatpush1.bf16.msra.mxu0 0
      %2441 = vmatprep.mubr.bf16.mxu0 0
      %2442 = vmatmul.mubr.bf16.gmra.mrb[0].mxu0 %v2404
      %v2443 = vpop.f32.mrb[0].mxu0
      %v2444 = vadd.f32 0.0, %v2443
      %v2445 = vpop.f32.mrb[0].mxu0
      %v2446 = vpop.f32.mrb[0].mxu0
      %v2447 = vadd.f32 0.0, %v2446
      %v2448 = vpop.f32.mrb[0].mxu0
      %2449 = vdwg.mxu0
      %v2451 = vsel %vm273, %v2387, 0
      %v2454 = vsel %vm277, %v2396, 0
      %2456 = vmatprep.subr.bf16.mxu0 0
      %2457 = vmatpush1.bf16.msra.mxu0 %v2454
      %2458 = vmatprep.subr.bf16.mxu0 0
      %2459 = vmatpush1.bf16.msra.mxu0 0
      %2460 = vmatprep.subr.bf16.mxu0 0
      %2461 = vmatpush1.bf16.msra.mxu0 0
      %2462 = vmatprep.subr.bf16.mxu0 0
      %2463 = vmatpush1.bf16.msra.mxu0 0
      %2464 = vmatprep.subr.bf16.mxu0 0
      %2465 = vmatpush1.bf16.msra.mxu0 0
      %2466 = vmatprep.subr.bf16.mxu0 0
      %2467 = vmatpush1.bf16.msra.mxu0 0
      %2468 = vmatprep.subr.bf16.mxu0 0
      %2469 = vmatpush1.bf16.msra.mxu0 0
      %2470 = vmatprep.subr.bf16.mxu0 0
      %2471 = vmatpush1.bf16.msra.mxu0 0
      %2472 = vmatprep.subr.bf16.mxu0 0
      %2473 = vmatpush1.bf16.msra.mxu0 0
      %2474 = vmatprep.subr.bf16.mxu0 0
      %2475 = vmatpush1.bf16.msra.mxu0 0
      %2476 = vmatprep.subr.bf16.mxu0 0
      %2477 = vmatpush1.bf16.msra.mxu0 0
      %2478 = vmatprep.subr.bf16.mxu0 0
      %2479 = vmatpush1.bf16.msra.mxu0 0
      %2480 = vmatprep.subr.bf16.mxu0 0
      %2481 = vmatpush1.bf16.msra.mxu0 0
      %2482 = vmatprep.subr.bf16.mxu0 0
      %2483 = vmatpush1.bf16.msra.mxu0 0
      %2484 = vmatprep.subr.bf16.mxu0 0
      %2485 = vmatpush1.bf16.msra.mxu0 0
      %2486 = vmatprep.subr.bf16.mxu0 0
      %2487 = vmatpush1.bf16.msra.mxu0 0
      %2488 = vmatprep.mubr.bf16.mxu0 0
      %2489 = vmatmul.mubr.bf16.gmra.mrb[0].mxu0 %v2451
      %v2490 = vpop.f32.mrb[0].mxu0
      %v2491 = vadd.f32 0.0, %v2490
      %v2492 = vpop.f32.mrb[0].mxu0
      %v2493 = vpop.f32.mrb[0].mxu0
      %v2494 = vadd.f32 0.0, %v2493
      %v2495 = vpop.f32.mrb[0].mxu0
      %2496 = vdwg.mxu0
      %v2498 = vsel %vm273, %v2388, 0
      %v2501 = vsel %vm277, %v2397, 0
      %2503 = vmatprep.subr.bf16.mxu0 0
      %2504 = vmatpush1.bf16.msra.mxu0 %v2501
      %2505 = vmatprep.subr.bf16.mxu0 0
      %2506 = vmatpush1.bf16.msra.mxu0 0
      %2507 = vmatprep.subr.bf16.mxu0 0
      %2508 = vmatpush1.bf16.msra.mxu0 0
      %2509 = vmatprep.subr.bf16.mxu0 0
      %2510 = vmatpush1.bf16.msra.mxu0 0
      %2511 = vmatprep.subr.bf16.mxu0 0
      %2512 = vmatpush1.bf16.msra.mxu0 0
      %2513 = vmatprep.subr.bf16.mxu0 0
      %2514 = vmatpush1.bf16.msra.mxu0 0
      %2515 = vmatprep.subr.bf16.mxu0 0
      %2516 = vmatpush1.bf16.msra.mxu0 0
      %2517 = vmatprep.subr.bf16.mxu0 0
      %2518 = vmatpush1.bf16.msra.mxu0 0
      %2519 = vmatprep.subr.bf16.mxu0 0
      %2520 = vmatpush1.bf16.msra.mxu0 0
      %2521 = vmatprep.subr.bf16.mxu0 0
      %2522 = vmatpush1.bf16.msra.mxu0 0
      %2523 = vmatprep.subr.bf16.mxu0 0
      %2524 = vmatpush1.bf16.msra.mxu0 0
      %2525 = vmatprep.subr.bf16.mxu0 0
      %2526 = vmatpush1.bf16.msra.mxu0 0
      %2527 = vmatprep.subr.bf16.mxu0 0
      %2528 = vmatpush1.bf16.msra.mxu0 0
      %2529 = vmatprep.subr.bf16.mxu0 0
      %2530 = vmatpush1.bf16.msra.mxu0 0
      %2531 = vmatprep.subr.bf16.mxu0 0
      %2532 = vmatpush1.bf16.msra.mxu0 0
      %2533 = vmatprep.subr.bf16.mxu0 0
      %2534 = vmatpush1.bf16.msra.mxu0 0
      %2535 = vmatprep.mubr.bf16.mxu0 0
      %2536 = vmatmul.mubr.bf16.gmra.mrb[0].mxu0 %v2498
      %v2537 = vpop.f32.mrb[0].mxu0
      %v2538 = vadd.f32 0.0, %v2537
      %v2539 = vpop.f32.mrb[0].mxu0
      %v2540 = vpop.f32.mrb[0].mxu0
      %v2541 = vadd.f32 0.0, %v2540
      %v2542 = vpop.f32.mrb[0].mxu0
      %2543 = vdwg.mxu0
      %v2545 = vsel %vm273, %v2389, 0
      %v2548 = vsel %vm277, %v2398, 0
      %2550 = vmatprep.subr.bf16.mxu0 0
      %2551 = vmatpush1.bf16.msra.mxu0 %v2548
      %2552 = vmatprep.subr.bf16.mxu0 0
      %2553 = vmatpush1.bf16.msra.mxu0 0
      %2554 = vmatprep.subr.bf16.mxu0 0
      %2555 = vmatpush1.bf16.msra.mxu0 0
      %2556 = vmatprep.subr.bf16.mxu0 0
      %2557 = vmatpush1.bf16.msra.mxu0 0
      %2558 = vmatprep.subr.bf16.mxu0 0
      %2559 = vmatpush1.bf16.msra.mxu0 0
      %2560 = vmatprep.subr.bf16.mxu0 0
      %2561 = vmatpush1.bf16.msra.mxu0 0
      %2562 = vmatprep.subr.bf16.mxu0 0
      %2563 = vmatpush1.bf16.msra.mxu0 0
      %2564 = vmatprep.subr.bf16.mxu0 0
      %2565 = vmatpush1.bf16.msra.mxu0 0
      %2566 = vmatprep.subr.bf16.mxu0 0
      %2567 = vmatpush1.bf16.msra.mxu0 0
      %2568 = vmatprep.subr.bf16.mxu0 0
      %2569 = vmatpush1.bf16.msra.mxu0 0
      %2570 = vmatprep.subr.bf16.mxu0 0
      %2571 = vmatpush1.bf16.msra.mxu0 0
      %2572 = vmatprep.subr.bf16.mxu0 0
      %2573 = vmatpush1.bf16.msra.mxu0 0
      %2574 = vmatprep.subr.bf16.mxu0 0
      %2575 = vmatpush1.bf16.msra.mxu0 0
      %2576 = vmatprep.subr.bf16.mxu0 0
      %2577 = vmatpush1.bf16.msra.mxu0 0
      %2578 = vmatprep.subr.bf16.mxu0 0
      %2579 = vmatpush1.bf16.msra.mxu0 0
      %2580 = vmatprep.subr.bf16.mxu0 0
      %2581 = vmatpush1.bf16.msra.mxu0 0
      %2582 = vmatprep.mubr.bf16.mxu0 0
      %2583 = vmatmul.mubr.bf16.gmra.mrb[0].mxu0 %v2545
      %v2584 = vpop.f32.mrb[0].mxu0
      %v2585 = vadd.f32 0.0, %v2584
      %v2586 = vpop.f32.mrb[0].mxu0
      %v2587 = vpop.f32.mrb[0].mxu0
      %v2588 = vadd.f32 0.0, %v2587
      %v2589 = vpop.f32.mrb[0].mxu0
      %2590 = vdwg.mxu0
      %v2592 = vsel %vm273, %v2390, 0
      %v2595 = vsel %vm277, %v2399, 0
      %2597 = vmatprep.subr.bf16.mxu0 0
      %2598 = vmatpush1.bf16.msra.mxu0 %v2595
      %2599 = vmatprep.subr.bf16.mxu0 0
      %2600 = vmatpush1.bf16.msra.mxu0 0
      %2601 = vmatprep.subr.bf16.mxu0 0
      %2602 = vmatpush1.bf16.msra.mxu0 0
      %2603 = vmatprep.subr.bf16.mxu0 0
      %2604 = vmatpush1.bf16.msra.mxu0 0
      %2605 = vmatprep.subr.bf16.mxu0 0
      %2606 = vmatpush1.bf16.msra.mxu0 0
      %2607 = vmatprep.subr.bf16.mxu0 0
      %2608 = vmatpush1.bf16.msra.mxu0 0
      %2609 = vmatprep.subr.bf16.mxu0 0
      %2610 = vmatpush1.bf16.msra.mxu0 0
      %2611 = vmatprep.subr.bf16.mxu0 0
      %2612 = vmatpush1.bf16.msra.mxu0 0
      %2613 = vmatprep.subr.bf16.mxu0 0
      %2614 = vmatpush1.bf16.msra.mxu0 0
      %2615 = vmatprep.subr.bf16.mxu0 0
      %2616 = vmatpush1.bf16.msra.mxu0 0
      %2617 = vmatprep.subr.bf16.mxu0 0
      %2618 = vmatpush1.bf16.msra.mxu0 0
      %2619 = vmatprep.subr.bf16.mxu0 0
      %2620 = vmatpush1.bf16.msra.mxu0 0
      %2621 = vmatprep.subr.bf16.mxu0 0
      %2622 = vmatpush1.bf16.msra.mxu0 0
      %2623 = vmatprep.subr.bf16.mxu0 0
      %2624 = vmatpush1.bf16.msra.mxu0 0
      %2625 = vmatprep.subr.bf16.mxu0 0
      %2626 = vmatpush1.bf16.msra.mxu0 0
      %2627 = vmatprep.subr.bf16.mxu0 0
      %2628 = vmatpush1.bf16.msra.mxu0 0
      %2629 = vmatprep.mubr.bf16.mxu0 0
      %2630 = vmatmul.mubr.bf16.gmra.mrb[0].mxu0 %v2592
      %v2631 = vpop.f32.mrb[0].mxu0
      %v2632 = vadd.f32 0.0, %v2631
      %v2633 = vpop.f32.mrb[0].mxu0
      %v2634 = vpop.f32.mrb[0].mxu0
      %v2635 = vadd.f32 0.0, %v2634
      %v2636 = vpop.f32.mrb[0].mxu0
      %2637 = vdwg.mxu0
      %v2639 = vsel %vm273, %v2391, 0
      %v2642 = vsel %vm277, %v2400, 0
      %2644 = vmatprep.subr.bf16.mxu0 0
      %2645 = vmatpush1.bf16.msra.mxu0 %v2642
      %2646 = vmatprep.subr.bf16.mxu0 0
      %2647 = vmatpush1.bf16.msra.mxu0 0
      %2648 = vmatprep.subr.bf16.mxu0 0
      %2649 = vmatpush1.bf16.msra.mxu0 0
      %2650 = vmatprep.subr.bf16.mxu0 0
      %2651 = vmatpush1.bf16.msra.mxu0 0
      %2652 = vmatprep.subr.bf16.mxu0 0
      %2653 = vmatpush1.bf16.msra.mxu0 0
      %2654 = vmatprep.subr.bf16.mxu0 0
      %2655 = vmatpush1.bf16.msra.mxu0 0
      %2656 = vmatprep.subr.bf16.mxu0 0
      %2657 = vmatpush1.bf16.msra.mxu0 0
      %2658 = vmatprep.subr.bf16.mxu0 0
      %2659 = vmatpush1.bf16.msra.mxu0 0
      %2660 = vmatprep.subr.bf16.mxu0 0
      %2661 = vmatpush1.bf16.msra.mxu0 0
      %2662 = vmatprep.subr.bf16.mxu0 0
      %2663 = vmatpush1.bf16.msra.mxu0 0
      %2664 = vmatprep.subr.bf16.mxu0 0
      %2665 = vmatpush1.bf16.msra.mxu0 0
      %2666 = vmatprep.subr.bf16.mxu0 0
      %2667 = vmatpush1.bf16.msra.mxu0 0
      %2668 = vmatprep.subr.bf16.mxu0 0
      %2669 = vmatpush1.bf16.msra.mxu0 0
      %2670 = vmatprep.subr.bf16.mxu0 0
      %2671 = vmatpush1.bf16.msra.mxu0 0
      %2672 = vmatprep.subr.bf16.mxu0 0
      %2673 = vmatpush1.bf16.msra.mxu0 0
      %2674 = vmatprep.subr.bf16.mxu0 0
      %2675 = vmatpush1.bf16.msra.mxu0 0
      %2676 = vmatprep.mubr.bf16.mxu0 0
      %2677 = vmatmul.mubr.bf16.gmra.mrb[0].mxu0 %v2639
      %v2678 = vpop.f32.mrb[0].mxu0
      %v2679 = vadd.f32 0.0, %v2678
      %v2680 = vpop.f32.mrb[0].mxu0
      %v2681 = vpop.f32.mrb[0].mxu0
      %v2682 = vadd.f32 0.0, %v2681
      %v2683 = vpop.f32.mrb[0].mxu0
      %2684 = vdwg.mxu0
      %v2686 = vsel %vm273, %v2392, 0
      %v2689 = vsel %vm277, %v2401, 0
      %2691 = vmatprep.subr.bf16.mxu0 0
      %2692 = vmatpush1.bf16.msra.mxu0 %v2689
      %2693 = vmatprep.subr.bf16.mxu0 0
      %2694 = vmatpush1.bf16.msra.mxu0 0
      %2695 = vmatprep.subr.bf16.mxu0 0
      %2696 = vmatpush1.bf16.msra.mxu0 0
      %2697 = vmatprep.subr.bf16.mxu0 0
      %2698 = vmatpush1.bf16.msra.mxu0 0
      %2699 = vmatprep.subr.bf16.mxu0 0
      %2700 = vmatpush1.bf16.msra.mxu0 0
      %2701 = vmatprep.subr.bf16.mxu0 0
      %2702 = vmatpush1.bf16.msra.mxu0 0
      %2703 = vmatprep.subr.bf16.mxu0 0
      %2704 = vmatpush1.bf16.msra.mxu0 0
      %2705 = vmatprep.subr.bf16.mxu0 0
      %2706 = vmatpush1.bf16.msra.mxu0 0
      %2707 = vmatprep.subr.bf16.mxu0 0
      %2708 = vmatpush1.bf16.msra.mxu0 0
      %2709 = vmatprep.subr.bf16.mxu0 0
      %2710 = vmatpush1.bf16.msra.mxu0 0
      %2711 = vmatprep.subr.bf16.mxu0 0
      %2712 = vmatpush1.bf16.msra.mxu0 0
      %2713 = vmatprep.subr.bf16.mxu0 0
      %2714 = vmatpush1.bf16.msra.mxu0 0
      %2715 = vmatprep.subr.bf16.mxu0 0
      %2716 = vmatpush1.bf16.msra.mxu0 0
      %2717 = vmatprep.subr.bf16.mxu0 0
      %2718 = vmatpush1.bf16.msra.mxu0 0
      %2719 = vmatprep.subr.bf16.mxu0 0
      %2720 = vmatpush1.bf16.msra.mxu0 0
      %2721 = vmatprep.subr.bf16.mxu0 0
      %2722 = vmatpush1.bf16.msra.mxu0 0
      %2723 = vmatprep.mubr.bf16.mxu0 0
      %2724 = vmatmul.mubr.bf16.gmra.mrb[0].mxu0 %v2686
      %v2725 = vpop.f32.mrb[0].mxu0
      %v2726 = vadd.f32 0.0, %v2725
      %v2727 = vpop.f32.mrb[0].mxu0
      %v2728 = vpop.f32.mrb[0].mxu0
      %v2729 = vadd.f32 0.0, %v2728
      %v2730 = vpop.f32.mrb[0].mxu0
      %2731 = vdwg.mxu0
      %v2733 = vsel %vm273, %v2393, 0
      %v2736 = vsel %vm277, %v2402, 0
      %2738 = vmatprep.subr.bf16.mxu0 0
      %2739 = vmatpush1.bf16.msra.mxu0 %v2736
      %2740 = vmatprep.subr.bf16.mxu0 0
      %2741 = vmatpush1.bf16.msra.mxu0 0
      %2742 = vmatprep.subr.bf16.mxu0 0
      %2743 = vmatpush1.bf16.msra.mxu0 0
      %2744 = vmatprep.subr.bf16.mxu0 0
      %2745 = vmatpush1.bf16.msra.mxu0 0
      %2746 = vmatprep.subr.bf16.mxu0 0
      %2747 = vmatpush1.bf16.msra.mxu0 0
      %2748 = vmatprep.subr.bf16.mxu0 0
      %2749 = vmatpush1.bf16.msra.mxu0 0
      %2750 = vmatprep.subr.bf16.mxu0 0
      %2751 = vmatpush1.bf16.msra.mxu0 0
      %2752 = vmatprep.subr.bf16.mxu0 0
      %2753 = vmatpush1.bf16.msra.mxu0 0
      %2754 = vmatprep.subr.bf16.mxu0 0
      %2755 = vmatpush1.bf16.msra.mxu0 0
      %2756 = vmatprep.subr.bf16.mxu0 0
      %2757 = vmatpush1.bf16.msra.mxu0 0
      %2758 = vmatprep.subr.bf16.mxu0 0
      %2759 = vmatpush1.bf16.msra.mxu0 0
      %2760 = vmatprep.subr.bf16.mxu0 0
      %2761 = vmatpush1.bf16.msra.mxu0 0
      %2762 = vmatprep.subr.bf16.mxu0 0
      %2763 = vmatpush1.bf16.msra.mxu0 0
      %2764 = vmatprep.subr.bf16.mxu0 0
      %2765 = vmatpush1.bf16.msra.mxu0 0
      %2766 = vmatprep.subr.bf16.mxu0 0
      %2767 = vmatpush1.bf16.msra.mxu0 0
      %2768 = vmatprep.subr.bf16.mxu0 0
      %2769 = vmatpush1.bf16.msra.mxu0 0
      %2770 = vmatprep.mubr.bf16.mxu0 0
      %2771 = vmatmul.mubr.bf16.gmra.mrb[0].mxu0 %v2733
      %v2772 = vpop.f32.mrb[0].mxu0
      %v2773 = vadd.f32 0.0, %v2772
      %v2774 = vpop.f32.mrb[0].mxu0
      %v2775 = vpop.f32.mrb[0].mxu0
      %v2776 = vadd.f32 0.0, %v2775
      %v2777 = vpop.f32.mrb[0].mxu0
      %2778 = vdwg.mxu0
      %v2779 = vadd.f32 %v2354, %v2444
      %v2780 = vadd.f32 %v2355, %v2447
      %v2781 = vadd.f32 %v2356, %v2491
      %v2782 = vadd.f32 %v2357, %v2494
      %v2783 = vadd.f32 %v2358, %v2538
      %v2784 = vadd.f32 %v2359, %v2541
      %v2785 = vadd.f32 %v2360, %v2585
      %v2786 = vadd.f32 %v2361, %v2588
      %v2787 = vadd.f32 %v2362, %v2632
      %v2788 = vadd.f32 %v2363, %v2635
      %v2789 = vadd.f32 %v2364, %v2679
      %v2790 = vadd.f32 %v2365, %v2682
      %v2791 = vadd.f32 %v2366, %v2726
      %v2792 = vadd.f32 %v2367, %v2729
      %v2793 = vadd.f32 %v2368, %v2773
      %v2794 = vadd.f32 %v2369, %v2776
      %s2795 = sadd.s32 %s222, 2
      %s2796 = smul.u32 %s2795, 24
      %s2797 = scalar_lea.vmem %s202, %s2796
      %v2798 = vld [vmem:[%s2797] sm:$0xff]
      %v2799 = vld [vmem:[%s2797 + $0x8] sm:$0xff]
      %v2800 = vld [vmem:[%s2797 + $0x18] sm:$0xff]
      %v2801 = vld [vmem:[%s2797 + $0x20] sm:$0xff]
      %v2802 = vld [vmem:[%s2797 + $0x30] sm:$0xff]
      %v2803 = vld [vmem:[%s2797 + $0x38] sm:$0xff]
      %v2804 = vld [vmem:[%s2797 + $0x48] sm:$0xff]
      %v2805 = vld [vmem:[%s2797 + $0x50] sm:$0xff]
      %v2806 = vld [vmem:[%s2797 + $0x60] sm:$0xff]
      %v2807 = vld [vmem:[%s2797 + $0x68] sm:$0xff]
      %v2808 = vld [vmem:[%s2797 + $0x78] sm:$0xff]
      %v2809 = vld [vmem:[%s2797 + $0x80] sm:$0xff]
      %v2810 = vld [vmem:[%s2797 + $0x90] sm:$0xff]
      %v2811 = vld [vmem:[%s2797 + $0x98] sm:$0xff]
      %v2812 = vld [vmem:[%s2797 + $0xa8] sm:$0xff]
      %v2813 = vld [vmem:[%s2797 + $0xb0] sm:$0xff]
      %v2814 = vpack.c.bf16 %v2799, %v2798
      %v2815 = vpack.c.bf16 %v2801, %v2800
      %v2816 = vpack.c.bf16 %v2803, %v2802
      %v2817 = vpack.c.bf16 %v2805, %v2804
      %v2818 = vpack.c.bf16 %v2807, %v2806
      %v2819 = vpack.c.bf16 %v2809, %v2808
      %v2820 = vpack.c.bf16 %v2811, %v2810
      %v2821 = vpack.c.bf16 %v2813, %v2812
      %s2822 = scalar_lea.vmem %s1, 96
      %v2823 = vld [vmem:[%s2822] sm:$0x3]
      %v2824 = vld [vmem:[%s2822 + $0x2] sm:$0x3]
      %v2825 = vld [vmem:[%s2822 + $0x4] sm:$0x3]
      %v2826 = vld [vmem:[%s2822 + $0x6] sm:$0x3]
      %v2827 = vld [vmem:[%s2822 + $0x8] sm:$0x3]
      %v2828 = vld [vmem:[%s2822 + $0xa] sm:$0x3]
      %v2829 = vld [vmem:[%s2822 + $0xc] sm:$0x3]
      %v2830 = vld [vmem:[%s2822 + $0xe] sm:$0x3]
      %v2832 = vsel %vm273, %v2814, 0
      %v2835 = vsel %vm277, %v2823, 0
      %2837 = vmatprep.subr.bf16.mxu0 0
      %2838 = vmatpush1.bf16.msra.mxu0 %v2835
      %2839 = vmatprep.subr.bf16.mxu0 0
      %2840 = vmatpush1.bf16.msra.mxu0 0
      %2841 = vmatprep.subr.bf16.mxu0 0
      %2842 = vmatpush1.bf16.msra.mxu0 0
      %2843 = vmatprep.subr.bf16.mxu0 0
      %2844 = vmatpush1.bf16.msra.mxu0 0
      %2845 = vmatprep.subr.bf16.mxu0 0
      %2846 = vmatpush1.bf16.msra.mxu0 0
      %2847 = vmatprep.subr.bf16.mxu0 0
      %2848 = vmatpush1.bf16.msra.mxu0 0
      %2849 = vmatprep.subr.bf16.mxu0 0
      %2850 = vmatpush1.bf16.msra.mxu0 0
      %2851 = vmatprep.subr.bf16.mxu0 0
      %2852 = vmatpush1.bf16.msra.mxu0 0
      %2853 = vmatprep.subr.bf16.mxu0 0
      %2854 = vmatpush1.bf16.msra.mxu0 0
      %2855 = vmatprep.subr.bf16.mxu0 0
      %2856 = vmatpush1.bf16.msra.mxu0 0
      %2857 = vmatprep.subr.bf16.mxu0 0
      %2858 = vmatpush1.bf16.msra.mxu0 0
      %2859 = vmatprep.subr.bf16.mxu0 0
      %2860 = vmatpush1.bf16.msra.mxu0 0
      %2861 = vmatprep.subr.bf16.mxu0 0
      %2862 = vmatpush1.bf16.msra.mxu0 0
      %2863 = vmatprep.subr.bf16.mxu0 0
      %2864 = vmatpush1.bf16.msra.mxu0 0
      %2865 = vmatprep.subr.bf16.mxu0 0
      %2866 = vmatpush1.bf16.msra.mxu0 0
      %2867 = vmatprep.subr.bf16.mxu0 0
      %2868 = vmatpush1.bf16.msra.mxu0 0
      %2869 = vmatprep.mubr.bf16.mxu0 0
      %2870 = vmatmul.mubr.bf16.gmra.mrb[0].mxu0 %v2832
      %v2871 = vpop.f32.mrb[0].mxu0
      %v2872 = vadd.f32 0.0, %v2871
      %v2873 = vpop.f32.mrb[0].mxu0
      %v2874 = vpop.f32.mrb[0].mxu0
      %v2875 = vadd.f32 0.0, %v2874
      %v2876 = vpop.f32.mrb[0].mxu0
      %2877 = vdwg.mxu0
      %v2879 = vsel %vm273, %v2815, 0
      %v2882 = vsel %vm277, %v2824, 0
      %2884 = vmatprep.subr.bf16.mxu0 0
      %2885 = vmatpush1.bf16.msra.mxu0 %v2882
      %2886 = vmatprep.subr.bf16.mxu0 0
      %2887 = vmatpush1.bf16.msra.mxu0 0
      %2888 = vmatprep.subr.bf16.mxu0 0
      %2889 = vmatpush1.bf16.msra.mxu0 0
      %2890 = vmatprep.subr.bf16.mxu0 0
      %2891 = vmatpush1.bf16.msra.mxu0 0
      %2892 = vmatprep.subr.bf16.mxu0 0
      %2893 = vmatpush1.bf16.msra.mxu0 0
      %2894 = vmatprep.subr.bf16.mxu0 0
      %2895 = vmatpush1.bf16.msra.mxu0 0
      %2896 = vmatprep.subr.bf16.mxu0 0
      %2897 = vmatpush1.bf16.msra.mxu0 0
      %2898 = vmatprep.subr.bf16.mxu0 0
      %2899 = vmatpush1.bf16.msra.mxu0 0
      %2900 = vmatprep.subr.bf16.mxu0 0
      %2901 = vmatpush1.bf16.msra.mxu0 0
      %2902 = vmatprep.subr.bf16.mxu0 0
      %2903 = vmatpush1.bf16.msra.mxu0 0
      %2904 = vmatprep.subr.bf16.mxu0 0
      %2905 = vmatpush1.bf16.msra.mxu0 0
      %2906 = vmatprep.subr.bf16.mxu0 0
      %2907 = vmatpush1.bf16.msra.mxu0 0
      %2908 = vmatprep.subr.bf16.mxu0 0
      %2909 = vmatpush1.bf16.msra.mxu0 0
      %2910 = vmatprep.subr.bf16.mxu0 0
      %2911 = vmatpush1.bf16.msra.mxu0 0
      %2912 = vmatprep.subr.bf16.mxu0 0
      %2913 = vmatpush1.bf16.msra.mxu0 0
      %2914 = vmatprep.subr.bf16.mxu0 0
      %2915 = vmatpush1.bf16.msra.mxu0 0
      %2916 = vmatprep.mubr.bf16.mxu0 0
      %2917 = vmatmul.mubr.bf16.gmra.mrb[0].mxu0 %v2879
      %v2918 = vpop.f32.mrb[0].mxu0
      %v2919 = vadd.f32 0.0, %v2918
      %v2920 = vpop.f32.mrb[0].mxu0
      %v2921 = vpop.f32.mrb[0].mxu0
      %v2922 = vadd.f32 0.0, %v2921
      %v2923 = vpop.f32.mrb[0].mxu0
      %2924 = vdwg.mxu0
      %v2926 = vsel %vm273, %v2816, 0
      %v2929 = vsel %vm277, %v2825, 0
      %2931 = vmatprep.subr.bf16.mxu0 0
      %2932 = vmatpush1.bf16.msra.mxu0 %v2929
      %2933 = vmatprep.subr.bf16.mxu0 0
      %2934 = vmatpush1.bf16.msra.mxu0 0
      %2935 = vmatprep.subr.bf16.mxu0 0
      %2936 = vmatpush1.bf16.msra.mxu0 0
      %2937 = vmatprep.subr.bf16.mxu0 0
      %2938 = vmatpush1.bf16.msra.mxu0 0
      %2939 = vmatprep.subr.bf16.mxu0 0
      %2940 = vmatpush1.bf16.msra.mxu0 0
      %2941 = vmatprep.subr.bf16.mxu0 0
      %2942 = vmatpush1.bf16.msra.mxu0 0
      %2943 = vmatprep.subr.bf16.mxu0 0
      %2944 = vmatpush1.bf16.msra.mxu0 0
      %2945 = vmatprep.subr.bf16.mxu0 0
      %2946 = vmatpush1.bf16.msra.mxu0 0
      %2947 = vmatprep.subr.bf16.mxu0 0
      %2948 = vmatpush1.bf16.msra.mxu0 0
      %2949 = vmatprep.subr.bf16.mxu0 0
      %2950 = vmatpush1.bf16.msra.mxu0 0
      %2951 = vmatprep.subr.bf16.mxu0 0
      %2952 = vmatpush1.bf16.msra.mxu0 0
      %2953 = vmatprep.subr.bf16.mxu0 0
      %2954 = vmatpush1.bf16.msra.mxu0 0
      %2955 = vmatprep.subr.bf16.mxu0 0
      %2956 = vmatpush1.bf16.msra.mxu0 0
      %2957 = vmatprep.subr.bf16.mxu0 0
      %2958 = vmatpush1.bf16.msra.mxu0 0
      %2959 = vmatprep.subr.bf16.mxu0 0
      %2960 = vmatpush1.bf16.msra.mxu0 0
      %2961 = vmatprep.subr.bf16.mxu0 0
      %2962 = vmatpush1.bf16.msra.mxu0 0
      %2963 = vmatprep.mubr.bf16.mxu0 0
      %2964 = vmatmul.mubr.bf16.gmra.mrb[0].mxu0 %v2926
      %v2965 = vpop.f32.mrb[0].mxu0
      %v2966 = vadd.f32 0.0, %v2965
      %v2967 = vpop.f32.mrb[0].mxu0
      %v2968 = vpop.f32.mrb[0].mxu0
      %v2969 = vadd.f32 0.0, %v2968
      %v2970 = vpop.f32.mrb[0].mxu0
      %2971 = vdwg.mxu0
      %v2973 = vsel %vm273, %v2817, 0
      %v2976 = vsel %vm277, %v2826, 0
      %2978 = vmatprep.subr.bf16.mxu0 0
      %2979 = vmatpush1.bf16.msra.mxu0 %v2976
      %2980 = vmatprep.subr.bf16.mxu0 0
      %2981 = vmatpush1.bf16.msra.mxu0 0
      %2982 = vmatprep.subr.bf16.mxu0 0
      %2983 = vmatpush1.bf16.msra.mxu0 0
      %2984 = vmatprep.subr.bf16.mxu0 0
      %2985 = vmatpush1.bf16.msra.mxu0 0
      %2986 = vmatprep.subr.bf16.mxu0 0
      %2987 = vmatpush1.bf16.msra.mxu0 0
      %2988 = vmatprep.subr.bf16.mxu0 0
      %2989 = vmatpush1.bf16.msra.mxu0 0
      %2990 = vmatprep.subr.bf16.mxu0 0
      %2991 = vmatpush1.bf16.msra.mxu0 0
      %2992 = vmatprep.subr.bf16.mxu0 0
      %2993 = vmatpush1.bf16.msra.mxu0 0
      %2994 = vmatprep.subr.bf16.mxu0 0
      %2995 = vmatpush1.bf16.msra.mxu0 0
      %2996 = vmatprep.subr.bf16.mxu0 0
      %2997 = vmatpush1.bf16.msra.mxu0 0
      %2998 = vmatprep.subr.bf16.mxu0 0
      %2999 = vmatpush1.bf16.msra.mxu0 0
      %3000 = vmatprep.subr.bf16.mxu0 0
      %3001 = vmatpush1.bf16.msra.mxu0 0
      %3002 = vmatprep.subr.bf16.mxu0 0
      %3003 = vmatpush1.bf16.msra.mxu0 0
      %3004 = vmatprep.subr.bf16.mxu0 0
      %3005 = vmatpush1.bf16.msra.mxu0 0
      %3006 = vmatprep.subr.bf16.mxu0 0
      %3007 = vmatpush1.bf16.msra.mxu0 0
      %3008 = vmatprep.subr.bf16.mxu0 0
      %3009 = vmatpush1.bf16.msra.mxu0 0
      %3010 = vmatprep.mubr.bf16.mxu0 0
      %3011 = vmatmul.mubr.bf16.gmra.mrb[0].mxu0 %v2973
      %v3012 = vpop.f32.mrb[0].mxu0
      %v3013 = vadd.f32 0.0, %v3012
      %v3014 = vpop.f32.mrb[0].mxu0
      %v3015 = vpop.f32.mrb[0].mxu0
      %v3016 = vadd.f32 0.0, %v3015
      %v3017 = vpop.f32.mrb[0].mxu0
      %3018 = vdwg.mxu0
      %v3020 = vsel %vm273, %v2818, 0
      %v3023 = vsel %vm277, %v2827, 0
      %3025 = vmatprep.subr.bf16.mxu0 0
      %3026 = vmatpush1.bf16.msra.mxu0 %v3023
      %3027 = vmatprep.subr.bf16.mxu0 0
      %3028 = vmatpush1.bf16.msra.mxu0 0
      %3029 = vmatprep.subr.bf16.mxu0 0
      %3030 = vmatpush1.bf16.msra.mxu0 0
      %3031 = vmatprep.subr.bf16.mxu0 0
      %3032 = vmatpush1.bf16.msra.mxu0 0
      %3033 = vmatprep.subr.bf16.mxu0 0
      %3034 = vmatpush1.bf16.msra.mxu0 0
      %3035 = vmatprep.subr.bf16.mxu0 0
      %3036 = vmatpush1.bf16.msra.mxu0 0
      %3037 = vmatprep.subr.bf16.mxu0 0
      %3038 = vmatpush1.bf16.msra.mxu0 0
      %3039 = vmatprep.subr.bf16.mxu0 0
      %3040 = vmatpush1.bf16.msra.mxu0 0
      %3041 = vmatprep.subr.bf16.mxu0 0
      %3042 = vmatpush1.bf16.msra.mxu0 0
      %3043 = vmatprep.subr.bf16.mxu0 0
      %3044 = vmatpush1.bf16.msra.mxu0 0
      %3045 = vmatprep.subr.bf16.mxu0 0
      %3046 = vmatpush1.bf16.msra.mxu0 0
      %3047 = vmatprep.subr.bf16.mxu0 0
      %3048 = vmatpush1.bf16.msra.mxu0 0
      %3049 = vmatprep.subr.bf16.mxu0 0
      %3050 = vmatpush1.bf16.msra.mxu0 0
      %3051 = vmatprep.subr.bf16.mxu0 0
      %3052 = vmatpush1.bf16.msra.mxu0 0
      %3053 = vmatprep.subr.bf16.mxu0 0
      %3054 = vmatpush1.bf16.msra.mxu0 0
      %3055 = vmatprep.subr.bf16.mxu0 0
      %3056 = vmatpush1.bf16.msra.mxu0 0
      %3057 = vmatprep.mubr.bf16.mxu0 0
      %3058 = vmatmul.mubr.bf16.gmra.mrb[0].mxu0 %v3020
      %v3059 = vpop.f32.mrb[0].mxu0
      %v3060 = vadd.f32 0.0, %v3059
      %v3061 = vpop.f32.mrb[0].mxu0
      %v3062 = vpop.f32.mrb[0].mxu0
      %v3063 = vadd.f32 0.0, %v3062
      %v3064 = vpop.f32.mrb[0].mxu0
      %3065 = vdwg.mxu0
      %v3067 = vsel %vm273, %v2819, 0
      %v3070 = vsel %vm277, %v2828, 0
      %3072 = vmatprep.subr.bf16.mxu0 0
      %3073 = vmatpush1.bf16.msra.mxu0 %v3070
      %3074 = vmatprep.subr.bf16.mxu0 0
      %3075 = vmatpush1.bf16.msra.mxu0 0
      %3076 = vmatprep.subr.bf16.mxu0 0
      %3077 = vmatpush1.bf16.msra.mxu0 0
      %3078 = vmatprep.subr.bf16.mxu0 0
      %3079 = vmatpush1.bf16.msra.mxu0 0
      %3080 = vmatprep.subr.bf16.mxu0 0
      %3081 = vmatpush1.bf16.msra.mxu0 0
      %3082 = vmatprep.subr.bf16.mxu0 0
      %3083 = vmatpush1.bf16.msra.mxu0 0
      %3084 = vmatprep.subr.bf16.mxu0 0
      %3085 = vmatpush1.bf16.msra.mxu0 0
      %3086 = vmatprep.subr.bf16.mxu0 0
      %3087 = vmatpush1.bf16.msra.mxu0 0
      %3088 = vmatprep.subr.bf16.mxu0 0
      %3089 = vmatpush1.bf16.msra.mxu0 0
      %3090 = vmatprep.subr.bf16.mxu0 0
      %3091 = vmatpush1.bf16.msra.mxu0 0
      %3092 = vmatprep.subr.bf16.mxu0 0
      %3093 = vmatpush1.bf16.msra.mxu0 0
      %3094 = vmatprep.subr.bf16.mxu0 0
      %3095 = vmatpush1.bf16.msra.mxu0 0
      %3096 = vmatprep.subr.bf16.mxu0 0
      %3097 = vmatpush1.bf16.msra.mxu0 0
      %3098 = vmatprep.subr.bf16.mxu0 0
      %3099 = vmatpush1.bf16.msra.mxu0 0
      %3100 = vmatprep.subr.bf16.mxu0 0
      %3101 = vmatpush1.bf16.msra.mxu0 0
      %3102 = vmatprep.subr.bf16.mxu0 0
      %3103 = vmatpush1.bf16.msra.mxu0 0
      %3104 = vmatprep.mubr.bf16.mxu0 0
      %3105 = vmatmul.mubr.bf16.gmra.mrb[0].mxu0 %v3067
      %v3106 = vpop.f32.mrb[0].mxu0
      %v3107 = vadd.f32 0.0, %v3106
      %v3108 = vpop.f32.mrb[0].mxu0
      %v3109 = vpop.f32.mrb[0].mxu0
      %v3110 = vadd.f32 0.0, %v3109
      %v3111 = vpop.f32.mrb[0].mxu0
      %3112 = vdwg.mxu0
      %v3114 = vsel %vm273, %v2820, 0
      %v3117 = vsel %vm277, %v2829, 0
      %3119 = vmatprep.subr.bf16.mxu0 0
      %3120 = vmatpush1.bf16.msra.mxu0 %v3117
      %3121 = vmatprep.subr.bf16.mxu0 0
      %3122 = vmatpush1.bf16.msra.mxu0 0
      %3123 = vmatprep.subr.bf16.mxu0 0
      %3124 = vmatpush1.bf16.msra.mxu0 0
      %3125 = vmatprep.subr.bf16.mxu0 0
      %3126 = vmatpush1.bf16.msra.mxu0 0
      %3127 = vmatprep.subr.bf16.mxu0 0
      %3128 = vmatpush1.bf16.msra.mxu0 0
      %3129 = vmatprep.subr.bf16.mxu0 0
      %3130 = vmatpush1.bf16.msra.mxu0 0
      %3131 = vmatprep.subr.bf16.mxu0 0
      %3132 = vmatpush1.bf16.msra.mxu0 0
      %3133 = vmatprep.subr.bf16.mxu0 0
      %3134 = vmatpush1.bf16.msra.mxu0 0
      %3135 = vmatprep.subr.bf16.mxu0 0
      %3136 = vmatpush1.bf16.msra.mxu0 0
      %3137 = vmatprep.subr.bf16.mxu0 0
      %3138 = vmatpush1.bf16.msra.mxu0 0
      %3139 = vmatprep.subr.bf16.mxu0 0
      %3140 = vmatpush1.bf16.msra.mxu0 0
      %3141 = vmatprep.subr.bf16.mxu0 0
      %3142 = vmatpush1.bf16.msra.mxu0 0
      %3143 = vmatprep.subr.bf16.mxu0 0
      %3144 = vmatpush1.bf16.msra.mxu0 0
      %3145 = vmatprep.subr.bf16.mxu0 0
      %3146 = vmatpush1.bf16.msra.mxu0 0
      %3147 = vmatprep.subr.bf16.mxu0 0
      %3148 = vmatpush1.bf16.msra.mxu0 0
      %3149 = vmatprep.subr.bf16.mxu0 0
      %3150 = vmatpush1.bf16.msra.mxu0 0
      %3151 = vmatprep.mubr.bf16.mxu0 0
      %3152 = vmatmul.mubr.bf16.gmra.mrb[0].mxu0 %v3114
      %v3153 = vpop.f32.mrb[0].mxu0
      %v3154 = vadd.f32 0.0, %v3153
      %v3155 = vpop.f32.mrb[0].mxu0
      %v3156 = vpop.f32.mrb[0].mxu0
      %v3157 = vadd.f32 0.0, %v3156
      %v3158 = vpop.f32.mrb[0].mxu0
      %3159 = vdwg.mxu0
      %v3161 = vsel %vm273, %v2821, 0
      %v3164 = vsel %vm277, %v2830, 0
      %3166 = vmatprep.subr.bf16.mxu0 0
      %3167 = vmatpush1.bf16.msra.mxu0 %v3164
      %3168 = vmatprep.subr.bf16.mxu0 0
      %3169 = vmatpush1.bf16.msra.mxu0 0
      %3170 = vmatprep.subr.bf16.mxu0 0
      %3171 = vmatpush1.bf16.msra.mxu0 0
      %3172 = vmatprep.subr.bf16.mxu0 0
      %3173 = vmatpush1.bf16.msra.mxu0 0
      %3174 = vmatprep.subr.bf16.mxu0 0
      %3175 = vmatpush1.bf16.msra.mxu0 0
      %3176 = vmatprep.subr.bf16.mxu0 0
      %3177 = vmatpush1.bf16.msra.mxu0 0
      %3178 = vmatprep.subr.bf16.mxu0 0
      %3179 = vmatpush1.bf16.msra.mxu0 0
      %3180 = vmatprep.subr.bf16.mxu0 0
      %3181 = vmatpush1.bf16.msra.mxu0 0
      %3182 = vmatprep.subr.bf16.mxu0 0
      %3183 = vmatpush1.bf16.msra.mxu0 0
      %3184 = vmatprep.subr.bf16.mxu0 0
      %3185 = vmatpush1.bf16.msra.mxu0 0
      %3186 = vmatprep.subr.bf16.mxu0 0
      %3187 = vmatpush1.bf16.msra.mxu0 0
      %3188 = vmatprep.subr.bf16.mxu0 0
      %3189 = vmatpush1.bf16.msra.mxu0 0
      %3190 = vmatprep.subr.bf16.mxu0 0
      %3191 = vmatpush1.bf16.msra.mxu0 0
      %3192 = vmatprep.subr.bf16.mxu0 0
      %3193 = vmatpush1.bf16.msra.mxu0 0
      %3194 = vmatprep.subr.bf16.mxu0 0
      %3195 = vmatpush1.bf16.msra.mxu0 0
      %3196 = vmatprep.subr.bf16.mxu0 0
      %3197 = vmatpush1.bf16.msra.mxu0 0
      %3198 = vmatprep.mubr.bf16.mxu0 0
      %3199 = vmatmul.mubr.bf16.gmra.mrb[0].mxu0 %v3161
      %v3200 = vpop.f32.mrb[0].mxu0
      %v3201 = vadd.f32 0.0, %v3200
      %v3202 = vpop.f32.mrb[0].mxu0
      %v3203 = vpop.f32.mrb[0].mxu0
      %v3204 = vadd.f32 0.0, %v3203
      %v3205 = vpop.f32.mrb[0].mxu0
      %3206 = vdwg.mxu0
      %v3207 = vadd.f32 %v2779, %v2872
      %v3208 = vadd.f32 %v2780, %v2875
      %v3209 = vadd.f32 %v2781, %v2919
      %v3210 = vadd.f32 %v2782, %v2922
      %v3211 = vadd.f32 %v2783, %v2966
      %v3212 = vadd.f32 %v2784, %v2969
      %v3213 = vadd.f32 %v2785, %v3013
      %v3214 = vadd.f32 %v2786, %v3016
      %v3215 = vadd.f32 %v2787, %v3060
      %v3216 = vadd.f32 %v2788, %v3063
      %v3217 = vadd.f32 %v2789, %v3107
      %v3218 = vadd.f32 %v2790, %v3110
      %v3219 = vadd.f32 %v2791, %v3154
      %v3220 = vadd.f32 %v2792, %v3157
      %v3221 = vadd.f32 %v2793, %v3201
      %v3222 = vadd.f32 %v2794, %v3204
      %v3223 = vld [vmem:[%s2797 + $0x1] sm:$0xff]
      %v3224 = vld [vmem:[%s2797 + $0x9] sm:$0xff]
      %v3225 = vld [vmem:[%s2797 + $0x19] sm:$0xff]
      %v3226 = vld [vmem:[%s2797 + $0x21] sm:$0xff]
      %v3227 = vld [vmem:[%s2797 + $0x31] sm:$0xff]
      %v3228 = vld [vmem:[%s2797 + $0x39] sm:$0xff]
      %v3229 = vld [vmem:[%s2797 + $0x49] sm:$0xff]
      %v3230 = vld [vmem:[%s2797 + $0x51] sm:$0xff]
      %v3231 = vld [vmem:[%s2797 + $0x61] sm:$0xff]
      %v3232 = vld [vmem:[%s2797 + $0x69] sm:$0xff]
      %v3233 = vld [vmem:[%s2797 + $0x79] sm:$0xff]
      %v3234 = vld [vmem:[%s2797 + $0x81] sm:$0xff]
      %v3235 = vld [vmem:[%s2797 + $0x91] sm:$0xff]
      %v3236 = vld [vmem:[%s2797 + $0x99] sm:$0xff]
      %v3237 = vld [vmem:[%s2797 + $0xa9] sm:$0xff]
      %v3238 = vld [vmem:[%s2797 + $0xb1] sm:$0xff]
      %v3239 = vpack.c.bf16 %v3224, %v3223
      %v3240 = vpack.c.bf16 %v3226, %v3225
      %v3241 = vpack.c.bf16 %v3228, %v3227
      %v3242 = vpack.c.bf16 %v3230, %v3229
      %v3243 = vpack.c.bf16 %v3232, %v3231
      %v3244 = vpack.c.bf16 %v3234, %v3233
      %v3245 = vpack.c.bf16 %v3236, %v3235
      %v3246 = vpack.c.bf16 %v3238, %v3237
      %s3247 = scalar_lea.vmem %s1, 112
      %v3248 = vld [vmem:[%s3247] sm:$0x3]
      %v3249 = vld [vmem:[%s3247 + $0x2] sm:$0x3]
      %v3250 = vld [vmem:[%s3247 + $0x4] sm:$0x3]
      %v3251 = vld [vmem:[%s3247 + $0x6] sm:$0x3]
      %v3252 = vld [vmem:[%s3247 + $0x8] sm:$0x3]
      %v3253 = vld [vmem:[%s3247 + $0xa] sm:$0x3]
      %v3254 = vld [vmem:[%s3247 + $0xc] sm:$0x3]
      %v3255 = vld [vmem:[%s3247 + $0xe] sm:$0x3]
      %v3257 = vsel %vm273, %v3239, 0
      %v3260 = vsel %vm277, %v3248, 0
      %3262 = vmatprep.subr.bf16.mxu0 0
      %3263 = vmatpush1.bf16.msra.mxu0 %v3260
      %3264 = vmatprep.subr.bf16.mxu0 0
      %3265 = vmatpush1.bf16.msra.mxu0 0
      %3266 = vmatprep.subr.bf16.mxu0 0
      %3267 = vmatpush1.bf16.msra.mxu0 0
      %3268 = vmatprep.subr.bf16.mxu0 0
      %3269 = vmatpush1.bf16.msra.mxu0 0
      %3270 = vmatprep.subr.bf16.mxu0 0
      %3271 = vmatpush1.bf16.msra.mxu0 0
      %3272 = vmatprep.subr.bf16.mxu0 0
      %3273 = vmatpush1.bf16.msra.mxu0 0
      %3274 = vmatprep.subr.bf16.mxu0 0
      %3275 = vmatpush1.bf16.msra.mxu0 0
      %3276 = vmatprep.subr.bf16.mxu0 0
      %3277 = vmatpush1.bf16.msra.mxu0 0
      %3278 = vmatprep.subr.bf16.mxu0 0
      %3279 = vmatpush1.bf16.msra.mxu0 0
      %3280 = vmatprep.subr.bf16.mxu0 0
      %3281 = vmatpush1.bf16.msra.mxu0 0
      %3282 = vmatprep.subr.bf16.mxu0 0
      %3283 = vmatpush1.bf16.msra.mxu0 0
      %3284 = vmatprep.subr.bf16.mxu0 0
      %3285 = vmatpush1.bf16.msra.mxu0 0
      %3286 = vmatprep.subr.bf16.mxu0 0
      %3287 = vmatpush1.bf16.msra.mxu0 0
      %3288 = vmatprep.subr.bf16.mxu0 0
      %3289 = vmatpush1.bf16.msra.mxu0 0
      %3290 = vmatprep.subr.bf16.mxu0 0
      %3291 = vmatpush1.bf16.msra.mxu0 0
      %3292 = vmatprep.subr.bf16.mxu0 0
      %3293 = vmatpush1.bf16.msra.mxu0 0
      %3294 = vmatprep.mubr.bf16.mxu0 0
      %3295 = vmatmul.mubr.bf16.gmra.mrb[0].mxu0 %v3257
      %v3296 = vpop.f32.mrb[0].mxu0
      %v3297 = vadd.f32 0.0, %v3296
      %v3298 = vpop.f32.mrb[0].mxu0
      %v3299 = vpop.f32.mrb[0].mxu0
      %v3300 = vadd.f32 0.0, %v3299
      %v3301 = vpop.f32.mrb[0].mxu0
      %3302 = vdwg.mxu0
      %v3304 = vsel %vm273, %v3240, 0
      %v3307 = vsel %vm277, %v3249, 0
      %3309 = vmatprep.subr.bf16.mxu0 0
      %3310 = vmatpush1.bf16.msra.mxu0 %v3307
      %3311 = vmatprep.subr.bf16.mxu0 0
      %3312 = vmatpush1.bf16.msra.mxu0 0
      %3313 = vmatprep.subr.bf16.mxu0 0
      %3314 = vmatpush1.bf16.msra.mxu0 0
      %3315 = vmatprep.subr.bf16.mxu0 0
      %3316 = vmatpush1.bf16.msra.mxu0 0
      %3317 = vmatprep.subr.bf16.mxu0 0
      %3318 = vmatpush1.bf16.msra.mxu0 0
      %3319 = vmatprep.subr.bf16.mxu0 0
      %3320 = vmatpush1.bf16.msra.mxu0 0
      %3321 = vmatprep.subr.bf16.mxu0 0
      %3322 = vmatpush1.bf16.msra.mxu0 0
      %3323 = vmatprep.subr.bf16.mxu0 0
      %3324 = vmatpush1.bf16.msra.mxu0 0
      %3325 = vmatprep.subr.bf16.mxu0 0
      %3326 = vmatpush1.bf16.msra.mxu0 0
      %3327 = vmatprep.subr.bf16.mxu0 0
      %3328 = vmatpush1.bf16.msra.mxu0 0
      %3329 = vmatprep.subr.bf16.mxu0 0
      %3330 = vmatpush1.bf16.msra.mxu0 0
      %3331 = vmatprep.subr.bf16.mxu0 0
      %3332 = vmatpush1.bf16.msra.mxu0 0
      %3333 = vmatprep.subr.bf16.mxu0 0
      %3334 = vmatpush1.bf16.msra.mxu0 0
      %3335 = vmatprep.subr.bf16.mxu0 0
      %3336 = vmatpush1.bf16.msra.mxu0 0
      %3337 = vmatprep.subr.bf16.mxu0 0
      %3338 = vmatpush1.bf16.msra.mxu0 0
      %3339 = vmatprep.subr.bf16.mxu0 0
      %3340 = vmatpush1.bf16.msra.mxu0 0
      %3341 = vmatprep.mubr.bf16.mxu0 0
      %3342 = vmatmul.mubr.bf16.gmra.mrb[0].mxu0 %v3304
      %v3343 = vpop.f32.mrb[0].mxu0
      %v3344 = vadd.f32 0.0, %v3343
      %v3345 = vpop.f32.mrb[0].mxu0
      %v3346 = vpop.f32.mrb[0].mxu0
      %v3347 = vadd.f32 0.0, %v3346
      %v3348 = vpop.f32.mrb[0].mxu0
      %3349 = vdwg.mxu0
      %v3351 = vsel %vm273, %v3241, 0
      %v3354 = vsel %vm277, %v3250, 0
      %3356 = vmatprep.subr.bf16.mxu0 0
      %3357 = vmatpush1.bf16.msra.mxu0 %v3354
      %3358 = vmatprep.subr.bf16.mxu0 0
      %3359 = vmatpush1.bf16.msra.mxu0 0
      %3360 = vmatprep.subr.bf16.mxu0 0
      %3361 = vmatpush1.bf16.msra.mxu0 0
      %3362 = vmatprep.subr.bf16.mxu0 0
      %3363 = vmatpush1.bf16.msra.mxu0 0
      %3364 = vmatprep.subr.bf16.mxu0 0
      %3365 = vmatpush1.bf16.msra.mxu0 0
      %3366 = vmatprep.subr.bf16.mxu0 0
      %3367 = vmatpush1.bf16.msra.mxu0 0
      %3368 = vmatprep.subr.bf16.mxu0 0
      %3369 = vmatpush1.bf16.msra.mxu0 0
      %3370 = vmatprep.subr.bf16.mxu0 0
      %3371 = vmatpush1.bf16.msra.mxu0 0
      %3372 = vmatprep.subr.bf16.mxu0 0
      %3373 = vmatpush1.bf16.msra.mxu0 0
      %3374 = vmatprep.subr.bf16.mxu0 0
      %3375 = vmatpush1.bf16.msra.mxu0 0
      %3376 = vmatprep.subr.bf16.mxu0 0
      %3377 = vmatpush1.bf16.msra.mxu0 0
      %3378 = vmatprep.subr.bf16.mxu0 0
      %3379 = vmatpush1.bf16.msra.mxu0 0
      %3380 = vmatprep.subr.bf16.mxu0 0
      %3381 = vmatpush1.bf16.msra.mxu0 0
      %3382 = vmatprep.subr.bf16.mxu0 0
      %3383 = vmatpush1.bf16.msra.mxu0 0
      %3384 = vmatprep.subr.bf16.mxu0 0
      %3385 = vmatpush1.bf16.msra.mxu0 0
      %3386 = vmatprep.subr.bf16.mxu0 0
      %3387 = vmatpush1.bf16.msra.mxu0 0
      %3388 = vmatprep.mubr.bf16.mxu0 0
      %3389 = vmatmul.mubr.bf16.gmra.mrb[0].mxu0 %v3351
      %v3390 = vpop.f32.mrb[0].mxu0
      %v3391 = vadd.f32 0.0, %v3390
      %v3392 = vpop.f32.mrb[0].mxu0
      %v3393 = vpop.f32.mrb[0].mxu0
      %v3394 = vadd.f32 0.0, %v3393
      %v3395 = vpop.f32.mrb[0].mxu0
      %3396 = vdwg.mxu0
      %v3398 = vsel %vm273, %v3242, 0
      %v3401 = vsel %vm277, %v3251, 0
      %3403 = vmatprep.subr.bf16.mxu0 0
      %3404 = vmatpush1.bf16.msra.mxu0 %v3401
      %3405 = vmatprep.subr.bf16.mxu0 0
      %3406 = vmatpush1.bf16.msra.mxu0 0
      %3407 = vmatprep.subr.bf16.mxu0 0
      %3408 = vmatpush1.bf16.msra.mxu0 0
      %3409 = vmatprep.subr.bf16.mxu0 0
      %3410 = vmatpush1.bf16.msra.mxu0 0
      %3411 = vmatprep.subr.bf16.mxu0 0
      %3412 = vmatpush1.bf16.msra.mxu0 0
      %3413 = vmatprep.subr.bf16.mxu0 0
      %3414 = vmatpush1.bf16.msra.mxu0 0
      %3415 = vmatprep.subr.bf16.mxu0 0
      %3416 = vmatpush1.bf16.msra.mxu0 0
      %3417 = vmatprep.subr.bf16.mxu0 0
      %3418 = vmatpush1.bf16.msra.mxu0 0
      %3419 = vmatprep.subr.bf16.mxu0 0
      %3420 = vmatpush1.bf16.msra.mxu0 0
      %3421 = vmatprep.subr.bf16.mxu0 0
      %3422 = vmatpush1.bf16.msra.mxu0 0
      %3423 = vmatprep.subr.bf16.mxu0 0
      %3424 = vmatpush1.bf16.msra.mxu0 0
      %3425 = vmatprep.subr.bf16.mxu0 0
      %3426 = vmatpush1.bf16.msra.mxu0 0
      %3427 = vmatprep.subr.bf16.mxu0 0
      %3428 = vmatpush1.bf16.msra.mxu0 0
      %3429 = vmatprep.subr.bf16.mxu0 0
      %3430 = vmatpush1.bf16.msra.mxu0 0
      %3431 = vmatprep.subr.bf16.mxu0 0
      %3432 = vmatpush1.bf16.msra.mxu0 0
      %3433 = vmatprep.subr.bf16.mxu0 0
      %3434 = vmatpush1.bf16.msra.mxu0 0
      %3435 = vmatprep.mubr.bf16.mxu0 0
      %3436 = vmatmul.mubr.bf16.gmra.mrb[0].mxu0 %v3398
      %v3437 = vpop.f32.mrb[0].mxu0
      %v3438 = vadd.f32 0.0, %v3437
      %v3439 = vpop.f32.mrb[0].mxu0
      %v3440 = vpop.f32.mrb[0].mxu0
      %v3441 = vadd.f32 0.0, %v3440
      %v3442 = vpop.f32.mrb[0].mxu0
      %3443 = vdwg.mxu0
      %v3445 = vsel %vm273, %v3243, 0
      %v3448 = vsel %vm277, %v3252, 0
      %3450 = vmatprep.subr.bf16.mxu0 0
      %3451 = vmatpush1.bf16.msra.mxu0 %v3448
      %3452 = vmatprep.subr.bf16.mxu0 0
      %3453 = vmatpush1.bf16.msra.mxu0 0
      %3454 = vmatprep.subr.bf16.mxu0 0
      %3455 = vmatpush1.bf16.msra.mxu0 0
      %3456 = vmatprep.subr.bf16.mxu0 0
      %3457 = vmatpush1.bf16.msra.mxu0 0
      %3458 = vmatprep.subr.bf16.mxu0 0
      %3459 = vmatpush1.bf16.msra.mxu0 0
      %3460 = vmatprep.subr.bf16.mxu0 0
      %3461 = vmatpush1.bf16.msra.mxu0 0
      %3462 = vmatprep.subr.bf16.mxu0 0
      %3463 = vmatpush1.bf16.msra.mxu0 0
      %3464 = vmatprep.subr.bf16.mxu0 0
      %3465 = vmatpush1.bf16.msra.mxu0 0
      %3466 = vmatprep.subr.bf16.mxu0 0
      %3467 = vmatpush1.bf16.msra.mxu0 0
      %3468 = vmatprep.subr.bf16.mxu0 0
      %3469 = vmatpush1.bf16.msra.mxu0 0
      %3470 = vmatprep.subr.bf16.mxu0 0
      %3471 = vmatpush1.bf16.msra.mxu0 0
      %3472 = vmatprep.subr.bf16.mxu0 0
      %3473 = vmatpush1.bf16.msra.mxu0 0
      %3474 = vmatprep.subr.bf16.mxu0 0
      %3475 = vmatpush1.bf16.msra.mxu0 0
      %3476 = vmatprep.subr.bf16.mxu0 0
      %3477 = vmatpush1.bf16.msra.mxu0 0
      %3478 = vmatprep.subr.bf16.mxu0 0
      %3479 = vmatpush1.bf16.msra.mxu0 0
      %3480 = vmatprep.subr.bf16.mxu0 0
      %3481 = vmatpush1.bf16.msra.mxu0 0
      %3482 = vmatprep.mubr.bf16.mxu0 0
      %3483 = vmatmul.mubr.bf16.gmra.mrb[0].mxu0 %v3445
      %v3484 = vpop.f32.mrb[0].mxu0
      %v3485 = vadd.f32 0.0, %v3484
      %v3486 = vpop.f32.mrb[0].mxu0
      %v3487 = vpop.f32.mrb[0].mxu0
      %v3488 = vadd.f32 0.0, %v3487
      %v3489 = vpop.f32.mrb[0].mxu0
      %3490 = vdwg.mxu0
      %v3492 = vsel %vm273, %v3244, 0
      %v3495 = vsel %vm277, %v3253, 0
      %3497 = vmatprep.subr.bf16.mxu0 0
      %3498 = vmatpush1.bf16.msra.mxu0 %v3495
      %3499 = vmatprep.subr.bf16.mxu0 0
      %3500 = vmatpush1.bf16.msra.mxu0 0
      %3501 = vmatprep.subr.bf16.mxu0 0
      %3502 = vmatpush1.bf16.msra.mxu0 0
      %3503 = vmatprep.subr.bf16.mxu0 0
      %3504 = vmatpush1.bf16.msra.mxu0 0
      %3505 = vmatprep.subr.bf16.mxu0 0
      %3506 = vmatpush1.bf16.msra.mxu0 0
      %3507 = vmatprep.subr.bf16.mxu0 0
      %3508 = vmatpush1.bf16.msra.mxu0 0
      %3509 = vmatprep.subr.bf16.mxu0 0
      %3510 = vmatpush1.bf16.msra.mxu0 0
      %3511 = vmatprep.subr.bf16.mxu0 0
      %3512 = vmatpush1.bf16.msra.mxu0 0
      %3513 = vmatprep.subr.bf16.mxu0 0
      %3514 = vmatpush1.bf16.msra.mxu0 0
      %3515 = vmatprep.subr.bf16.mxu0 0
      %3516 = vmatpush1.bf16.msra.mxu0 0
      %3517 = vmatprep.subr.bf16.mxu0 0
      %3518 = vmatpush1.bf16.msra.mxu0 0
      %3519 = vmatprep.subr.bf16.mxu0 0
      %3520 = vmatpush1.bf16.msra.mxu0 0
      %3521 = vmatprep.subr.bf16.mxu0 0
      %3522 = vmatpush1.bf16.msra.mxu0 0
      %3523 = vmatprep.subr.bf16.mxu0 0
      %3524 = vmatpush1.bf16.msra.mxu0 0
      %3525 = vmatprep.subr.bf16.mxu0 0
      %3526 = vmatpush1.bf16.msra.mxu0 0
      %3527 = vmatprep.subr.bf16.mxu0 0
      %3528 = vmatpush1.bf16.msra.mxu0 0
      %3529 = vmatprep.mubr.bf16.mxu0 0
      %3530 = vmatmul.mubr.bf16.gmra.mrb[0].mxu0 %v3492
      %v3531 = vpop.f32.mrb[0].mxu0
      %v3532 = vadd.f32 0.0, %v3531
      %v3533 = vpop.f32.mrb[0].mxu0
      %v3534 = vpop.f32.mrb[0].mxu0
      %v3535 = vadd.f32 0.0, %v3534
      %v3536 = vpop.f32.mrb[0].mxu0
      %3537 = vdwg.mxu0
      %v3539 = vsel %vm273, %v3245, 0
      %v3542 = vsel %vm277, %v3254, 0
      %3544 = vmatprep.subr.bf16.mxu0 0
      %3545 = vmatpush1.bf16.msra.mxu0 %v3542
      %3546 = vmatprep.subr.bf16.mxu0 0
      %3547 = vmatpush1.bf16.msra.mxu0 0
      %3548 = vmatprep.subr.bf16.mxu0 0
      %3549 = vmatpush1.bf16.msra.mxu0 0
      %3550 = vmatprep.subr.bf16.mxu0 0
      %3551 = vmatpush1.bf16.msra.mxu0 0
      %3552 = vmatprep.subr.bf16.mxu0 0
      %3553 = vmatpush1.bf16.msra.mxu0 0
      %3554 = vmatprep.subr.bf16.mxu0 0
      %3555 = vmatpush1.bf16.msra.mxu0 0
      %3556 = vmatprep.subr.bf16.mxu0 0
      %3557 = vmatpush1.bf16.msra.mxu0 0
      %3558 = vmatprep.subr.bf16.mxu0 0
      %3559 = vmatpush1.bf16.msra.mxu0 0
      %3560 = vmatprep.subr.bf16.mxu0 0
      %3561 = vmatpush1.bf16.msra.mxu0 0
      %3562 = vmatprep.subr.bf16.mxu0 0
      %3563 = vmatpush1.bf16.msra.mxu0 0
      %3564 = vmatprep.subr.bf16.mxu0 0
      %3565 = vmatpush1.bf16.msra.mxu0 0
      %3566 = vmatprep.subr.bf16.mxu0 0
      %3567 = vmatpush1.bf16.msra.mxu0 0
      %3568 = vmatprep.subr.bf16.mxu0 0
      %3569 = vmatpush1.bf16.msra.mxu0 0
      %3570 = vmatprep.subr.bf16.mxu0 0
      %3571 = vmatpush1.bf16.msra.mxu0 0
      %3572 = vmatprep.subr.bf16.mxu0 0
      %3573 = vmatpush1.bf16.msra.mxu0 0
      %3574 = vmatprep.subr.bf16.mxu0 0
      %3575 = vmatpush1.bf16.msra.mxu0 0
      %3576 = vmatprep.mubr.bf16.mxu0 0
      %3577 = vmatmul.mubr.bf16.gmra.mrb[0].mxu0 %v3539
      %v3578 = vpop.f32.mrb[0].mxu0
      %v3579 = vadd.f32 0.0, %v3578
      %v3580 = vpop.f32.mrb[0].mxu0
      %v3581 = vpop.f32.mrb[0].mxu0
      %v3582 = vadd.f32 0.0, %v3581
      %v3583 = vpop.f32.mrb[0].mxu0
      %3584 = vdwg.mxu0
      %v3586 = vsel %vm273, %v3246, 0
      %v3589 = vsel %vm277, %v3255, 0
      %3591 = vmatprep.subr.bf16.mxu0 0
      %3592 = vmatpush1.bf16.msra.mxu0 %v3589
      %3593 = vmatprep.subr.bf16.mxu0 0
      %3594 = vmatpush1.bf16.msra.mxu0 0
      %3595 = vmatprep.subr.bf16.mxu0 0
      %3596 = vmatpush1.bf16.msra.mxu0 0
      %3597 = vmatprep.subr.bf16.mxu0 0
      %3598 = vmatpush1.bf16.msra.mxu0 0
      %3599 = vmatprep.subr.bf16.mxu0 0
      %3600 = vmatpush1.bf16.msra.mxu0 0
      %3601 = vmatprep.subr.bf16.mxu0 0
      %3602 = vmatpush1.bf16.msra.mxu0 0
      %3603 = vmatprep.subr.bf16.mxu0 0
      %3604 = vmatpush1.bf16.msra.mxu0 0
      %3605 = vmatprep.subr.bf16.mxu0 0
      %3606 = vmatpush1.bf16.msra.mxu0 0
      %3607 = vmatprep.subr.bf16.mxu0 0
      %3608 = vmatpush1.bf16.msra.mxu0 0
      %3609 = vmatprep.subr.bf16.mxu0 0
      %3610 = vmatpush1.bf16.msra.mxu0 0
      %3611 = vmatprep.subr.bf16.mxu0 0
      %3612 = vmatpush1.bf16.msra.mxu0 0
      %3613 = vmatprep.subr.bf16.mxu0 0
      %3614 = vmatpush1.bf16.msra.mxu0 0
      %3615 = vmatprep.subr.bf16.mxu0 0
      %3616 = vmatpush1.bf16.msra.mxu0 0
      %3617 = vmatprep.subr.bf16.mxu0 0
      %3618 = vmatpush1.bf16.msra.mxu0 0
      %3619 = vmatprep.subr.bf16.mxu0 0
      %3620 = vmatpush1.bf16.msra.mxu0 0
      %3621 = vmatprep.subr.bf16.mxu0 0
      %3622 = vmatpush1.bf16.msra.mxu0 0
      %3623 = vmatprep.mubr.bf16.mxu0 0
      %3624 = vmatmul.mubr.bf16.gmra.mrb[0].mxu0 %v3586
      %v3625 = vpop.f32.mrb[0].mxu0
      %v3626 = vadd.f32 0.0, %v3625
      %v3627 = vpop.f32.mrb[0].mxu0
      %v3628 = vpop.f32.mrb[0].mxu0
      %v3629 = vadd.f32 0.0, %v3628
      %v3630 = vpop.f32.mrb[0].mxu0
      %3631 = vdwg.mxu0
      %v3632 = vadd.f32 %v3207, %v3297
      %v3633 = vadd.f32 %v3208, %v3300
      %v3634 = vadd.f32 %v3209, %v3344
      %v3635 = vadd.f32 %v3210, %v3347
      %v3636 = vadd.f32 %v3211, %v3391
      %v3637 = vadd.f32 %v3212, %v3394
      %v3638 = vadd.f32 %v3213, %v3438
      %v3639 = vadd.f32 %v3214, %v3441
      %v3640 = vadd.f32 %v3215, %v3485
      %v3641 = vadd.f32 %v3216, %v3488
      %v3642 = vadd.f32 %v3217, %v3532
      %v3643 = vadd.f32 %v3218, %v3535
      %v3644 = vadd.f32 %v3219, %v3579
      %v3645 = vadd.f32 %v3220, %v3582
      %v3646 = vadd.f32 %v3221, %v3626
      %v3647 = vadd.f32 %v3222, %v3629
      %v3648 = vld [vmem:[%s2797 + $0x2] sm:$0xff]
      %v3649 = vld [vmem:[%s2797 + $0xa] sm:$0xff]
      %v3650 = vld [vmem:[%s2797 + $0x1a] sm:$0xff]
      %v3651 = vld [vmem:[%s2797 + $0x22] sm:$0xff]
      %v3652 = vld [vmem:[%s2797 + $0x32] sm:$0xff]
      %v3653 = vld [vmem:[%s2797 + $0x3a] sm:$0xff]
      %v3654 = vld [vmem:[%s2797 + $0x4a] sm:$0xff]
      %v3655 = vld [vmem:[%s2797 + $0x52] sm:$0xff]
      %v3656 = vld [vmem:[%s2797 + $0x62] sm:$0xff]
      %v3657 = vld [vmem:[%s2797 + $0x6a] sm:$0xff]
      %v3658 = vld [vmem:[%s2797 + $0x7a] sm:$0xff]
      %v3659 = vld [vmem:[%s2797 + $0x82] sm:$0xff]
      %v3660 = vld [vmem:[%s2797 + $0x92] sm:$0xff]
      %v3661 = vld [vmem:[%s2797 + $0x9a] sm:$0xff]
      %v3662 = vld [vmem:[%s2797 + $0xaa] sm:$0xff]
      %v3663 = vld [vmem:[%s2797 + $0xb2] sm:$0xff]
      %v3664 = vpack.c.bf16 %v3649, %v3648
      %v3665 = vpack.c.bf16 %v3651, %v3650
      %v3666 = vpack.c.bf16 %v3653, %v3652
      %v3667 = vpack.c.bf16 %v3655, %v3654
      %v3668 = vpack.c.bf16 %v3657, %v3656
      %v3669 = vpack.c.bf16 %v3659, %v3658
      %v3670 = vpack.c.bf16 %v3661, %v3660
      %v3671 = vpack.c.bf16 %v3663, %v3662
      %s3672 = scalar_lea.vmem %s1, 128
      %v3673 = vld [vmem:[%s3672] sm:$0x3]
      %v3674 = vld [vmem:[%s3672 + $0x2] sm:$0x3]
      %v3675 = vld [vmem:[%s3672 + $0x4] sm:$0x3]
      %v3676 = vld [vmem:[%s3672 + $0x6] sm:$0x3]
      %v3677 = vld [vmem:[%s3672 + $0x8] sm:$0x3]
      %v3678 = vld [vmem:[%s3672 + $0xa] sm:$0x3]
      %v3679 = vld [vmem:[%s3672 + $0xc] sm:$0x3]
      %v3680 = vld [vmem:[%s3672 + $0xe] sm:$0x3]
      %v3682 = vsel %vm273, %v3664, 0
      %v3685 = vsel %vm277, %v3673, 0
      %3687 = vmatprep.subr.bf16.mxu0 0
      %3688 = vmatpush1.bf16.msra.mxu0 %v3685
      %3689 = vmatprep.subr.bf16.mxu0 0
      %3690 = vmatpush1.bf16.msra.mxu0 0
      %3691 = vmatprep.subr.bf16.mxu0 0
      %3692 = vmatpush1.bf16.msra.mxu0 0
      %3693 = vmatprep.subr.bf16.mxu0 0
      %3694 = vmatpush1.bf16.msra.mxu0 0
      %3695 = vmatprep.subr.bf16.mxu0 0
      %3696 = vmatpush1.bf16.msra.mxu0 0
      %3697 = vmatprep.subr.bf16.mxu0 0
      %3698 = vmatpush1.bf16.msra.mxu0 0
      %3699 = vmatprep.subr.bf16.mxu0 0
      %3700 = vmatpush1.bf16.msra.mxu0 0
      %3701 = vmatprep.subr.bf16.mxu0 0
      %3702 = vmatpush1.bf16.msra.mxu0 0
      %3703 = vmatprep.subr.bf16.mxu0 0
      %3704 = vmatpush1.bf16.msra.mxu0 0
      %3705 = vmatprep.subr.bf16.mxu0 0
      %3706 = vmatpush1.bf16.msra.mxu0 0
      %3707 = vmatprep.subr.bf16.mxu0 0
      %3708 = vmatpush1.bf16.msra.mxu0 0
      %3709 = vmatprep.subr.bf16.mxu0 0
      %3710 = vmatpush1.bf16.msra.mxu0 0
      %3711 = vmatprep.subr.bf16.mxu0 0
      %3712 = vmatpush1.bf16.msra.mxu0 0
      %3713 = vmatprep.subr.bf16.mxu0 0
      %3714 = vmatpush1.bf16.msra.mxu0 0
      %3715 = vmatprep.subr.bf16.mxu0 0
      %3716 = vmatpush1.bf16.msra.mxu0 0
      %3717 = vmatprep.subr.bf16.mxu0 0
      %3718 = vmatpush1.bf16.msra.mxu0 0
      %3719 = vmatprep.mubr.bf16.mxu0 0
      %3720 = vmatmul.mubr.bf16.gmra.mrb[0].mxu0 %v3682
      %v3721 = vpop.f32.mrb[0].mxu0
      %v3722 = vadd.f32 0.0, %v3721
      %v3723 = vpop.f32.mrb[0].mxu0
      %v3724 = vpop.f32.mrb[0].mxu0
      %v3725 = vadd.f32 0.0, %v3724
      %v3726 = vpop.f32.mrb[0].mxu0
      %3727 = vdwg.mxu0
      %v3729 = vsel %vm273, %v3665, 0
      %v3732 = vsel %vm277, %v3674, 0
      %3734 = vmatprep.subr.bf16.mxu0 0
      %3735 = vmatpush1.bf16.msra.mxu0 %v3732
      %3736 = vmatprep.subr.bf16.mxu0 0
      %3737 = vmatpush1.bf16.msra.mxu0 0
      %3738 = vmatprep.subr.bf16.mxu0 0
      %3739 = vmatpush1.bf16.msra.mxu0 0
      %3740 = vmatprep.subr.bf16.mxu0 0
      %3741 = vmatpush1.bf16.msra.mxu0 0
      %3742 = vmatprep.subr.bf16.mxu0 0
      %3743 = vmatpush1.bf16.msra.mxu0 0
      %3744 = vmatprep.subr.bf16.mxu0 0
      %3745 = vmatpush1.bf16.msra.mxu0 0
      %3746 = vmatprep.subr.bf16.mxu0 0
      %3747 = vmatpush1.bf16.msra.mxu0 0
      %3748 = vmatprep.subr.bf16.mxu0 0
      %3749 = vmatpush1.bf16.msra.mxu0 0
      %3750 = vmatprep.subr.bf16.mxu0 0
      %3751 = vmatpush1.bf16.msra.mxu0 0
      %3752 = vmatprep.subr.bf16.mxu0 0
      %3753 = vmatpush1.bf16.msra.mxu0 0
      %3754 = vmatprep.subr.bf16.mxu0 0
      %3755 = vmatpush1.bf16.msra.mxu0 0
      %3756 = vmatprep.subr.bf16.mxu0 0
      %3757 = vmatpush1.bf16.msra.mxu0 0
      %3758 = vmatprep.subr.bf16.mxu0 0
      %3759 = vmatpush1.bf16.msra.mxu0 0
      %3760 = vmatprep.subr.bf16.mxu0 0
      %3761 = vmatpush1.bf16.msra.mxu0 0
      %3762 = vmatprep.subr.bf16.mxu0 0
      %3763 = vmatpush1.bf16.msra.mxu0 0
      %3764 = vmatprep.subr.bf16.mxu0 0
      %3765 = vmatpush1.bf16.msra.mxu0 0
      %3766 = vmatprep.mubr.bf16.mxu0 0
      %3767 = vmatmul.mubr.bf16.gmra.mrb[0].mxu0 %v3729
      %v3768 = vpop.f32.mrb[0].mxu0
      %v3769 = vadd.f32 0.0, %v3768
      %v3770 = vpop.f32.mrb[0].mxu0
      %v3771 = vpop.f32.mrb[0].mxu0
      %v3772 = vadd.f32 0.0, %v3771
      %v3773 = vpop.f32.mrb[0].mxu0
      %3774 = vdwg.mxu0
      %v3776 = vsel %vm273, %v3666, 0
      %v3779 = vsel %vm277, %v3675, 0
      %3781 = vmatprep.subr.bf16.mxu0 0
      %3782 = vmatpush1.bf16.msra.mxu0 %v3779
      %3783 = vmatprep.subr.bf16.mxu0 0
      %3784 = vmatpush1.bf16.msra.mxu0 0
      %3785 = vmatprep.subr.bf16.mxu0 0
      %3786 = vmatpush1.bf16.msra.mxu0 0
      %3787 = vmatprep.subr.bf16.mxu0 0
      %3788 = vmatpush1.bf16.msra.mxu0 0
      %3789 = vmatprep.subr.bf16.mxu0 0
      %3790 = vmatpush1.bf16.msra.mxu0 0
      %3791 = vmatprep.subr.bf16.mxu0 0
      %3792 = vmatpush1.bf16.msra.mxu0 0
      %3793 = vmatprep.subr.bf16.mxu0 0
      %3794 = vmatpush1.bf16.msra.mxu0 0
      %3795 = vmatprep.subr.bf16.mxu0 0
      %3796 = vmatpush1.bf16.msra.mxu0 0
      %3797 = vmatprep.subr.bf16.mxu0 0
      %3798 = vmatpush1.bf16.msra.mxu0 0
      %3799 = vmatprep.subr.bf16.mxu0 0
      %3800 = vmatpush1.bf16.msra.mxu0 0
      %3801 = vmatprep.subr.bf16.mxu0 0
      %3802 = vmatpush1.bf16.msra.mxu0 0
      %3803 = vmatprep.subr.bf16.mxu0 0
      %3804 = vmatpush1.bf16.msra.mxu0 0
      %3805 = vmatprep.subr.bf16.mxu0 0
      %3806 = vmatpush1.bf16.msra.mxu0 0
      %3807 = vmatprep.subr.bf16.mxu0 0
      %3808 = vmatpush1.bf16.msra.mxu0 0
      %3809 = vmatprep.subr.bf16.mxu0 0
      %3810 = vmatpush1.bf16.msra.mxu0 0
      %3811 = vmatprep.subr.bf16.mxu0 0
      %3812 = vmatpush1.bf16.msra.mxu0 0
      %3813 = vmatprep.mubr.bf16.mxu0 0
      %3814 = vmatmul.mubr.bf16.gmra.mrb[0].mxu0 %v3776
      %v3815 = vpop.f32.mrb[0].mxu0
      %v3816 = vadd.f32 0.0, %v3815
      %v3817 = vpop.f32.mrb[0].mxu0
      %v3818 = vpop.f32.mrb[0].mxu0
      %v3819 = vadd.f32 0.0, %v3818
      %v3820 = vpop.f32.mrb[0].mxu0
      %3821 = vdwg.mxu0
      %v3823 = vsel %vm273, %v3667, 0
      %v3826 = vsel %vm277, %v3676, 0
      %3828 = vmatprep.subr.bf16.mxu0 0
      %3829 = vmatpush1.bf16.msra.mxu0 %v3826
      %3830 = vmatprep.subr.bf16.mxu0 0
      %3831 = vmatpush1.bf16.msra.mxu0 0
      %3832 = vmatprep.subr.bf16.mxu0 0
      %3833 = vmatpush1.bf16.msra.mxu0 0
      %3834 = vmatprep.subr.bf16.mxu0 0
      %3835 = vmatpush1.bf16.msra.mxu0 0
      %3836 = vmatprep.subr.bf16.mxu0 0
      %3837 = vmatpush1.bf16.msra.mxu0 0
      %3838 = vmatprep.subr.bf16.mxu0 0
      %3839 = vmatpush1.bf16.msra.mxu0 0
      %3840 = vmatprep.subr.bf16.mxu0 0
      %3841 = vmatpush1.bf16.msra.mxu0 0
      %3842 = vmatprep.subr.bf16.mxu0 0
      %3843 = vmatpush1.bf16.msra.mxu0 0
      %3844 = vmatprep.subr.bf16.mxu0 0
      %3845 = vmatpush1.bf16.msra.mxu0 0
      %3846 = vmatprep.subr.bf16.mxu0 0
      %3847 = vmatpush1.bf16.msra.mxu0 0
      %3848 = vmatprep.subr.bf16.mxu0 0
      %3849 = vmatpush1.bf16.msra.mxu0 0
      %3850 = vmatprep.subr.bf16.mxu0 0
      %3851 = vmatpush1.bf16.msra.mxu0 0
      %3852 = vmatprep.subr.bf16.mxu0 0
      %3853 = vmatpush1.bf16.msra.mxu0 0
      %3854 = vmatprep.subr.bf16.mxu0 0
      %3855 = vmatpush1.bf16.msra.mxu0 0
      %3856 = vmatprep.subr.bf16.mxu0 0
      %3857 = vmatpush1.bf16.msra.mxu0 0
      %3858 = vmatprep.subr.bf16.mxu0 0
      %3859 = vmatpush1.bf16.msra.mxu0 0
      %3860 = vmatprep.mubr.bf16.mxu0 0
      %3861 = vmatmul.mubr.bf16.gmra.mrb[0].mxu0 %v3823
      %v3862 = vpop.f32.mrb[0].mxu0
      %v3863 = vadd.f32 0.0, %v3862
      %v3864 = vpop.f32.mrb[0].mxu0
      %v3865 = vpop.f32.mrb[0].mxu0
      %v3866 = vadd.f32 0.0, %v3865
      %v3867 = vpop.f32.mrb[0].mxu0
      %3868 = vdwg.mxu0
      %v3870 = vsel %vm273, %v3668, 0
      %v3873 = vsel %vm277, %v3677, 0
      %3875 = vmatprep.subr.bf16.mxu0 0
      %3876 = vmatpush1.bf16.msra.mxu0 %v3873
      %3877 = vmatprep.subr.bf16.mxu0 0
      %3878 = vmatpush1.bf16.msra.mxu0 0
      %3879 = vmatprep.subr.bf16.mxu0 0
      %3880 = vmatpush1.bf16.msra.mxu0 0
      %3881 = vmatprep.subr.bf16.mxu0 0
      %3882 = vmatpush1.bf16.msra.mxu0 0
      %3883 = vmatprep.subr.bf16.mxu0 0
      %3884 = vmatpush1.bf16.msra.mxu0 0
      %3885 = vmatprep.subr.bf16.mxu0 0
      %3886 = vmatpush1.bf16.msra.mxu0 0
      %3887 = vmatprep.subr.bf16.mxu0 0
      %3888 = vmatpush1.bf16.msra.mxu0 0
      %3889 = vmatprep.subr.bf16.mxu0 0
      %3890 = vmatpush1.bf16.msra.mxu0 0
      %3891 = vmatprep.subr.bf16.mxu0 0
      %3892 = vmatpush1.bf16.msra.mxu0 0
      %3893 = vmatprep.subr.bf16.mxu0 0
      %3894 = vmatpush1.bf16.msra.mxu0 0
      %3895 = vmatprep.subr.bf16.mxu0 0
      %3896 = vmatpush1.bf16.msra.mxu0 0
      %3897 = vmatprep.subr.bf16.mxu0 0
      %3898 = vmatpush1.bf16.msra.mxu0 0
      %3899 = vmatprep.subr.bf16.mxu0 0
      %3900 = vmatpush1.bf16.msra.mxu0 0
      %3901 = vmatprep.subr.bf16.mxu0 0
      %3902 = vmatpush1.bf16.msra.mxu0 0
      %3903 = vmatprep.subr.bf16.mxu0 0
      %3904 = vmatpush1.bf16.msra.mxu0 0
      %3905 = vmatprep.subr.bf16.mxu0 0
      %3906 = vmatpush1.bf16.msra.mxu0 0
      %3907 = vmatprep.mubr.bf16.mxu0 0
      %3908 = vmatmul.mubr.bf16.gmra.mrb[0].mxu0 %v3870
      %v3909 = vpop.f32.mrb[0].mxu0
      %v3910 = vadd.f32 0.0, %v3909
      %v3911 = vpop.f32.mrb[0].mxu0
      %v3912 = vpop.f32.mrb[0].mxu0
      %v3913 = vadd.f32 0.0, %v3912
      %v3914 = vpop.f32.mrb[0].mxu0
      %3915 = vdwg.mxu0
      %v3917 = vsel %vm273, %v3669, 0
      %v3920 = vsel %vm277, %v3678, 0
      %3922 = vmatprep.subr.bf16.mxu0 0
      %3923 = vmatpush1.bf16.msra.mxu0 %v3920
      %3924 = vmatprep.subr.bf16.mxu0 0
      %3925 = vmatpush1.bf16.msra.mxu0 0
      %3926 = vmatprep.subr.bf16.mxu0 0
      %3927 = vmatpush1.bf16.msra.mxu0 0
      %3928 = vmatprep.subr.bf16.mxu0 0
      %3929 = vmatpush1.bf16.msra.mxu0 0
      %3930 = vmatprep.subr.bf16.mxu0 0
      %3931 = vmatpush1.bf16.msra.mxu0 0
      %3932 = vmatprep.subr.bf16.mxu0 0
      %3933 = vmatpush1.bf16.msra.mxu0 0
      %3934 = vmatprep.subr.bf16.mxu0 0
      %3935 = vmatpush1.bf16.msra.mxu0 0
      %3936 = vmatprep.subr.bf16.mxu0 0
      %3937 = vmatpush1.bf16.msra.mxu0 0
      %3938 = vmatprep.subr.bf16.mxu0 0
      %3939 = vmatpush1.bf16.msra.mxu0 0
      %3940 = vmatprep.subr.bf16.mxu0 0
      %3941 = vmatpush1.bf16.msra.mxu0 0
      %3942 = vmatprep.subr.bf16.mxu0 0
      %3943 = vmatpush1.bf16.msra.mxu0 0
      %3944 = vmatprep.subr.bf16.mxu0 0
      %3945 = vmatpush1.bf16.msra.mxu0 0
      %3946 = vmatprep.subr.bf16.mxu0 0
      %3947 = vmatpush1.bf16.msra.mxu0 0
      %3948 = vmatprep.subr.bf16.mxu0 0
      %3949 = vmatpush1.bf16.msra.mxu0 0
      %3950 = vmatprep.subr.bf16.mxu0 0
      %3951 = vmatpush1.bf16.msra.mxu0 0
      %3952 = vmatprep.subr.bf16.mxu0 0
      %3953 = vmatpush1.bf16.msra.mxu0 0
      %3954 = vmatprep.mubr.bf16.mxu0 0
      %3955 = vmatmul.mubr.bf16.gmra.mrb[0].mxu0 %v3917
      %v3956 = vpop.f32.mrb[0].mxu0
      %v3957 = vadd.f32 0.0, %v3956
      %v3958 = vpop.f32.mrb[0].mxu0
      %v3959 = vpop.f32.mrb[0].mxu0
      %v3960 = vadd.f32 0.0, %v3959
      %v3961 = vpop.f32.mrb[0].mxu0
      %3962 = vdwg.mxu0
      %v3964 = vsel %vm273, %v3670, 0
      %v3967 = vsel %vm277, %v3679, 0
      %3969 = vmatprep.subr.bf16.mxu0 0
      %3970 = vmatpush1.bf16.msra.mxu0 %v3967
      %3971 = vmatprep.subr.bf16.mxu0 0
      %3972 = vmatpush1.bf16.msra.mxu0 0
      %3973 = vmatprep.subr.bf16.mxu0 0
      %3974 = vmatpush1.bf16.msra.mxu0 0
      %3975 = vmatprep.subr.bf16.mxu0 0
      %3976 = vmatpush1.bf16.msra.mxu0 0
      %3977 = vmatprep.subr.bf16.mxu0 0
      %3978 = vmatpush1.bf16.msra.mxu0 0
      %3979 = vmatprep.subr.bf16.mxu0 0
      %3980 = vmatpush1.bf16.msra.mxu0 0
      %3981 = vmatprep.subr.bf16.mxu0 0
      %3982 = vmatpush1.bf16.msra.mxu0 0
      %3983 = vmatprep.subr.bf16.mxu0 0
      %3984 = vmatpush1.bf16.msra.mxu0 0
      %3985 = vmatprep.subr.bf16.mxu0 0
      %3986 = vmatpush1.bf16.msra.mxu0 0
      %3987 = vmatprep.subr.bf16.mxu0 0
      %3988 = vmatpush1.bf16.msra.mxu0 0
      %3989 = vmatprep.subr.bf16.mxu0 0
      %3990 = vmatpush1.bf16.msra.mxu0 0
      %3991 = vmatprep.subr.bf16.mxu0 0
      %3992 = vmatpush1.bf16.msra.mxu0 0
      %3993 = vmatprep.subr.bf16.mxu0 0
      %3994 = vmatpush1.bf16.msra.mxu0 0
      %3995 = vmatprep.subr.bf16.mxu0 0
      %3996 = vmatpush1.bf16.msra.mxu0 0
      %3997 = vmatprep.subr.bf16.mxu0 0
      %3998 = vmatpush1.bf16.msra.mxu0 0
      %3999 = vmatprep.subr.bf16.mxu0 0
      %4000 = vmatpush1.bf16.msra.mxu0 0
      %4001 = vmatprep.mubr.bf16.mxu0 0
      %4002 = vmatmul.mubr.bf16.gmra.mrb[0].mxu0 %v3964
      %v4003 = vpop.f32.mrb[0].mxu0
      %v4004 = vadd.f32 0.0, %v4003
      %v4005 = vpop.f32.mrb[0].mxu0
      %v4006 = vpop.f32.mrb[0].mxu0
      %v4007 = vadd.f32 0.0, %v4006
      %v4008 = vpop.f32.mrb[0].mxu0
      %4009 = vdwg.mxu0
      %v4011 = vsel %vm273, %v3671, 0
      %v4014 = vsel %vm277, %v3680, 0
      %4016 = vmatprep.subr.bf16.mxu0 0
      %4017 = vmatpush1.bf16.msra.mxu0 %v4014
      %4018 = vmatprep.subr.bf16.mxu0 0
      %4019 = vmatpush1.bf16.msra.mxu0 0
      %4020 = vmatprep.subr.bf16.mxu0 0
      %4021 = vmatpush1.bf16.msra.mxu0 0
      %4022 = vmatprep.subr.bf16.mxu0 0
      %4023 = vmatpush1.bf16.msra.mxu0 0
      %4024 = vmatprep.subr.bf16.mxu0 0
      %4025 = vmatpush1.bf16.msra.mxu0 0
      %4026 = vmatprep.subr.bf16.mxu0 0
      %4027 = vmatpush1.bf16.msra.mxu0 0
      %4028 = vmatprep.subr.bf16.mxu0 0
      %4029 = vmatpush1.bf16.msra.mxu0 0
      %4030 = vmatprep.subr.bf16.mxu0 0
      %4031 = vmatpush1.bf16.msra.mxu0 0
      %4032 = vmatprep.subr.bf16.mxu0 0
      %4033 = vmatpush1.bf16.msra.mxu0 0
      %4034 = vmatprep.subr.bf16.mxu0 0
      %4035 = vmatpush1.bf16.msra.mxu0 0
      %4036 = vmatprep.subr.bf16.mxu0 0
      %4037 = vmatpush1.bf16.msra.mxu0 0
      %4038 = vmatprep.subr.bf16.mxu0 0
      %4039 = vmatpush1.bf16.msra.mxu0 0
      %4040 = vmatprep.subr.bf16.mxu0 0
      %4041 = vmatpush1.bf16.msra.mxu0 0
      %4042 = vmatprep.subr.bf16.mxu0 0
      %4043 = vmatpush1.bf16.msra.mxu0 0
      %4044 = vmatprep.subr.bf16.mxu0 0
      %4045 = vmatpush1.bf16.msra.mxu0 0
      %4046 = vmatprep.subr.bf16.mxu0 0
      %4047 = vmatpush1.bf16.msra.mxu0 0
      %4048 = vmatprep.mubr.bf16.mxu0 0
      %4049 = vmatmul.mubr.bf16.gmra.mrb[0].mxu0 %v4011
      %v4050 = vpop.f32.mrb[0].mxu0
      %v4051 = vadd.f32 0.0, %v4050
      %v4052 = vpop.f32.mrb[0].mxu0
      %v4053 = vpop.f32.mrb[0].mxu0
      %v4054 = vadd.f32 0.0, %v4053
      %v4055 = vpop.f32.mrb[0].mxu0
      %4056 = vdwg.mxu0
      %v4057 = vadd.f32 %v3632, %v3722
      %v4058 = vadd.f32 %v3633, %v3725
      %v4059 = vadd.f32 %v3634, %v3769
      %v4060 = vadd.f32 %v3635, %v3772
      %v4061 = vadd.f32 %v3636, %v3816
      %v4062 = vadd.f32 %v3637, %v3819
      %v4063 = vadd.f32 %v3638, %v3863
      %v4064 = vadd.f32 %v3639, %v3866
      %v4065 = vadd.f32 %v3640, %v3910
      %v4066 = vadd.f32 %v3641, %v3913
      %v4067 = vadd.f32 %v3642, %v3957
      %v4068 = vadd.f32 %v3643, %v3960
      %v4069 = vadd.f32 %v3644, %v4004
      %v4070 = vadd.f32 %v3645, %v4007
      %v4071 = vadd.f32 %v3646, %v4051
      %v4072 = vadd.f32 %v3647, %v4054
      %4073 = vst [vmem:[%s219] sm:$0xff] %v4057
      %4074 = vst [vmem:[%s219 + $0x8] sm:$0xff] %v4058
      %4075 = vst [vmem:[%s219 + $0x10] sm:$0xff] %v4059
      %4076 = vst [vmem:[%s219 + $0x18] sm:$0xff] %v4060
      %4077 = vst [vmem:[%s219 + $0x20] sm:$0xff] %v4061
      %4078 = vst [vmem:[%s219 + $0x28] sm:$0xff] %v4062
      %4079 = vst [vmem:[%s219 + $0x30] sm:$0xff] %v4063
      %4080 = vst [vmem:[%s219 + $0x38] sm:$0xff] %v4064
      %4081 = vst [vmem:[%s219 + $0x40] sm:$0xff] %v4065
      %4082 = vst [vmem:[%s219 + $0x48] sm:$0xff] %v4066
      %4083 = vst [vmem:[%s219 + $0x50] sm:$0xff] %v4067
      %4084 = vst [vmem:[%s219 + $0x58] sm:$0xff] %v4068
      %4085 = vst [vmem:[%s219 + $0x60] sm:$0xff] %v4069
      %4086 = vst [vmem:[%s219 + $0x68] sm:$0xff] %v4070
      %4087 = vst [vmem:[%s219 + $0x70] sm:$0xff] %v4071
      %4088 = vst [vmem:[%s219 + $0x78] sm:$0xff] %v4072
      %s4089 = smul.u32 8, %s19
      %p4090 = scmp.lt.s32.totalorder %s18, 1
      %s4091 = scalar_select %p4090, %s18, 1
      %p4092 = scmp.lt.s32.totalorder %s4089, 15
      %s4093 = scalar_select %p4092, %s4089, 15
      %s4094 = smul.addr %s4093, 2
      %s4095 = smul.addr %s4091, 32
      %s4096 = sadd.s32 %s4094, %s4095
      %s4097 = smul.addr %s4096, 8
      %s4098 = scalar_lea.vmem %s3, %s4097
      // Predicated region
      $region33: #{vit_embedding_forward.1} parent=31 // pred_check
        %p4099 = pneg %p119
      $region34: #{vit_embedding_forward.1} parent=31 // pred_check_branch
        %4101 = sbr.rel (%p4099) target = $region36
      $region35: #{vit_embedding_forward.1} parent=31 // pred_region
        %s4102 = smul.u32 8, %s19
      $region36: #{vit_embedding_forward.1} parent=31 // pred_fallthru
        _
    $region32: #{vit_embedding_forward.1} parent=5 // pred_fallthru
      _
    %p4103 = scmp.le.s32.totalorder 2, %s9
    // Predicated region
    $region37: #{vit_embedding_forward.1} parent=5 // pred_check
      %p4104 = pneg %p4103
    $region38: #{vit_embedding_forward.1} parent=5 // pred_check_branch
      %4106 = sbr.rel (%p4104) target = $region40
    $region39: #{vit_embedding_forward.1} parent=5 // pred_region
      %s4107 = ssub.s32 %s9, 2
      // Predicated region
      $region41: #{vit_embedding_forward.1} parent=39 // pred_check
        %p4108 = pneg %p125
      $region42: #{vit_embedding_forward.1} parent=39 // pred_check_branch
        %4110 = sbr.rel (%p4108) target = $region44
      $region43: #{vit_embedding_forward.1} parent=39 // pred_region
        %s4111 = smul.u32 8, %s21
        %p4112 = scmp.lt.s32.totalorder %s20, 1
        %s4113 = scalar_select %p4112, %s20, 1
        %p4114 = scmp.lt.s32.totalorder %s4111, 15
        %s4115 = scalar_select %p4114, %s4111, 15
        %s4116 = smul.addr %s4115, 2
        %s4117 = smul.addr %s4113, 32
        %s4118 = sadd.s32 %s4116, %s4117
        %s4119 = smul.addr %s4118, 8
        %s4120 = scalar_lea.vmem %s3, %s4119
      $region44: #{vit_embedding_forward.1} parent=39 // pred_fallthru
        _
    $region40: #{vit_embedding_forward.1} parent=5 // pred_fallthru
      _
  $region6: #{vit_embedding_forward.1} parent=0 // loop_footer
    %s13 = sadd.s32 1, %s9
  $region7: #{vit_embedding_forward.1} parent=0 // loop_footer_branch
    %8 = sbr.rel target = $region3
  $region8: #{vit_embedding_forward.1} parent=0 // loop_exit
    _

</llo_original>
